<compile_context>
chip_gen: v6e
topology: v6e:2x2x1
jax: 0.10.0
libtpu: 0.0.40
codegen_flags: <defaults>
</compile_context>

<pallas_src>
import functools

import jax
import jax.numpy as jnp
from jax.experimental import pallas as pl
from jax.experimental.pallas import tpu as pltpu


N_OUT = 784  # generator output width (28*28)


def generator_kernel(x_ref,
                     w1_ref, b1_ref,
                     w2_ref, b2_ref,
                     w3_ref, b3_ref,
                     w4_ref, b4_ref,
                     o_ref):
    """Fused MLP: fc1->lrelu->fc2->lrelu->fc3->lrelu->fc4->tanh.

    x / weights are bf16, accumulation is f32, intermediate activations are
    cast back to bf16 between layers, final output is f32.
    """

    def lrelu_bf16(v_f32):
        v = jnp.where(v_f32 > 0, v_f32, 0.2 * v_f32)
        return v.astype(jnp.bfloat16)

    h = jnp.dot(x_ref[...], w1_ref[...],
                preferred_element_type=jnp.float32) + b1_ref[...]
    h = lrelu_bf16(h)
    h = jnp.dot(h, w2_ref[...],
                preferred_element_type=jnp.float32) + b2_ref[...]
    h = lrelu_bf16(h)
    h = jnp.dot(h, w3_ref[...],
                preferred_element_type=jnp.float32) + b3_ref[...]
    h = lrelu_bf16(h)
    h = jnp.dot(h, w4_ref[...],
                preferred_element_type=jnp.float32) + b4_ref[...]
    o_ref[...] = jnp.tanh(h)


def _round_up(n, m):
    return ((n + m - 1) // m) * m


def _choose_tile(B):
    """Pick (tm, Bp): batch tile (multiple of 16) and padded batch size.

    Goals (perf review):
      * tile & padding are multiples of 16 (bf16 sublane tile);
      * big tiles for large B (amortize per-grid-step overhead);
      * at least 2 grid steps for moderate B so v7x's 2nd TensorCore works;
      * tm capped at 512 (fits v7x 64 MiB/core VMEM comfortably);
      * avoid batch padding whenever a clean divisor exists.
    """
    Bp = _round_up(B, 16)
    if Bp <= 128:
        return Bp, Bp                       # single small tile
    if Bp <= 1024:
        tm = _round_up((Bp + 1) // 2, 16)   # 2 tiles -> both v7x cores busy
        return tm, _round_up(Bp, tm)
    for tm in (512, 256, 128):              # large batch: big clean tiles
        if Bp % tm == 0:
            return tm, Bp
    return 256, _round_up(Bp, 256)          # odd large batch: modest padding


@functools.partial(jax.jit, static_argnames=("tm",))
def generator_forward(x, kparams, tm=None):
    """x: (B, noise_length) f32 -> (B, 784) f32.

    kparams: output of prepare_params() (bf16 weights (in,out), f32 biases).
    tm: optional batch-tile override (must be a multiple of 16).
    """
    (w1, b1), (w2, b2), (w3, b3), (w4, b4) = kparams
    B, K = x.shape
    n_out = w4.shape[1]

    if tm is None:
        tm, Bp = _choose_tile(B)
    else:
        Bp = _round_up(B, tm)

    xb = x.astype(jnp.bfloat16)
    if Bp != B:                       # pad only when unavoidable
        xb = jnp.pad(xb, ((0, Bp - B), (0, 0)))

    grid = (Bp // tm,)

    # Weights/biases: constant index_map -> resident in VMEM across grid steps.
    def const_map(i):
        return (0, 0)

    def batch_map(i):
        return (i, 0)

    flops = 2 * Bp * (K * 256 + 256 * 512 + 512 * 1024 + 1024 * n_out)
    transcendentals = Bp * n_out  # tanh on the EUP
    bytes_accessed = (
        sum(int(a.size) * a.dtype.itemsize
            for a in (w1, b1, w2, b2, w3, b3, w4, b4))
        + int(xb.size) * xb.dtype.itemsize
        + Bp * n_out * 4
    )

    out = pl.pallas_call(
        generator_kernel,
        out_shape=jax.ShapeDtypeStruct((Bp, n_out), jnp.float32),
        grid_spec=pltpu.PrefetchScalarGridSpec(
            num_scalar_prefetch=0,
            grid=grid,
            in_specs=[
                pl.BlockSpec((tm, K), batch_map),
                pl.BlockSpec(w1.shape, const_map),
                pl.BlockSpec(b1.shape, const_map),
                pl.BlockSpec(w2.shape, const_map),
                pl.BlockSpec(b2.shape, const_map),
                pl.BlockSpec(w3.shape, const_map),
                pl.BlockSpec(b3.shape, const_map),
                pl.BlockSpec(w4.shape, const_map),
                pl.BlockSpec(b4.shape, const_map),
            ],
            out_specs=pl.BlockSpec((tm, n_out), batch_map),
        ),
        compiler_params=pltpu.CompilerParams(
            dimension_semantics=("parallel",),
            vmem_limit_bytes=40 * 1024 * 1024),
        cost_estimate=pl.CostEstimate(
            flops=flops,
            transcendentals=transcendentals,
            bytes_accessed=bytes_accessed),
    )(xb, w1, b1, w2, b2, w3, b3, w4, b4)

    if Bp != B:
        out = out[:B]                 # strip batch padding only if it exists
    return out


def init_params(key, noise_length):
    """Deterministic f32 init; Linear layer shapes as in the PyTorch module.

    Weights stored as (in, out); biases as (1, out) for 2-D TPU layout.
    """
    dims = [(noise_length, 256), (256, 512), (512, 1024), (1024, N_OUT)]
    params = []
    for d_in, d_out in dims:
        kw, kb, key = jax.random.split(key, 3)
        bound = 1.0 / jnp.sqrt(d_in)  # same scale as torch default init
        w = jax.random.uniform(kw, (d_in, d_out), jnp.float32, -bound, bound)
        b = jax.random.uniform(kb, (1, d_out), jnp.float32, -bound, bound)
        params.append((w, b))
    return params


def prepare_params(params):
    """Cast weights to bf16 (MXU-native), keep biases in f32."""
    bf16 = lambda a: a.astype(jnp.bfloat16)
    f32 = lambda a: a.astype(jnp.float32)
    return tuple((bf16(w), f32(b)) for (w, b) in params)


if __name__ == "__main__":
    key = jax.random.PRNGKey(0)
    k_x, k_p = jax.random.split(key)

    batch = 8
    noise_length = 64

    params = init_params(k_p, noise_length)        # f32 "PyTorch" params
    kparams = prepare_params(params)               # bf16 weights, kernel-ready
    x = jax.random.normal(k_x, (batch, noise_length), jnp.float32)

    out = generator_forward(x, kparams)
    out = jax.block_until_ready(out)

    # Reference 1: pure-JAX bf16-emulating path (same math as the kernel).
    def ref_bf16(x, params):
        h = x.astype(jnp.bfloat16)
        for i, (w, b) in enumerate(params):
            h = jnp.dot(h, w.astype(jnp.bfloat16),
                        preferred_element_type=jnp.float32) + b
            if i < 3:
                h = jnp.where(h > 0, h, 0.2 * h).astype(jnp.bfloat16)
        return jnp.tanh(h)

    # Reference 2: exact f32 PyTorch-equivalent forward (loose check, bounds
    # the bf16 quantization error).
    def ref_f32(x, params):
        h = x
        for i, (w, b) in enumerate(params):
            h = h @ w + b
            if i < 3:
                h = jnp.where(h > 0, h, 0.2 * h)
        return jnp.tanh(h)

    expected_bf16 = ref_bf16(x, params)
    expected_f32 = ref_f32(x, params)

    assert out.shape == (batch, N_OUT), out.shape
    assert jnp.allclose(out, expected_bf16, atol=5e-3, rtol=5e-3), float(
        jnp.max(jnp.abs(out - expected_bf16)))
    assert jnp.allclose(out, expected_f32, atol=5e-2, rtol=5e-2), float(
        jnp.max(jnp.abs(out - expected_f32)))
    print("KERNEL_OK")
</pallas_src>

<mosaic_0001>
module attributes {stable_mosaic.version = 11 : i64} {
  func.func @generator_kernel(%arg0: i32, %arg1: memref<16x64xbf16, #tpu.memory_space<vmem>>, %arg2: memref<64x256xbf16, #tpu.memory_space<vmem>>, %arg3: memref<1x256xf32, #tpu.memory_space<vmem>>, %arg4: memref<256x512xbf16, #tpu.memory_space<vmem>>, %arg5: memref<1x512xf32, #tpu.memory_space<vmem>>, %arg6: memref<512x1024xbf16, #tpu.memory_space<vmem>>, %arg7: memref<1x1024xf32, #tpu.memory_space<vmem>>, %arg8: memref<1024x784xbf16, #tpu.memory_space<vmem>>, %arg9: memref<1x784xf32, #tpu.memory_space<vmem>>, %arg10: memref<16x784xf32, #tpu.memory_space<vmem>>) attributes {dimension_semantics = [#tpu.dimension_semantics<parallel>], iteration_bounds = array<i64: 1>, scalar_prefetch = 0 : i64, scratch_operands = 0 : i64, tpu.core_type = #tpu.core_type<tc>, window_params = [{transform_indices = @transform_0, window_bounds = array<i64: 16, 64>}, {pipeline_mode = #tpu.pipeline_mode<synchronous>, transform_indices = @transform_1, window_bounds = array<i64: 64, 256>}, {pipeline_mode = #tpu.pipeline_mode<synchronous>, transform_indices = @transform_2, window_bounds = array<i64: 1, 256>}, {pipeline_mode = #tpu.pipeline_mode<synchronous>, transform_indices = @transform_3, window_bounds = array<i64: 256, 512>}, {pipeline_mode = #tpu.pipeline_mode<synchronous>, transform_indices = @transform_4, window_bounds = array<i64: 1, 512>}, {pipeline_mode = #tpu.pipeline_mode<synchronous>, transform_indices = @transform_5, window_bounds = array<i64: 512, 1024>}, {pipeline_mode = #tpu.pipeline_mode<synchronous>, transform_indices = @transform_6, window_bounds = array<i64: 1, 1024>}, {pipeline_mode = #tpu.pipeline_mode<synchronous>, transform_indices = @transform_7, window_bounds = array<i64: 1024, 784>}, {pipeline_mode = #tpu.pipeline_mode<synchronous>, transform_indices = @transform_8, window_bounds = array<i64: 1, 784>}, {transform_indices = @transform_9, window_bounds = array<i64: 16, 784>}]} {
    %c0 = arith.constant 0 : index
    %c0_0 = arith.constant 0 : index
    %0 = vector.load %arg1[%c0, %c0_0] : memref<16x64xbf16, #tpu.memory_space<vmem>>, vector<16x64xbf16>
    %c0_1 = arith.constant 0 : index
    %c0_2 = arith.constant 0 : index
    %1 = vector.load %arg2[%c0_1, %c0_2] : memref<64x256xbf16, #tpu.memory_space<vmem>>, vector<64x256xbf16>
    %cst = arith.constant dense<0.000000e+00> : vector<16x256xf32>
    %2 = tpu.matmul %0, %1, %cst {dimension_numbers = #tpu.dot_dimension_numbers<[1], [0], [0], [1], [0, 0, 1, 1], [], []>} : vector<16x64xbf16>, vector<64x256xbf16>, vector<16x256xf32> -> vector<16x256xf32>
    %c0_3 = arith.constant 0 : index
    %c0_4 = arith.constant 0 : index
    %3 = vector.load %arg3[%c0_3, %c0_4] : memref<1x256xf32, #tpu.memory_space<vmem>>, vector<1x256xf32>
    %4 = vector.broadcast %3 : vector<1x256xf32> to vector<16x256xf32>
    %5 = arith.addf %2, %4 : vector<16x256xf32>
    %cst_5 = arith.constant 0.000000e+00 : f32
    %6 = vector.broadcast %cst_5 : f32 to vector<16x256xf32>
    %7 = arith.cmpf ogt, %5, %6 : vector<16x256xf32>
    %cst_6 = arith.constant 2.000000e-01 : f32
    %8 = vector.broadcast %cst_6 : f32 to vector<16x256xf32>
    %9 = arith.mulf %8, %5 : vector<16x256xf32>
    %10 = arith.select %7, %5, %9 : vector<16x256xi1>, vector<16x256xf32>
    %11 = arith.truncf %10 : vector<16x256xf32> to vector<16x256xbf16>
    %c0_7 = arith.constant 0 : index
    %c0_8 = arith.constant 0 : index
    %12 = vector.load %arg4[%c0_7, %c0_8] : memref<256x512xbf16, #tpu.memory_space<vmem>>, vector<256x512xbf16>
    %cst_9 = arith.constant dense<0.000000e+00> : vector<16x512xf32>
    %13 = tpu.matmul %11, %12, %cst_9 {dimension_numbers = #tpu.dot_dimension_numbers<[1], [0], [0], [1], [0, 0, 1, 1], [], []>} : vector<16x256xbf16>, vector<256x512xbf16>, vector<16x512xf32> -> vector<16x512xf32>
    %c0_10 = arith.constant 0 : index
    %c0_11 = arith.constant 0 : index
    %14 = vector.load %arg5[%c0_10, %c0_11] : memref<1x512xf32, #tpu.memory_space<vmem>>, vector<1x512xf32>
    %15 = vector.broadcast %14 : vector<1x512xf32> to vector<16x512xf32>
    %16 = arith.addf %13, %15 : vector<16x512xf32>
    %cst_12 = arith.constant 0.000000e+00 : f32
    %17 = vector.broadcast %cst_12 : f32 to vector<16x512xf32>
    %18 = arith.cmpf ogt, %16, %17 : vector<16x512xf32>
    %cst_13 = arith.constant 2.000000e-01 : f32
    %19 = vector.broadcast %cst_13 : f32 to vector<16x512xf32>
    %20 = arith.mulf %19, %16 : vector<16x512xf32>
    %21 = arith.select %18, %16, %20 : vector<16x512xi1>, vector<16x512xf32>
    %22 = arith.truncf %21 : vector<16x512xf32> to vector<16x512xbf16>
    %c0_14 = arith.constant 0 : index
    %c0_15 = arith.constant 0 : index
    %23 = vector.load %arg6[%c0_14, %c0_15] : memref<512x1024xbf16, #tpu.memory_space<vmem>>, vector<512x1024xbf16>
    %cst_16 = arith.constant dense<0.000000e+00> : vector<16x1024xf32>
    %24 = tpu.matmul %22, %23, %cst_16 {dimension_numbers = #tpu.dot_dimension_numbers<[1], [0], [0], [1], [0, 0, 1, 1], [], []>} : vector<16x512xbf16>, vector<512x1024xbf16>, vector<16x1024xf32> -> vector<16x1024xf32>
    %c0_17 = arith.constant 0 : index
    %c0_18 = arith.constant 0 : index
    %25 = vector.load %arg7[%c0_17, %c0_18] : memref<1x1024xf32, #tpu.memory_space<vmem>>, vector<1x1024xf32>
    %26 = vector.broadcast %25 : vector<1x1024xf32> to vector<16x1024xf32>
    %27 = arith.addf %24, %26 : vector<16x1024xf32>
    %cst_19 = arith.constant 0.000000e+00 : f32
    %28 = vector.broadcast %cst_19 : f32 to vector<16x1024xf32>
    %29 = arith.cmpf ogt, %27, %28 : vector<16x1024xf32>
    %cst_20 = arith.constant 2.000000e-01 : f32
    %30 = vector.broadcast %cst_20 : f32 to vector<16x1024xf32>
    %31 = arith.mulf %30, %27 : vector<16x1024xf32>
    %32 = arith.select %29, %27, %31 : vector<16x1024xi1>, vector<16x1024xf32>
    %33 = arith.truncf %32 : vector<16x1024xf32> to vector<16x1024xbf16>
    %c0_21 = arith.constant 0 : index
    %c0_22 = arith.constant 0 : index
    %34 = vector.load %arg8[%c0_21, %c0_22] : memref<1024x784xbf16, #tpu.memory_space<vmem>>, vector<1024x784xbf16>
    %cst_23 = arith.constant dense<0.000000e+00> : vector<16x784xf32>
    %35 = tpu.matmul %33, %34, %cst_23 {dimension_numbers = #tpu.dot_dimension_numbers<[1], [0], [0], [1], [0, 0, 1, 1], [], []>} : vector<16x1024xbf16>, vector<1024x784xbf16>, vector<16x784xf32> -> vector<16x784xf32>
    %c0_24 = arith.constant 0 : index
    %c0_25 = arith.constant 0 : index
    %36 = vector.load %arg9[%c0_24, %c0_25] : memref<1x784xf32, #tpu.memory_space<vmem>>, vector<1x784xf32>
    %37 = vector.broadcast %36 : vector<1x784xf32> to vector<16x784xf32>
    %38 = arith.addf %35, %37 : vector<16x784xf32>
    %39 = math.tanh %38 : vector<16x784xf32>
    %c0_26 = arith.constant 0 : index
    %c0_27 = arith.constant 0 : index
    %40 = vector.load %arg10[%c0_26, %c0_27] : memref<16x784xf32, #tpu.memory_space<vmem>>, vector<16x784xf32>
    tpu.vector_store %arg10[%c0_26, %c0_27], %39 {strides = array<i32>} : memref<16x784xf32, #tpu.memory_space<vmem>>, vector<16x784xf32>,
    return
  }
  func.func @transform_0(%arg0: i32) -> (i32, i32) {
    %c0_i32 = arith.constant 0 : i32
    %c0_i32_0 = arith.constant 0 : i32
    return %arg0, %c0_i32 : i32, i32
  }
  func.func @transform_1(%arg0: i32) -> (i32, i32) {
    %c0_i32 = arith.constant 0 : i32
    %c0_i32_0 = arith.constant 0 : i32
    %c0_i32_1 = arith.constant 0 : i32
    return %c0_i32, %c0_i32_0 : i32, i32
  }
  func.func @transform_2(%arg0: i32) -> (i32, i32) {
    %c0_i32 = arith.constant 0 : i32
    %c0_i32_0 = arith.constant 0 : i32
    %c0_i32_1 = arith.constant 0 : i32
    return %c0_i32, %c0_i32_0 : i32, i32
  }
  func.func @transform_3(%arg0: i32) -> (i32, i32) {
    %c0_i32 = arith.constant 0 : i32
    %c0_i32_0 = arith.constant 0 : i32
    %c0_i32_1 = arith.constant 0 : i32
    return %c0_i32, %c0_i32_0 : i32, i32
  }
  func.func @transform_4(%arg0: i32) -> (i32, i32) {
    %c0_i32 = arith.constant 0 : i32
    %c0_i32_0 = arith.constant 0 : i32
    %c0_i32_1 = arith.constant 0 : i32
    return %c0_i32, %c0_i32_0 : i32, i32
  }
  func.func @transform_5(%arg0: i32) -> (i32, i32) {
    %c0_i32 = arith.constant 0 : i32
    %c0_i32_0 = arith.constant 0 : i32
    %c0_i32_1 = arith.constant 0 : i32
    return %c0_i32, %c0_i32_0 : i32, i32
  }
  func.func @transform_6(%arg0: i32) -> (i32, i32) {
    %c0_i32 = arith.constant 0 : i32
    %c0_i32_0 = arith.constant 0 : i32
    %c0_i32_1 = arith.constant 0 : i32
    return %c0_i32, %c0_i32_0 : i32, i32
  }
  func.func @transform_7(%arg0: i32) -> (i32, i32) {
    %c0_i32 = arith.constant 0 : i32
    %c0_i32_0 = arith.constant 0 : i32
    %c0_i32_1 = arith.constant 0 : i32
    return %c0_i32, %c0_i32_0 : i32, i32
  }
  func.func @transform_8(%arg0: i32) -> (i32, i32) {
    %c0_i32 = arith.constant 0 : i32
    %c0_i32_0 = arith.constant 0 : i32
    %c0_i32_1 = arith.constant 0 : i32
    return %c0_i32, %c0_i32_0 : i32, i32
  }
  func.func @transform_9(%arg0: i32) -> (i32, i32) {
    %c0_i32 = arith.constant 0 : i32
    %c0_i32_0 = arith.constant 0 : i32
    return %arg0, %c0_i32 : i32, i32
  }
}

</mosaic_0001>

<llo_original>
// kernel: generator_forward.1
$region0: #{generator_forward.1}
  #allocation0 [shape = 'u32[]', space=smem, size = 0x4, offset = 0x4, fixed_abs, tag = 'smem constant byte address 0x4 - core index']
  #allocation1 [shape = 'u32[144,128]{1,0:T(1,128)}', space=vmem, size = 0x12000, scoped, tag = 'internal scratch']
  %s0 = inlined_call_operand.vmem [shape: bf16[16,64], index: 0, kind: input, shape index: {}]
  %s1 = inlined_call_operand.vmem [shape: bf16[64,256], index: 1, kind: input, shape index: {}]
  %s2 = inlined_call_operand.vmem [shape: f32[1,256], index: 2, kind: input, shape index: {}]
  %s3 = inlined_call_operand.vmem [shape: bf16[256,512], index: 3, kind: input, shape index: {}]
  %s4 = inlined_call_operand.vmem [shape: f32[1,512], index: 4, kind: input, shape index: {}]
  %s5 = inlined_call_operand.vmem [shape: bf16[512,1024], index: 5, kind: input, shape index: {}]
  %s6 = inlined_call_operand.vmem [shape: f32[1,1024], index: 6, kind: input, shape index: {}]
  %s7 = inlined_call_operand.vmem [shape: bf16[1024,784], index: 7, kind: input, shape index: {}]
  %s8 = inlined_call_operand.vmem [shape: f32[1,784], index: 8, kind: input, shape index: {}]
  %s9 = inlined_call_operand.vmem [shape: f32[16,784], index: 9, kind: output, shape index: {}]
  %s10 = sld [smem:[#allocation0]]
  $region46: #{generator_forward.1} parent=0
    _
  %s12 = ssub.s32 1, %s10
  %s13 = scalar_select 0, %s12, %s10
  // Predicated region
  $region2: #{generator_forward.1} parent=0 // pred_check
    _
  $region3: #{generator_forward.1} parent=0 // pred_check_branch
    %15 = sbr.rel (0) target = $region5
  $region4: #{generator_forward.1} parent=0 // pred_region
    _
  $region5: #{generator_forward.1} parent=0 // pred_fallthru
    _
  // Predicated region
  $region6: #{generator_forward.1} parent=0 // pred_check
    _
  $region7: #{generator_forward.1} parent=0 // pred_check_branch
    %17 = sbr.rel (0) target = $region9
  $region8: #{generator_forward.1} parent=0 // pred_region
    _
  $region9: #{generator_forward.1} parent=0 // pred_fallthru
    _
  // Predicated region
  $region10: #{generator_forward.1} parent=0 // pred_check
    _
  $region11: #{generator_forward.1} parent=0 // pred_check_branch
    %19 = sbr.rel (0) target = $region13
  $region12: #{generator_forward.1} parent=0 // pred_region
    _
  $region13: #{generator_forward.1} parent=0 // pred_fallthru
    _
  // Predicated region
  $region14: #{generator_forward.1} parent=0 // pred_check
    _
  $region15: #{generator_forward.1} parent=0 // pred_check_branch
    %21 = sbr.rel (0) target = $region17
  $region16: #{generator_forward.1} parent=0 // pred_region
    _
  $region17: #{generator_forward.1} parent=0 // pred_fallthru
    _
  // Predicated region
  $region18: #{generator_forward.1} parent=0 // pred_check
    _
  $region19: #{generator_forward.1} parent=0 // pred_check_branch
    %23 = sbr.rel (0) target = $region21
  $region20: #{generator_forward.1} parent=0 // pred_region
    _
  $region21: #{generator_forward.1} parent=0 // pred_fallthru
    _
  // Predicated region
  $region22: #{generator_forward.1} parent=0 // pred_check
    _
  $region23: #{generator_forward.1} parent=0 // pred_check_branch
    %25 = sbr.rel (0) target = $region25
  $region24: #{generator_forward.1} parent=0 // pred_region
    _
  $region25: #{generator_forward.1} parent=0 // pred_fallthru
    _
  // Predicated region
  $region26: #{generator_forward.1} parent=0 // pred_check
    _
  $region27: #{generator_forward.1} parent=0 // pred_check_branch
    %27 = sbr.rel (0) target = $region29
  $region28: #{generator_forward.1} parent=0 // pred_region
    _
  $region29: #{generator_forward.1} parent=0 // pred_fallthru
    _
  // Predicated region
  $region30: #{generator_forward.1} parent=0 // pred_check
    _
  $region31: #{generator_forward.1} parent=0 // pred_check_branch
    %29 = sbr.rel (0) target = $region33
  $region32: #{generator_forward.1} parent=0 // pred_region
    _
  $region33: #{generator_forward.1} parent=0 // pred_fallthru
    _
  // Predicated region
  $region34: #{generator_forward.1} parent=0 // pred_check
    _
  $region35: #{generator_forward.1} parent=0 // pred_check_branch
    %31 = sbr.rel (0) target = $region37
  $region36: #{generator_forward.1} parent=0 // pred_region
    _
  $region37: #{generator_forward.1} parent=0 // pred_fallthru
    _
  %v33 = vld [vmem:[%s0] sm:$0xf]
  %v34 = vld [vmem:[%s0 + $0x4] sm:$0xf]
  %v35 = vld [vmem:[%s1] sm:$0xff]
  %v36 = vld [vmem:[%s1 + $0x8] sm:$0xff]
  %v37 = vld [vmem:[%s1 + $0x10] sm:$0xff]
  %v38 = vld [vmem:[%s1 + $0x18] sm:$0xff]
  %v39 = vld [vmem:[%s1 + $0x20] sm:$0xff]
  %v40 = vld [vmem:[%s1 + $0x28] sm:$0xff]
  %v41 = vld [vmem:[%s1 + $0x30] sm:$0xff]
  %v42 = vld [vmem:[%s1 + $0x38] sm:$0xff]
  %v43 = vld [vmem:[%s2] sm:$0x3]
  %v45 = vlaneseq
  %v46 = vshrl.u32 %v45, 7
  %v47 = vsub.s32 0, %v46
  %v48 = vrot.slane %v43, %v47
  %v49 = vlaneseq
  %v50 = vshrl.u32 %v49, 7
  %v51 = vsub.s32 1, %v50
  %v52 = vrot.slane %v43, %v51
  %v57 = vunpack.c.l.b16 %v33
  %v58 = vunpack.c.l.b16 %v34
  %v59 = vpack.c.b16 %v58, %v57
  %v68 = vunpack.c.l.b16 %v35
  %v69 = vunpack.c.h.b16 %v35
  %v70 = vunpack.c.l.b16 %v36
  %v71 = vunpack.c.h.b16 %v36
  %v72 = vunpack.c.l.b16 %v37
  %v73 = vunpack.c.h.b16 %v37
  %v74 = vunpack.c.l.b16 %v38
  %v75 = vunpack.c.h.b16 %v38
  %v76 = vunpack.c.l.b16 %v39
  %v77 = vunpack.c.h.b16 %v39
  %v78 = vunpack.c.l.b16 %v40
  %v79 = vunpack.c.h.b16 %v40
  %v80 = vunpack.c.l.b16 %v41
  %v81 = vunpack.c.h.b16 %v41
  %v82 = vunpack.c.l.b16 %v42
  %v83 = vunpack.c.h.b16 %v42
  %v84 = vpack.c.b16 %v70, %v68
  %v85 = vpack.c.b16 %v71, %v69
  %v86 = vpack.c.b16 %v74, %v72
  %v87 = vpack.c.b16 %v75, %v73
  %v88 = vpack.c.b16 %v78, %v76
  %v89 = vpack.c.b16 %v79, %v77
  %v90 = vpack.c.b16 %v82, %v80
  %v91 = vpack.c.b16 %v83, %v81
  %vm100 = vcmask 523264
  %v102 = vsel %vm100, %v59, 0
  %104 = vmatprep.subr.bf16.mxu0 0
  %105 = vmatpush1.bf16.msra.mxu0 0
  %106 = vmatprep.subr.bf16.mxu0 0
  %107 = vmatpush1.bf16.msra.mxu0 0
  %108 = vmatprep.subr.bf16.mxu0 0
  %109 = vmatpush1.bf16.msra.mxu0 0
  %110 = vmatprep.subr.bf16.mxu0 0
  %111 = vmatpush1.bf16.msra.mxu0 0
  %112 = vmatprep.subr.bf16.mxu0 %v91
  %113 = vmatpush1.bf16.msra.mxu0 %v90
  %114 = vmatprep.subr.bf16.mxu0 %v89
  %115 = vmatpush1.bf16.msra.mxu0 %v88
  %116 = vmatprep.subr.bf16.mxu0 %v87
  %117 = vmatpush1.bf16.msra.mxu0 %v86
  %118 = vmatprep.subr.bf16.mxu0 %v85
  %119 = vmatpush1.bf16.msra.mxu0 %v84
  %120 = vmatprep.subr.bf16.mxu0 0
  %121 = vmatpush2.bf16.msra.mxu0 0
  %122 = vmatprep.subr.bf16.mxu0 0
  %123 = vmatpush2.bf16.msra.mxu0 0
  %124 = vmatprep.subr.bf16.mxu0 0
  %125 = vmatpush2.bf16.msra.mxu0 0
  %126 = vmatprep.subr.bf16.mxu0 0
  %127 = vmatpush2.bf16.msra.mxu0 0
  %128 = vmatprep.subr.bf16.mxu0 0
  %129 = vmatpush2.bf16.msra.mxu0 0
  %130 = vmatprep.subr.bf16.mxu0 0
  %131 = vmatpush2.bf16.msra.mxu0 0
  %132 = vmatprep.subr.bf16.mxu0 0
  %133 = vmatpush2.bf16.msra.mxu0 0
  %134 = vmatprep.subr.bf16.mxu0 0
  %135 = vmatpush2.bf16.msra.mxu0 0
  %136 = vmatprep.mubr.bf16.mxu0 0
  %137 = vmatmul.mubr.bf16.gmra.mxu0 %v102
  %v138 = vpop.f32.mrf.mxu0
  %v139 = vadd.f32 %v48, %v138
  %v140 = vpop.f32.mrf.mxu0
  %v141 = vadd.f32 %v52, %v140
  %v142 = vpop.f32.mrf.mxu0
  %v143 = vadd.f32 %v48, %v142
  %v144 = vpop.f32.mrf.mxu0
  %v145 = vadd.f32 %v52, %v144
  %146 = vdwg.mxu0
  %vm147 = vcmp.gt.f32.partialorder %v139, 0.0
  %vm148 = vcmp.gt.f32.partialorder %v141, 0.0
  %vm149 = vcmp.gt.f32.partialorder %v143, 0.0
  %vm150 = vcmp.gt.f32.partialorder %v145, 0.0
  %v151 = vmul.f32 %v139, 0.2
  %v152 = vmul.f32 %v141, 0.2
  %v153 = vmul.f32 %v143, 0.2
  %v154 = vmul.f32 %v145, 0.2
  %v155 = vsel %vm147, %v139, %v151
  %v156 = vsel %vm148, %v141, %v152
  %v157 = vsel %vm149, %v143, %v153
  %v158 = vsel %vm150, %v145, %v154
  %v159 = vpack.c.bf16 %v157, %v155
  %v160 = vpack.c.bf16 %v158, %v156
  %v161 = vld [vmem:[%s3] sm:$0xff]
  %v162 = vld [vmem:[%s3 + $0x8] sm:$0xff]
  %v163 = vld [vmem:[%s3 + $0x10] sm:$0xff]
  %v164 = vld [vmem:[%s3 + $0x18] sm:$0xff]
  %v165 = vld [vmem:[%s3 + $0x20] sm:$0xff]
  %v166 = vld [vmem:[%s3 + $0x28] sm:$0xff]
  %v167 = vld [vmem:[%s3 + $0x30] sm:$0xff]
  %v168 = vld [vmem:[%s3 + $0x38] sm:$0xff]
  %v169 = vld [vmem:[%s3 + $0x40] sm:$0xff]
  %v170 = vld [vmem:[%s3 + $0x48] sm:$0xff]
  %v171 = vld [vmem:[%s3 + $0x50] sm:$0xff]
  %v172 = vld [vmem:[%s3 + $0x58] sm:$0xff]
  %v173 = vld [vmem:[%s3 + $0x60] sm:$0xff]
  %v174 = vld [vmem:[%s3 + $0x68] sm:$0xff]
  %v175 = vld [vmem:[%s3 + $0x70] sm:$0xff]
  %v176 = vld [vmem:[%s3 + $0x78] sm:$0xff]
  %v177 = vld [vmem:[%s3 + $0x80] sm:$0xff]
  %v178 = vld [vmem:[%s3 + $0x88] sm:$0xff]
  %v179 = vld [vmem:[%s3 + $0x90] sm:$0xff]
  %v180 = vld [vmem:[%s3 + $0x98] sm:$0xff]
  %v181 = vld [vmem:[%s3 + $0xa0] sm:$0xff]
  %v182 = vld [vmem:[%s3 + $0xa8] sm:$0xff]
  %v183 = vld [vmem:[%s3 + $0xb0] sm:$0xff]
  %v184 = vld [vmem:[%s3 + $0xb8] sm:$0xff]
  %v185 = vld [vmem:[%s3 + $0xc0] sm:$0xff]
  %v186 = vld [vmem:[%s3 + $0xc8] sm:$0xff]
  %v187 = vld [vmem:[%s3 + $0xd0] sm:$0xff]
  %v188 = vld [vmem:[%s3 + $0xd8] sm:$0xff]
  %v189 = vld [vmem:[%s3 + $0xe0] sm:$0xff]
  %v190 = vld [vmem:[%s3 + $0xe8] sm:$0xff]
  %v191 = vld [vmem:[%s3 + $0xf0] sm:$0xff]
  %v192 = vld [vmem:[%s3 + $0xf8] sm:$0xff]
  %v193 = vld [vmem:[%s3 + $0x100] sm:$0xff]
  %v194 = vld [vmem:[%s3 + $0x108] sm:$0xff]
  %v195 = vld [vmem:[%s3 + $0x110] sm:$0xff]
  %v196 = vld [vmem:[%s3 + $0x118] sm:$0xff]
  %v197 = vld [vmem:[%s3 + $0x120] sm:$0xff]
  %v198 = vld [vmem:[%s3 + $0x128] sm:$0xff]
  %v199 = vld [vmem:[%s3 + $0x130] sm:$0xff]
  %v200 = vld [vmem:[%s3 + $0x138] sm:$0xff]
  %v201 = vld [vmem:[%s3 + $0x140] sm:$0xff]
  %v202 = vld [vmem:[%s3 + $0x148] sm:$0xff]
  %v203 = vld [vmem:[%s3 + $0x150] sm:$0xff]
  %v204 = vld [vmem:[%s3 + $0x158] sm:$0xff]
  %v205 = vld [vmem:[%s3 + $0x160] sm:$0xff]
  %v206 = vld [vmem:[%s3 + $0x168] sm:$0xff]
  %v207 = vld [vmem:[%s3 + $0x170] sm:$0xff]
  %v208 = vld [vmem:[%s3 + $0x178] sm:$0xff]
  %v209 = vld [vmem:[%s3 + $0x180] sm:$0xff]
  %v210 = vld [vmem:[%s3 + $0x188] sm:$0xff]
  %v211 = vld [vmem:[%s3 + $0x190] sm:$0xff]
  %v212 = vld [vmem:[%s3 + $0x198] sm:$0xff]
  %v213 = vld [vmem:[%s3 + $0x1a0] sm:$0xff]
  %v214 = vld [vmem:[%s3 + $0x1a8] sm:$0xff]
  %v215 = vld [vmem:[%s3 + $0x1b0] sm:$0xff]
  %v216 = vld [vmem:[%s3 + $0x1b8] sm:$0xff]
  %v217 = vld [vmem:[%s3 + $0x1c0] sm:$0xff]
  %v218 = vld [vmem:[%s3 + $0x1c8] sm:$0xff]
  %v219 = vld [vmem:[%s3 + $0x1d0] sm:$0xff]
  %v220 = vld [vmem:[%s3 + $0x1d8] sm:$0xff]
  %v221 = vld [vmem:[%s3 + $0x1e0] sm:$0xff]
  %v222 = vld [vmem:[%s3 + $0x1e8] sm:$0xff]
  %v223 = vld [vmem:[%s3 + $0x1f0] sm:$0xff]
  %v224 = vld [vmem:[%s3 + $0x1f8] sm:$0xff]
  %v225 = vld [vmem:[%s4] sm:$0xf]
  %v227 = vlaneseq
  %v228 = vshrl.u32 %v227, 7
  %v229 = vsub.s32 0, %v228
  %v230 = vrot.slane %v225, %v229
  %v231 = vlaneseq
  %v232 = vshrl.u32 %v231, 7
  %v233 = vsub.s32 1, %v232
  %v234 = vrot.slane %v225, %v233
  %v235 = vlaneseq
  %v236 = vshrl.u32 %v235, 7
  %v237 = vsub.s32 2, %v236
  %v238 = vrot.slane %v225, %v237
  %v239 = vlaneseq
  %v240 = vshrl.u32 %v239, 7
  %v241 = vsub.s32 3, %v240
  %v242 = vrot.slane %v225, %v241
  %v311 = vunpack.c.l.b16 %v161
  %v312 = vunpack.c.h.b16 %v161
  %v313 = vunpack.c.l.b16 %v162
  %v314 = vunpack.c.h.b16 %v162
  %v315 = vunpack.c.l.b16 %v163
  %v316 = vunpack.c.h.b16 %v163
  %v317 = vunpack.c.l.b16 %v164
  %v318 = vunpack.c.h.b16 %v164
  %v319 = vunpack.c.l.b16 %v165
  %v320 = vunpack.c.h.b16 %v165
  %v321 = vunpack.c.l.b16 %v166
  %v322 = vunpack.c.h.b16 %v166
  %v323 = vunpack.c.l.b16 %v167
  %v324 = vunpack.c.h.b16 %v167
  %v325 = vunpack.c.l.b16 %v168
  %v326 = vunpack.c.h.b16 %v168
  %v327 = vunpack.c.l.b16 %v169
  %v328 = vunpack.c.h.b16 %v169
  %v329 = vunpack.c.l.b16 %v170
  %v330 = vunpack.c.h.b16 %v170
  %v331 = vunpack.c.l.b16 %v171
  %v332 = vunpack.c.h.b16 %v171
  %v333 = vunpack.c.l.b16 %v172
  %v334 = vunpack.c.h.b16 %v172
  %v335 = vunpack.c.l.b16 %v173
  %v336 = vunpack.c.h.b16 %v173
  %v337 = vunpack.c.l.b16 %v174
  %v338 = vunpack.c.h.b16 %v174
  %v339 = vunpack.c.l.b16 %v175
  %v340 = vunpack.c.h.b16 %v175
  %v341 = vunpack.c.l.b16 %v176
  %v342 = vunpack.c.h.b16 %v176
  %v343 = vunpack.c.l.b16 %v177
  %v344 = vunpack.c.h.b16 %v177
  %v345 = vunpack.c.l.b16 %v178
  %v346 = vunpack.c.h.b16 %v178
  %v347 = vunpack.c.l.b16 %v179
  %v348 = vunpack.c.h.b16 %v179
  %v349 = vunpack.c.l.b16 %v180
  %v350 = vunpack.c.h.b16 %v180
  %v351 = vunpack.c.l.b16 %v181
  %v352 = vunpack.c.h.b16 %v181
  %v353 = vunpack.c.l.b16 %v182
  %v354 = vunpack.c.h.b16 %v182
  %v355 = vunpack.c.l.b16 %v183
  %v356 = vunpack.c.h.b16 %v183
  %v357 = vunpack.c.l.b16 %v184
  %v358 = vunpack.c.h.b16 %v184
  %v359 = vunpack.c.l.b16 %v185
  %v360 = vunpack.c.h.b16 %v185
  %v361 = vunpack.c.l.b16 %v186
  %v362 = vunpack.c.h.b16 %v186
  %v363 = vunpack.c.l.b16 %v187
  %v364 = vunpack.c.h.b16 %v187
  %v365 = vunpack.c.l.b16 %v188
  %v366 = vunpack.c.h.b16 %v188
  %v367 = vunpack.c.l.b16 %v189
  %v368 = vunpack.c.h.b16 %v189
  %v369 = vunpack.c.l.b16 %v190
  %v370 = vunpack.c.h.b16 %v190
  %v371 = vunpack.c.l.b16 %v191
  %v372 = vunpack.c.h.b16 %v191
  %v373 = vunpack.c.l.b16 %v192
  %v374 = vunpack.c.h.b16 %v192
  %v375 = vunpack.c.l.b16 %v193
  %v376 = vunpack.c.h.b16 %v193
  %v377 = vunpack.c.l.b16 %v194
  %v378 = vunpack.c.h.b16 %v194
  %v379 = vunpack.c.l.b16 %v195
  %v380 = vunpack.c.h.b16 %v195
  %v381 = vunpack.c.l.b16 %v196
  %v382 = vunpack.c.h.b16 %v196
  %v383 = vunpack.c.l.b16 %v197
  %v384 = vunpack.c.h.b16 %v197
  %v385 = vunpack.c.l.b16 %v198
  %v386 = vunpack.c.h.b16 %v198
  %v387 = vunpack.c.l.b16 %v199
  %v388 = vunpack.c.h.b16 %v199
  %v389 = vunpack.c.l.b16 %v200
  %v390 = vunpack.c.h.b16 %v200
  %v391 = vunpack.c.l.b16 %v201
  %v392 = vunpack.c.h.b16 %v201
  %v393 = vunpack.c.l.b16 %v202
  %v394 = vunpack.c.h.b16 %v202
  %v395 = vunpack.c.l.b16 %v203
  %v396 = vunpack.c.h.b16 %v203
  %v397 = vunpack.c.l.b16 %v204
  %v398 = vunpack.c.h.b16 %v204
  %v399 = vunpack.c.l.b16 %v205
  %v400 = vunpack.c.h.b16 %v205
  %v401 = vunpack.c.l.b16 %v206
  %v402 = vunpack.c.h.b16 %v206
  %v403 = vunpack.c.l.b16 %v207
  %v404 = vunpack.c.h.b16 %v207
  %v405 = vunpack.c.l.b16 %v208
  %v406 = vunpack.c.h.b16 %v208
  %v407 = vunpack.c.l.b16 %v209
  %v408 = vunpack.c.h.b16 %v209
  %v409 = vunpack.c.l.b16 %v210
  %v410 = vunpack.c.h.b16 %v210
  %v411 = vunpack.c.l.b16 %v211
  %v412 = vunpack.c.h.b16 %v211
  %v413 = vunpack.c.l.b16 %v212
  %v414 = vunpack.c.h.b16 %v212
  %v415 = vunpack.c.l.b16 %v213
  %v416 = vunpack.c.h.b16 %v213
  %v417 = vunpack.c.l.b16 %v214
  %v418 = vunpack.c.h.b16 %v214
  %v419 = vunpack.c.l.b16 %v215
  %v420 = vunpack.c.h.b16 %v215
  %v421 = vunpack.c.l.b16 %v216
  %v422 = vunpack.c.h.b16 %v216
  %v423 = vunpack.c.l.b16 %v217
  %v424 = vunpack.c.h.b16 %v217
  %v425 = vunpack.c.l.b16 %v218
  %v426 = vunpack.c.h.b16 %v218
  %v427 = vunpack.c.l.b16 %v219
  %v428 = vunpack.c.h.b16 %v219
  %v429 = vunpack.c.l.b16 %v220
  %v430 = vunpack.c.h.b16 %v220
  %v431 = vunpack.c.l.b16 %v221
  %v432 = vunpack.c.h.b16 %v221
  %v433 = vunpack.c.l.b16 %v222
  %v434 = vunpack.c.h.b16 %v222
  %v435 = vunpack.c.l.b16 %v223
  %v436 = vunpack.c.h.b16 %v223
  %v437 = vunpack.c.l.b16 %v224
  %v438 = vunpack.c.h.b16 %v224
  %v439 = vpack.c.b16 %v315, %v311
  %v440 = vpack.c.b16 %v316, %v312
  %v441 = vpack.c.b16 %v317, %v313
  %v442 = vpack.c.b16 %v318, %v314
  %v443 = vpack.c.b16 %v323, %v319
  %v444 = vpack.c.b16 %v324, %v320
  %v445 = vpack.c.b16 %v325, %v321
  %v446 = vpack.c.b16 %v326, %v322
  %v447 = vpack.c.b16 %v331, %v327
  %v448 = vpack.c.b16 %v332, %v328
  %v449 = vpack.c.b16 %v333, %v329
  %v450 = vpack.c.b16 %v334, %v330
  %v451 = vpack.c.b16 %v339, %v335
  %v452 = vpack.c.b16 %v340, %v336
  %v453 = vpack.c.b16 %v341, %v337
  %v454 = vpack.c.b16 %v342, %v338
  %v455 = vpack.c.b16 %v347, %v343
  %v456 = vpack.c.b16 %v348, %v344
  %v457 = vpack.c.b16 %v349, %v345
  %v458 = vpack.c.b16 %v350, %v346
  %v459 = vpack.c.b16 %v355, %v351
  %v460 = vpack.c.b16 %v356, %v352
  %v461 = vpack.c.b16 %v357, %v353
  %v462 = vpack.c.b16 %v358, %v354
  %v463 = vpack.c.b16 %v363, %v359
  %v464 = vpack.c.b16 %v364, %v360
  %v465 = vpack.c.b16 %v365, %v361
  %v466 = vpack.c.b16 %v366, %v362
  %v467 = vpack.c.b16 %v371, %v367
  %v468 = vpack.c.b16 %v372, %v368
  %v469 = vpack.c.b16 %v373, %v369
  %v470 = vpack.c.b16 %v374, %v370
  %v471 = vpack.c.b16 %v379, %v375
  %v472 = vpack.c.b16 %v380, %v376
  %v473 = vpack.c.b16 %v381, %v377
  %v474 = vpack.c.b16 %v382, %v378
  %v475 = vpack.c.b16 %v387, %v383
  %v476 = vpack.c.b16 %v388, %v384
  %v477 = vpack.c.b16 %v389, %v385
  %v478 = vpack.c.b16 %v390, %v386
  %v479 = vpack.c.b16 %v395, %v391
  %v480 = vpack.c.b16 %v396, %v392
  %v481 = vpack.c.b16 %v397, %v393
  %v482 = vpack.c.b16 %v398, %v394
  %v483 = vpack.c.b16 %v403, %v399
  %v484 = vpack.c.b16 %v404, %v400
  %v485 = vpack.c.b16 %v405, %v401
  %v486 = vpack.c.b16 %v406, %v402
  %v487 = vpack.c.b16 %v411, %v407
  %v488 = vpack.c.b16 %v412, %v408
  %v489 = vpack.c.b16 %v413, %v409
  %v490 = vpack.c.b16 %v414, %v410
  %v491 = vpack.c.b16 %v419, %v415
  %v492 = vpack.c.b16 %v420, %v416
  %v493 = vpack.c.b16 %v421, %v417
  %v494 = vpack.c.b16 %v422, %v418
  %v495 = vpack.c.b16 %v427, %v423
  %v496 = vpack.c.b16 %v428, %v424
  %v497 = vpack.c.b16 %v429, %v425
  %v498 = vpack.c.b16 %v430, %v426
  %v499 = vpack.c.b16 %v435, %v431
  %v500 = vpack.c.b16 %v436, %v432
  %v501 = vpack.c.b16 %v437, %v433
  %v502 = vpack.c.b16 %v438, %v434
  %567 = vmatprep.subr.bf16.mxu0 %v468
  %568 = vmatpush1.bf16.msra.mxu0 %v467
  %569 = vmatprep.subr.bf16.mxu0 %v464
  %570 = vmatpush1.bf16.msra.mxu0 %v463
  %571 = vmatprep.subr.bf16.mxu0 %v460
  %572 = vmatpush1.bf16.msra.mxu0 %v459
  %573 = vmatprep.subr.bf16.mxu0 %v456
  %574 = vmatpush1.bf16.msra.mxu0 %v455
  %575 = vmatprep.subr.bf16.mxu0 %v452
  %576 = vmatpush1.bf16.msra.mxu0 %v451
  %577 = vmatprep.subr.bf16.mxu0 %v448
  %578 = vmatpush1.bf16.msra.mxu0 %v447
  %579 = vmatprep.subr.bf16.mxu0 %v444
  %580 = vmatpush1.bf16.msra.mxu0 %v443
  %581 = vmatprep.subr.bf16.mxu0 %v440
  %582 = vmatpush1.bf16.msra.mxu0 %v439
  %583 = vmatprep.subr.bf16.mxu0 %v500
  %584 = vmatpush2.bf16.msra.mxu0 %v499
  %585 = vmatprep.subr.bf16.mxu0 %v496
  %586 = vmatpush2.bf16.msra.mxu0 %v495
  %587 = vmatprep.subr.bf16.mxu0 %v492
  %588 = vmatpush2.bf16.msra.mxu0 %v491
  %589 = vmatprep.subr.bf16.mxu0 %v488
  %590 = vmatpush2.bf16.msra.mxu0 %v487
  %591 = vmatprep.subr.bf16.mxu0 %v484
  %592 = vmatpush2.bf16.msra.mxu0 %v483
  %593 = vmatprep.subr.bf16.mxu0 %v480
  %594 = vmatpush2.bf16.msra.mxu0 %v479
  %595 = vmatprep.subr.bf16.mxu0 %v476
  %596 = vmatpush2.bf16.msra.mxu0 %v475
  %597 = vmatprep.subr.bf16.mxu0 %v472
  %598 = vmatpush2.bf16.msra.mxu0 %v471
  %599 = vmatprep.mubr.bf16.mxu0 %v160
  %600 = vmatmul.mubr.bf16.gmra.mxu0 %v159
  %v601 = vpop.f32.mrf.mxu0
  %v602 = vadd.f32 %v230, %v601
  %v603 = vpop.f32.mrf.mxu0
  %v604 = vadd.f32 %v234, %v603
  %v605 = vpop.f32.mrf.mxu0
  %v606 = vadd.f32 %v230, %v605
  %v607 = vpop.f32.mrf.mxu0
  %v608 = vadd.f32 %v234, %v607
  %609 = vdwg.mxu0
  %610 = vmatprep.subr.bf16.mxu0 %v470
  %611 = vmatpush1.bf16.msra.mxu0 %v469
  %612 = vmatprep.subr.bf16.mxu0 %v466
  %613 = vmatpush1.bf16.msra.mxu0 %v465
  %614 = vmatprep.subr.bf16.mxu0 %v462
  %615 = vmatpush1.bf16.msra.mxu0 %v461
  %616 = vmatprep.subr.bf16.mxu0 %v458
  %617 = vmatpush1.bf16.msra.mxu0 %v457
  %618 = vmatprep.subr.bf16.mxu0 %v454
  %619 = vmatpush1.bf16.msra.mxu0 %v453
  %620 = vmatprep.subr.bf16.mxu0 %v450
  %621 = vmatpush1.bf16.msra.mxu0 %v449
  %622 = vmatprep.subr.bf16.mxu0 %v446
  %623 = vmatpush1.bf16.msra.mxu0 %v445
  %624 = vmatprep.subr.bf16.mxu0 %v442
  %625 = vmatpush1.bf16.msra.mxu0 %v441
  %626 = vmatprep.subr.bf16.mxu0 %v502
  %627 = vmatpush2.bf16.msra.mxu0 %v501
  %628 = vmatprep.subr.bf16.mxu0 %v498
  %629 = vmatpush2.bf16.msra.mxu0 %v497
  %630 = vmatprep.subr.bf16.mxu0 %v494
  %631 = vmatpush2.bf16.msra.mxu0 %v493
  %632 = vmatprep.subr.bf16.mxu0 %v490
  %633 = vmatpush2.bf16.msra.mxu0 %v489
  %634 = vmatprep.subr.bf16.mxu0 %v486
  %635 = vmatpush2.bf16.msra.mxu0 %v485
  %636 = vmatprep.subr.bf16.mxu0 %v482
  %637 = vmatpush2.bf16.msra.mxu0 %v481
  %638 = vmatprep.subr.bf16.mxu0 %v478
  %639 = vmatpush2.bf16.msra.mxu0 %v477
  %640 = vmatprep.subr.bf16.mxu0 %v474
  %641 = vmatpush2.bf16.msra.mxu0 %v473
  %642 = vmatprep.mubr.bf16.mxu0 %v160
  %643 = vmatmul.mubr.bf16.gmra.mxu0 %v159
  %v644 = vpop.f32.mrf.mxu0
  %v645 = vadd.f32 %v238, %v644
  %v646 = vpop.f32.mrf.mxu0
  %v647 = vadd.f32 %v242, %v646
  %v648 = vpop.f32.mrf.mxu0
  %v649 = vadd.f32 %v238, %v648
  %v650 = vpop.f32.mrf.mxu0
  %v651 = vadd.f32 %v242, %v650
  %652 = vdwg.mxu0
  %vm653 = vcmp.gt.f32.partialorder %v602, 0.0
  %vm654 = vcmp.gt.f32.partialorder %v604, 0.0
  %vm655 = vcmp.gt.f32.partialorder %v645, 0.0
  %vm656 = vcmp.gt.f32.partialorder %v647, 0.0
  %vm657 = vcmp.gt.f32.partialorder %v606, 0.0
  %vm658 = vcmp.gt.f32.partialorder %v608, 0.0
  %vm659 = vcmp.gt.f32.partialorder %v649, 0.0
  %vm660 = vcmp.gt.f32.partialorder %v651, 0.0
  %v661 = vmul.f32 %v602, 0.2
  %v662 = vmul.f32 %v604, 0.2
  %v663 = vmul.f32 %v645, 0.2
  %v664 = vmul.f32 %v647, 0.2
  %v665 = vmul.f32 %v606, 0.2
  %v666 = vmul.f32 %v608, 0.2
  %v667 = vmul.f32 %v649, 0.2
  %v668 = vmul.f32 %v651, 0.2
  %v669 = vsel %vm653, %v602, %v661
  %v670 = vsel %vm654, %v604, %v662
  %v671 = vsel %vm655, %v645, %v663
  %v672 = vsel %vm656, %v647, %v664
  %v673 = vsel %vm657, %v606, %v665
  %v674 = vsel %vm658, %v608, %v666
  %v675 = vsel %vm659, %v649, %v667
  %v676 = vsel %vm660, %v651, %v668
  %v677 = vpack.c.bf16 %v673, %v669
  %v678 = vpack.c.bf16 %v674, %v670
  %v679 = vpack.c.bf16 %v675, %v671
  %v680 = vpack.c.bf16 %v676, %v672
  %v681 = vld [vmem:[%s5] sm:$0xff]
  %v682 = vld [vmem:[%s5 + $0x8] sm:$0xff]
  %v683 = vld [vmem:[%s5 + $0x10] sm:$0xff]
  %v684 = vld [vmem:[%s5 + $0x18] sm:$0xff]
  %v685 = vld [vmem:[%s5 + $0x20] sm:$0xff]
  %v686 = vld [vmem:[%s5 + $0x28] sm:$0xff]
  %v687 = vld [vmem:[%s5 + $0x30] sm:$0xff]
  %v688 = vld [vmem:[%s5 + $0x38] sm:$0xff]
  %v689 = vld [vmem:[%s5 + $0x40] sm:$0xff]
  %v690 = vld [vmem:[%s5 + $0x48] sm:$0xff]
  %v691 = vld [vmem:[%s5 + $0x50] sm:$0xff]
  %v692 = vld [vmem:[%s5 + $0x58] sm:$0xff]
  %v693 = vld [vmem:[%s5 + $0x60] sm:$0xff]
  %v694 = vld [vmem:[%s5 + $0x68] sm:$0xff]
  %v695 = vld [vmem:[%s5 + $0x70] sm:$0xff]
  %v696 = vld [vmem:[%s5 + $0x78] sm:$0xff]
  %v697 = vld [vmem:[%s5 + $0x80] sm:$0xff]
  %v698 = vld [vmem:[%s5 + $0x88] sm:$0xff]
  %v699 = vld [vmem:[%s5 + $0x90] sm:$0xff]
  %v700 = vld [vmem:[%s5 + $0x98] sm:$0xff]
  %v701 = vld [vmem:[%s5 + $0xa0] sm:$0xff]
  %v702 = vld [vmem:[%s5 + $0xa8] sm:$0xff]
  %v703 = vld [vmem:[%s5 + $0xb0] sm:$0xff]
  %v704 = vld [vmem:[%s5 + $0xb8] sm:$0xff]
  %v705 = vld [vmem:[%s5 + $0xc0] sm:$0xff]
  %v706 = vld [vmem:[%s5 + $0xc8] sm:$0xff]
  %v707 = vld [vmem:[%s5 + $0xd0] sm:$0xff]
  %v708 = vld [vmem:[%s5 + $0xd8] sm:$0xff]
  %v709 = vld [vmem:[%s5 + $0xe0] sm:$0xff]
  %v710 = vld [vmem:[%s5 + $0xe8] sm:$0xff]
  %v711 = vld [vmem:[%s5 + $0xf0] sm:$0xff]
  %v712 = vld [vmem:[%s5 + $0xf8] sm:$0xff]
  %v713 = vld [vmem:[%s5 + $0x100] sm:$0xff]
  %v714 = vld [vmem:[%s5 + $0x108] sm:$0xff]
  %v715 = vld [vmem:[%s5 + $0x110] sm:$0xff]
  %v716 = vld [vmem:[%s5 + $0x118] sm:$0xff]
  %v717 = vld [vmem:[%s5 + $0x120] sm:$0xff]
  %v718 = vld [vmem:[%s5 + $0x128] sm:$0xff]
  %v719 = vld [vmem:[%s5 + $0x130] sm:$0xff]
  %v720 = vld [vmem:[%s5 + $0x138] sm:$0xff]
  %v721 = vld [vmem:[%s5 + $0x140] sm:$0xff]
  %v722 = vld [vmem:[%s5 + $0x148] sm:$0xff]
  %v723 = vld [vmem:[%s5 + $0x150] sm:$0xff]
  %v724 = vld [vmem:[%s5 + $0x158] sm:$0xff]
  %v725 = vld [vmem:[%s5 + $0x160] sm:$0xff]
  %v726 = vld [vmem:[%s5 + $0x168] sm:$0xff]
  %v727 = vld [vmem:[%s5 + $0x170] sm:$0xff]
  %v728 = vld [vmem:[%s5 + $0x178] sm:$0xff]
  %v729 = vld [vmem:[%s5 + $0x180] sm:$0xff]
  %v730 = vld [vmem:[%s5 + $0x188] sm:$0xff]
  %v731 = vld [vmem:[%s5 + $0x190] sm:$0xff]
  %v732 = vld [vmem:[%s5 + $0x198] sm:$0xff]
  %v733 = vld [vmem:[%s5 + $0x1a0] sm:$0xff]
  %v734 = vld [vmem:[%s5 + $0x1a8] sm:$0xff]
  %v735 = vld [vmem:[%s5 + $0x1b0] sm:$0xff]
  %v736 = vld [vmem:[%s5 + $0x1b8] sm:$0xff]
  %v737 = vld [vmem:[%s5 + $0x1c0] sm:$0xff]
  %v738 = vld [vmem:[%s5 + $0x1c8] sm:$0xff]
  %v739 = vld [vmem:[%s5 + $0x1d0] sm:$0xff]
  %v740 = vld [vmem:[%s5 + $0x1d8] sm:$0xff]
  %v741 = vld [vmem:[%s5 + $0x1e0] sm:$0xff]
  %v742 = vld [vmem:[%s5 + $0x1e8] sm:$0xff]
  %v743 = vld [vmem:[%s5 + $0x1f0] sm:$0xff]
  %v744 = vld [vmem:[%s5 + $0x1f8] sm:$0xff]
  %v745 = vld [vmem:[%s5 + $0x200] sm:$0xff]
  %v746 = vld [vmem:[%s5 + $0x208] sm:$0xff]
  %v747 = vld [vmem:[%s5 + $0x210] sm:$0xff]
  %v748 = vld [vmem:[%s5 + $0x218] sm:$0xff]
  %v749 = vld [vmem:[%s5 + $0x220] sm:$0xff]
  %v750 = vld [vmem:[%s5 + $0x228] sm:$0xff]
  %v751 = vld [vmem:[%s5 + $0x230] sm:$0xff]
  %v752 = vld [vmem:[%s5 + $0x238] sm:$0xff]
  %v753 = vld [vmem:[%s5 + $0x240] sm:$0xff]
  %v754 = vld [vmem:[%s5 + $0x248] sm:$0xff]
  %v755 = vld [vmem:[%s5 + $0x250] sm:$0xff]
  %v756 = vld [vmem:[%s5 + $0x258] sm:$0xff]
  %v757 = vld [vmem:[%s5 + $0x260] sm:$0xff]
  %v758 = vld [vmem:[%s5 + $0x268] sm:$0xff]
  %v759 = vld [vmem:[%s5 + $0x270] sm:$0xff]
  %v760 = vld [vmem:[%s5 + $0x278] sm:$0xff]
  %v761 = vld [vmem:[%s5 + $0x280] sm:$0xff]
  %v762 = vld [vmem:[%s5 + $0x288] sm:$0xff]
  %v763 = vld [vmem:[%s5 + $0x290] sm:$0xff]
  %v764 = vld [vmem:[%s5 + $0x298] sm:$0xff]
  %v765 = vld [vmem:[%s5 + $0x2a0] sm:$0xff]
  %v766 = vld [vmem:[%s5 + $0x2a8] sm:$0xff]
  %v767 = vld [vmem:[%s5 + $0x2b0] sm:$0xff]
  %v768 = vld [vmem:[%s5 + $0x2b8] sm:$0xff]
  %v769 = vld [vmem:[%s5 + $0x2c0] sm:$0xff]
  %v770 = vld [vmem:[%s5 + $0x2c8] sm:$0xff]
  %v771 = vld [vmem:[%s5 + $0x2d0] sm:$0xff]
  %v772 = vld [vmem:[%s5 + $0x2d8] sm:$0xff]
  %v773 = vld [vmem:[%s5 + $0x2e0] sm:$0xff]
  %v774 = vld [vmem:[%s5 + $0x2e8] sm:$0xff]
  %v775 = vld [vmem:[%s5 + $0x2f0] sm:$0xff]
  %v776 = vld [vmem:[%s5 + $0x2f8] sm:$0xff]
  %v777 = vld [vmem:[%s5 + $0x300] sm:$0xff]
  %v778 = vld [vmem:[%s5 + $0x308] sm:$0xff]
  %v779 = vld [vmem:[%s5 + $0x310] sm:$0xff]
  %v780 = vld [vmem:[%s5 + $0x318] sm:$0xff]
  %v781 = vld [vmem:[%s5 + $0x320] sm:$0xff]
  %v782 = vld [vmem:[%s5 + $0x328] sm:$0xff]
  %v783 = vld [vmem:[%s5 + $0x330] sm:$0xff]
  %v784 = vld [vmem:[%s5 + $0x338] sm:$0xff]
  %v785 = vld [vmem:[%s5 + $0x340] sm:$0xff]
  %v786 = vld [vmem:[%s5 + $0x348] sm:$0xff]
  %v787 = vld [vmem:[%s5 + $0x350] sm:$0xff]
  %v788 = vld [vmem:[%s5 + $0x358] sm:$0xff]
  %v789 = vld [vmem:[%s5 + $0x360] sm:$0xff]
  %v790 = vld [vmem:[%s5 + $0x368] sm:$0xff]
  %v791 = vld [vmem:[%s5 + $0x370] sm:$0xff]
  %v792 = vld [vmem:[%s5 + $0x378] sm:$0xff]
  %v793 = vld [vmem:[%s5 + $0x380] sm:$0xff]
  %v794 = vld [vmem:[%s5 + $0x388] sm:$0xff]
  %v795 = vld [vmem:[%s5 + $0x390] sm:$0xff]
  %v796 = vld [vmem:[%s5 + $0x398] sm:$0xff]
  %v797 = vld [vmem:[%s5 + $0x3a0] sm:$0xff]
  %v798 = vld [vmem:[%s5 + $0x3a8] sm:$0xff]
  %v799 = vld [vmem:[%s5 + $0x3b0] sm:$0xff]
  %v800 = vld [vmem:[%s5 + $0x3b8] sm:$0xff]
  %v801 = vld [vmem:[%s5 + $0x3c0] sm:$0xff]
  %v802 = vld [vmem:[%s5 + $0x3c8] sm:$0xff]
  %v803 = vld [vmem:[%s5 + $0x3d0] sm:$0xff]
  %v804 = vld [vmem:[%s5 + $0x3d8] sm:$0xff]
  %v805 = vld [vmem:[%s5 + $0x3e0] sm:$0xff]
  %v806 = vld [vmem:[%s5 + $0x3e8] sm:$0xff]
  %v807 = vld [vmem:[%s5 + $0x3f0] sm:$0xff]
  %v808 = vld [vmem:[%s5 + $0x3f8] sm:$0xff]
  %v809 = vld [vmem:[%s5 + $0x400] sm:$0xff]
  %v810 = vld [vmem:[%s5 + $0x408] sm:$0xff]
  %v811 = vld [vmem:[%s5 + $0x410] sm:$0xff]
  %v812 = vld [vmem:[%s5 + $0x418] sm:$0xff]
  %v813 = vld [vmem:[%s5 + $0x420] sm:$0xff]
  %v814 = vld [vmem:[%s5 + $0x428] sm:$0xff]
  %v815 = vld [vmem:[%s5 + $0x430] sm:$0xff]
  %v816 = vld [vmem:[%s5 + $0x438] sm:$0xff]
  %v817 = vld [vmem:[%s5 + $0x440] sm:$0xff]
  %v818 = vld [vmem:[%s5 + $0x448] sm:$0xff]
  %v819 = vld [vmem:[%s5 + $0x450] sm:$0xff]
  %v820 = vld [vmem:[%s5 + $0x458] sm:$0xff]
  %v821 = vld [vmem:[%s5 + $0x460] sm:$0xff]
  %v822 = vld [vmem:[%s5 + $0x468] sm:$0xff]
  %v823 = vld [vmem:[%s5 + $0x470] sm:$0xff]
  %v824 = vld [vmem:[%s5 + $0x478] sm:$0xff]
  %v825 = vld [vmem:[%s5 + $0x480] sm:$0xff]
  %v826 = vld [vmem:[%s5 + $0x488] sm:$0xff]
  %v827 = vld [vmem:[%s5 + $0x490] sm:$0xff]
  %v828 = vld [vmem:[%s5 + $0x498] sm:$0xff]
  %v829 = vld [vmem:[%s5 + $0x4a0] sm:$0xff]
  %v830 = vld [vmem:[%s5 + $0x4a8] sm:$0xff]
  %v831 = vld [vmem:[%s5 + $0x4b0] sm:$0xff]
  %v832 = vld [vmem:[%s5 + $0x4b8] sm:$0xff]
  %v833 = vld [vmem:[%s5 + $0x4c0] sm:$0xff]
  %v834 = vld [vmem:[%s5 + $0x4c8] sm:$0xff]
  %v835 = vld [vmem:[%s5 + $0x4d0] sm:$0xff]
  %v836 = vld [vmem:[%s5 + $0x4d8] sm:$0xff]
  %v837 = vld [vmem:[%s5 + $0x4e0] sm:$0xff]
  %v838 = vld [vmem:[%s5 + $0x4e8] sm:$0xff]
  %v839 = vld [vmem:[%s5 + $0x4f0] sm:$0xff]
  %v840 = vld [vmem:[%s5 + $0x4f8] sm:$0xff]
  %v841 = vld [vmem:[%s5 + $0x500] sm:$0xff]
  %v842 = vld [vmem:[%s5 + $0x508] sm:$0xff]
  %v843 = vld [vmem:[%s5 + $0x510] sm:$0xff]
  %v844 = vld [vmem:[%s5 + $0x518] sm:$0xff]
  %v845 = vld [vmem:[%s5 + $0x520] sm:$0xff]
  %v846 = vld [vmem:[%s5 + $0x528] sm:$0xff]
  %v847 = vld [vmem:[%s5 + $0x530] sm:$0xff]
  %v848 = vld [vmem:[%s5 + $0x538] sm:$0xff]
  %v849 = vld [vmem:[%s5 + $0x540] sm:$0xff]
  %v850 = vld [vmem:[%s5 + $0x548] sm:$0xff]
  %v851 = vld [vmem:[%s5 + $0x550] sm:$0xff]
  %v852 = vld [vmem:[%s5 + $0x558] sm:$0xff]
  %v853 = vld [vmem:[%s5 + $0x560] sm:$0xff]
  %v854 = vld [vmem:[%s5 + $0x568] sm:$0xff]
  %v855 = vld [vmem:[%s5 + $0x570] sm:$0xff]
  %v856 = vld [vmem:[%s5 + $0x578] sm:$0xff]
  %v857 = vld [vmem:[%s5 + $0x580] sm:$0xff]
  %v858 = vld [vmem:[%s5 + $0x588] sm:$0xff]
  %v859 = vld [vmem:[%s5 + $0x590] sm:$0xff]
  %v860 = vld [vmem:[%s5 + $0x598] sm:$0xff]
  %v861 = vld [vmem:[%s5 + $0x5a0] sm:$0xff]
  %v862 = vld [vmem:[%s5 + $0x5a8] sm:$0xff]
  %v863 = vld [vmem:[%s5 + $0x5b0] sm:$0xff]
  %v864 = vld [vmem:[%s5 + $0x5b8] sm:$0xff]
  %v865 = vld [vmem:[%s5 + $0x5c0] sm:$0xff]
  %v866 = vld [vmem:[%s5 + $0x5c8] sm:$0xff]
  %v867 = vld [vmem:[%s5 + $0x5d0] sm:$0xff]
  %v868 = vld [vmem:[%s5 + $0x5d8] sm:$0xff]
  %v869 = vld [vmem:[%s5 + $0x5e0] sm:$0xff]
  %v870 = vld [vmem:[%s5 + $0x5e8] sm:$0xff]
  %v871 = vld [vmem:[%s5 + $0x5f0] sm:$0xff]
  %v872 = vld [vmem:[%s5 + $0x5f8] sm:$0xff]
  %v873 = vld [vmem:[%s5 + $0x600] sm:$0xff]
  %v874 = vld [vmem:[%s5 + $0x608] sm:$0xff]
  %v875 = vld [vmem:[%s5 + $0x610] sm:$0xff]
  %v876 = vld [vmem:[%s5 + $0x618] sm:$0xff]
  %v877 = vld [vmem:[%s5 + $0x620] sm:$0xff]
  %v878 = vld [vmem:[%s5 + $0x628] sm:$0xff]
  %v879 = vld [vmem:[%s5 + $0x630] sm:$0xff]
  %v880 = vld [vmem:[%s5 + $0x638] sm:$0xff]
  %v881 = vld [vmem:[%s5 + $0x640] sm:$0xff]
  %v882 = vld [vmem:[%s5 + $0x648] sm:$0xff]
  %v883 = vld [vmem:[%s5 + $0x650] sm:$0xff]
  %v884 = vld [vmem:[%s5 + $0x658] sm:$0xff]
  %v885 = vld [vmem:[%s5 + $0x660] sm:$0xff]
  %v886 = vld [vmem:[%s5 + $0x668] sm:$0xff]
  %v887 = vld [vmem:[%s5 + $0x670] sm:$0xff]
  %v888 = vld [vmem:[%s5 + $0x678] sm:$0xff]
  %v889 = vld [vmem:[%s5 + $0x680] sm:$0xff]
  %v890 = vld [vmem:[%s5 + $0x688] sm:$0xff]
  %v891 = vld [vmem:[%s5 + $0x690] sm:$0xff]
  %v892 = vld [vmem:[%s5 + $0x698] sm:$0xff]
  %v893 = vld [vmem:[%s5 + $0x6a0] sm:$0xff]
  %v894 = vld [vmem:[%s5 + $0x6a8] sm:$0xff]
  %v895 = vld [vmem:[%s5 + $0x6b0] sm:$0xff]
  %v896 = vld [vmem:[%s5 + $0x6b8] sm:$0xff]
  %v897 = vld [vmem:[%s5 + $0x6c0] sm:$0xff]
  %v898 = vld [vmem:[%s5 + $0x6c8] sm:$0xff]
  %v899 = vld [vmem:[%s5 + $0x6d0] sm:$0xff]
  %v900 = vld [vmem:[%s5 + $0x6d8] sm:$0xff]
  %v901 = vld [vmem:[%s5 + $0x6e0] sm:$0xff]
  %v902 = vld [vmem:[%s5 + $0x6e8] sm:$0xff]
  %v903 = vld [vmem:[%s5 + $0x6f0] sm:$0xff]
  %v904 = vld [vmem:[%s5 + $0x6f8] sm:$0xff]
  %v905 = vld [vmem:[%s5 + $0x700] sm:$0xff]
  %v906 = vld [vmem:[%s5 + $0x708] sm:$0xff]
  %v907 = vld [vmem:[%s5 + $0x710] sm:$0xff]
  %v908 = vld [vmem:[%s5 + $0x718] sm:$0xff]
  %v909 = vld [vmem:[%s5 + $0x720] sm:$0xff]
  %v910 = vld [vmem:[%s5 + $0x728] sm:$0xff]
  %v911 = vld [vmem:[%s5 + $0x730] sm:$0xff]
  %v912 = vld [vmem:[%s5 + $0x738] sm:$0xff]
  %v913 = vld [vmem:[%s5 + $0x740] sm:$0xff]
  %v914 = vld [vmem:[%s5 + $0x748] sm:$0xff]
  %v915 = vld [vmem:[%s5 + $0x750] sm:$0xff]
  %v916 = vld [vmem:[%s5 + $0x758] sm:$0xff]
  %v917 = vld [vmem:[%s5 + $0x760] sm:$0xff]
  %v918 = vld [vmem:[%s5 + $0x768] sm:$0xff]
  %v919 = vld [vmem:[%s5 + $0x770] sm:$0xff]
  %v920 = vld [vmem:[%s5 + $0x778] sm:$0xff]
  %v921 = vld [vmem:[%s5 + $0x780] sm:$0xff]
  %v922 = vld [vmem:[%s5 + $0x788] sm:$0xff]
  %v923 = vld [vmem:[%s5 + $0x790] sm:$0xff]
  %v924 = vld [vmem:[%s5 + $0x798] sm:$0xff]
  %v925 = vld [vmem:[%s5 + $0x7a0] sm:$0xff]
  %v926 = vld [vmem:[%s5 + $0x7a8] sm:$0xff]
  %v927 = vld [vmem:[%s5 + $0x7b0] sm:$0xff]
  %v928 = vld [vmem:[%s5 + $0x7b8] sm:$0xff]
  %v929 = vld [vmem:[%s5 + $0x7c0] sm:$0xff]
  %v930 = vld [vmem:[%s5 + $0x7c8] sm:$0xff]
  %v931 = vld [vmem:[%s5 + $0x7d0] sm:$0xff]
  %v932 = vld [vmem:[%s5 + $0x7d8] sm:$0xff]
  %v933 = vld [vmem:[%s5 + $0x7e0] sm:$0xff]
  %v934 = vld [vmem:[%s5 + $0x7e8] sm:$0xff]
  %v935 = vld [vmem:[%s5 + $0x7f0] sm:$0xff]
  %v936 = vld [vmem:[%s5 + $0x7f8] sm:$0xff]
  %v937 = vld [vmem:[%s6] sm:$0xff]
  %v939 = vlaneseq
  %v940 = vshrl.u32 %v939, 7
  %v941 = vsub.s32 0, %v940
  %v942 = vrot.slane %v937, %v941
  %v943 = vlaneseq
  %v944 = vshrl.u32 %v943, 7
  %v945 = vsub.s32 1, %v944
  %v946 = vrot.slane %v937, %v945
  %v947 = vlaneseq
  %v948 = vshrl.u32 %v947, 7
  %v949 = vsub.s32 2, %v948
  %v950 = vrot.slane %v937, %v949
  %v951 = vlaneseq
  %v952 = vshrl.u32 %v951, 7
  %v953 = vsub.s32 3, %v952
  %v954 = vrot.slane %v937, %v953
  %v955 = vlaneseq
  %v956 = vshrl.u32 %v955, 7
  %v957 = vsub.s32 4, %v956
  %v958 = vrot.slane %v937, %v957
  %v959 = vlaneseq
  %v960 = vshrl.u32 %v959, 7
  %v961 = vsub.s32 5, %v960
  %v962 = vrot.slane %v937, %v961
  %v963 = vlaneseq
  %v964 = vshrl.u32 %v963, 7
  %v965 = vsub.s32 6, %v964
  %v966 = vrot.slane %v937, %v965
  %v967 = vlaneseq
  %v968 = vshrl.u32 %v967, 7
  %v969 = vsub.s32 7, %v968
  %v970 = vrot.slane %v937, %v969
  %v1235 = vunpack.c.l.b16 %v681
  %v1236 = vunpack.c.h.b16 %v681
  %v1237 = vunpack.c.l.b16 %v682
  %v1238 = vunpack.c.h.b16 %v682
  %v1239 = vunpack.c.l.b16 %v683
  %v1240 = vunpack.c.h.b16 %v683
  %v1241 = vunpack.c.l.b16 %v684
  %v1242 = vunpack.c.h.b16 %v684
  %v1243 = vunpack.c.l.b16 %v685
  %v1244 = vunpack.c.h.b16 %v685
  %v1245 = vunpack.c.l.b16 %v686
  %v1246 = vunpack.c.h.b16 %v686
  %v1247 = vunpack.c.l.b16 %v687
  %v1248 = vunpack.c.h.b16 %v687
  %v1249 = vunpack.c.l.b16 %v688
  %v1250 = vunpack.c.h.b16 %v688
  %v1251 = vunpack.c.l.b16 %v689
  %v1252 = vunpack.c.h.b16 %v689
  %v1253 = vunpack.c.l.b16 %v690
  %v1254 = vunpack.c.h.b16 %v690
  %v1255 = vunpack.c.l.b16 %v691
  %v1256 = vunpack.c.h.b16 %v691
  %v1257 = vunpack.c.l.b16 %v692
  %v1258 = vunpack.c.h.b16 %v692
  %v1259 = vunpack.c.l.b16 %v693
  %v1260 = vunpack.c.h.b16 %v693
  %v1261 = vunpack.c.l.b16 %v694
  %v1262 = vunpack.c.h.b16 %v694
  %v1263 = vunpack.c.l.b16 %v695
  %v1264 = vunpack.c.h.b16 %v695
  %v1265 = vunpack.c.l.b16 %v696
  %v1266 = vunpack.c.h.b16 %v696
  %v1267 = vunpack.c.l.b16 %v697
  %v1268 = vunpack.c.h.b16 %v697
  %v1269 = vunpack.c.l.b16 %v698
  %v1270 = vunpack.c.h.b16 %v698
  %v1271 = vunpack.c.l.b16 %v699
  %v1272 = vunpack.c.h.b16 %v699
  %v1273 = vunpack.c.l.b16 %v700
  %v1274 = vunpack.c.h.b16 %v700
  %v1275 = vunpack.c.l.b16 %v701
  %v1276 = vunpack.c.h.b16 %v701
  %v1277 = vunpack.c.l.b16 %v702
  %v1278 = vunpack.c.h.b16 %v702
  %v1279 = vunpack.c.l.b16 %v703
  %v1280 = vunpack.c.h.b16 %v703
  %v1281 = vunpack.c.l.b16 %v704
  %v1282 = vunpack.c.h.b16 %v704
  %v1283 = vunpack.c.l.b16 %v705
  %v1284 = vunpack.c.h.b16 %v705
  %v1285 = vunpack.c.l.b16 %v706
  %v1286 = vunpack.c.h.b16 %v706
  %v1287 = vunpack.c.l.b16 %v707
  %v1288 = vunpack.c.h.b16 %v707
  %v1289 = vunpack.c.l.b16 %v708
  %v1290 = vunpack.c.h.b16 %v708
  %v1291 = vunpack.c.l.b16 %v709
  %v1292 = vunpack.c.h.b16 %v709
  %v1293 = vunpack.c.l.b16 %v710
  %v1294 = vunpack.c.h.b16 %v710
  %v1295 = vunpack.c.l.b16 %v711
  %v1296 = vunpack.c.h.b16 %v711
  %v1297 = vunpack.c.l.b16 %v712
  %v1298 = vunpack.c.h.b16 %v712
  %v1299 = vunpack.c.l.b16 %v713
  %v1300 = vunpack.c.h.b16 %v713
  %v1301 = vunpack.c.l.b16 %v714
  %v1302 = vunpack.c.h.b16 %v714
  %v1303 = vunpack.c.l.b16 %v715
  %v1304 = vunpack.c.h.b16 %v715
  %v1305 = vunpack.c.l.b16 %v716
  %v1306 = vunpack.c.h.b16 %v716
  %v1307 = vunpack.c.l.b16 %v717
  %v1308 = vunpack.c.h.b16 %v717
  %v1309 = vunpack.c.l.b16 %v718
  %v1310 = vunpack.c.h.b16 %v718
  %v1311 = vunpack.c.l.b16 %v719
  %v1312 = vunpack.c.h.b16 %v719
  %v1313 = vunpack.c.l.b16 %v720
  %v1314 = vunpack.c.h.b16 %v720
  %v1315 = vunpack.c.l.b16 %v721
  %v1316 = vunpack.c.h.b16 %v721
  %v1317 = vunpack.c.l.b16 %v722
  %v1318 = vunpack.c.h.b16 %v722
  %v1319 = vunpack.c.l.b16 %v723
  %v1320 = vunpack.c.h.b16 %v723
  %v1321 = vunpack.c.l.b16 %v724
  %v1322 = vunpack.c.h.b16 %v724
  %v1323 = vunpack.c.l.b16 %v725
  %v1324 = vunpack.c.h.b16 %v725
  %v1325 = vunpack.c.l.b16 %v726
  %v1326 = vunpack.c.h.b16 %v726
  %v1327 = vunpack.c.l.b16 %v727
  %v1328 = vunpack.c.h.b16 %v727
  %v1329 = vunpack.c.l.b16 %v728
  %v1330 = vunpack.c.h.b16 %v728
  %v1331 = vunpack.c.l.b16 %v729
  %v1332 = vunpack.c.h.b16 %v729
  %v1333 = vunpack.c.l.b16 %v730
  %v1334 = vunpack.c.h.b16 %v730
  %v1335 = vunpack.c.l.b16 %v731
  %v1336 = vunpack.c.h.b16 %v731
  %v1337 = vunpack.c.l.b16 %v732
  %v1338 = vunpack.c.h.b16 %v732
  %v1339 = vunpack.c.l.b16 %v733
  %v1340 = vunpack.c.h.b16 %v733
  %v1341 = vunpack.c.l.b16 %v734
  %v1342 = vunpack.c.h.b16 %v734
  %v1343 = vunpack.c.l.b16 %v735
  %v1344 = vunpack.c.h.b16 %v735
  %v1345 = vunpack.c.l.b16 %v736
  %v1346 = vunpack.c.h.b16 %v736
  %v1347 = vunpack.c.l.b16 %v737
  %v1348 = vunpack.c.h.b16 %v737
  %v1349 = vunpack.c.l.b16 %v738
  %v1350 = vunpack.c.h.b16 %v738
  %v1351 = vunpack.c.l.b16 %v739
  %v1352 = vunpack.c.h.b16 %v739
  %v1353 = vunpack.c.l.b16 %v740
  %v1354 = vunpack.c.h.b16 %v740
  %v1355 = vunpack.c.l.b16 %v741
  %v1356 = vunpack.c.h.b16 %v741
  %v1357 = vunpack.c.l.b16 %v742
  %v1358 = vunpack.c.h.b16 %v742
  %v1359 = vunpack.c.l.b16 %v743
  %v1360 = vunpack.c.h.b16 %v743
  %v1361 = vunpack.c.l.b16 %v744
  %v1362 = vunpack.c.h.b16 %v744
  %v1363 = vunpack.c.l.b16 %v745
  %v1364 = vunpack.c.h.b16 %v745
  %v1365 = vunpack.c.l.b16 %v746
  %v1366 = vunpack.c.h.b16 %v746
  %v1367 = vunpack.c.l.b16 %v747
  %v1368 = vunpack.c.h.b16 %v747
  %v1369 = vunpack.c.l.b16 %v748
  %v1370 = vunpack.c.h.b16 %v748
  %v1371 = vunpack.c.l.b16 %v749
  %v1372 = vunpack.c.h.b16 %v749
  %v1373 = vunpack.c.l.b16 %v750
  %v1374 = vunpack.c.h.b16 %v750
  %v1375 = vunpack.c.l.b16 %v751
  %v1376 = vunpack.c.h.b16 %v751
  %v1377 = vunpack.c.l.b16 %v752
  %v1378 = vunpack.c.h.b16 %v752
  %v1379 = vunpack.c.l.b16 %v753
  %v1380 = vunpack.c.h.b16 %v753
  %v1381 = vunpack.c.l.b16 %v754
  %v1382 = vunpack.c.h.b16 %v754
  %v1383 = vunpack.c.l.b16 %v755
  %v1384 = vunpack.c.h.b16 %v755
  %v1385 = vunpack.c.l.b16 %v756
  %v1386 = vunpack.c.h.b16 %v756
  %v1387 = vunpack.c.l.b16 %v757
  %v1388 = vunpack.c.h.b16 %v757
  %v1389 = vunpack.c.l.b16 %v758
  %v1390 = vunpack.c.h.b16 %v758
  %v1391 = vunpack.c.l.b16 %v759
  %v1392 = vunpack.c.h.b16 %v759
  %v1393 = vunpack.c.l.b16 %v760
  %v1394 = vunpack.c.h.b16 %v760
  %v1395 = vunpack.c.l.b16 %v761
  %v1396 = vunpack.c.h.b16 %v761
  %v1397 = vunpack.c.l.b16 %v762
  %v1398 = vunpack.c.h.b16 %v762
  %v1399 = vunpack.c.l.b16 %v763
  %v1400 = vunpack.c.h.b16 %v763
  %v1401 = vunpack.c.l.b16 %v764
  %v1402 = vunpack.c.h.b16 %v764
  %v1403 = vunpack.c.l.b16 %v765
  %v1404 = vunpack.c.h.b16 %v765
  %v1405 = vunpack.c.l.b16 %v766
  %v1406 = vunpack.c.h.b16 %v766
  %v1407 = vunpack.c.l.b16 %v767
  %v1408 = vunpack.c.h.b16 %v767
  %v1409 = vunpack.c.l.b16 %v768
  %v1410 = vunpack.c.h.b16 %v768
  %v1411 = vunpack.c.l.b16 %v769
  %v1412 = vunpack.c.h.b16 %v769
  %v1413 = vunpack.c.l.b16 %v770
  %v1414 = vunpack.c.h.b16 %v770
  %v1415 = vunpack.c.l.b16 %v771
  %v1416 = vunpack.c.h.b16 %v771
  %v1417 = vunpack.c.l.b16 %v772
  %v1418 = vunpack.c.h.b16 %v772
  %v1419 = vunpack.c.l.b16 %v773
  %v1420 = vunpack.c.h.b16 %v773
  %v1421 = vunpack.c.l.b16 %v774
  %v1422 = vunpack.c.h.b16 %v774
  %v1423 = vunpack.c.l.b16 %v775
  %v1424 = vunpack.c.h.b16 %v775
  %v1425 = vunpack.c.l.b16 %v776
  %v1426 = vunpack.c.h.b16 %v776
  %v1427 = vunpack.c.l.b16 %v777
  %v1428 = vunpack.c.h.b16 %v777
  %v1429 = vunpack.c.l.b16 %v778
  %v1430 = vunpack.c.h.b16 %v778
  %v1431 = vunpack.c.l.b16 %v779
  %v1432 = vunpack.c.h.b16 %v779
  %v1433 = vunpack.c.l.b16 %v780
  %v1434 = vunpack.c.h.b16 %v780
  %v1435 = vunpack.c.l.b16 %v781
  %v1436 = vunpack.c.h.b16 %v781
  %v1437 = vunpack.c.l.b16 %v782
  %v1438 = vunpack.c.h.b16 %v782
  %v1439 = vunpack.c.l.b16 %v783
  %v1440 = vunpack.c.h.b16 %v783
  %v1441 = vunpack.c.l.b16 %v784
  %v1442 = vunpack.c.h.b16 %v784
  %v1443 = vunpack.c.l.b16 %v785
  %v1444 = vunpack.c.h.b16 %v785
  %v1445 = vunpack.c.l.b16 %v786
  %v1446 = vunpack.c.h.b16 %v786
  %v1447 = vunpack.c.l.b16 %v787
  %v1448 = vunpack.c.h.b16 %v787
  %v1449 = vunpack.c.l.b16 %v788
  %v1450 = vunpack.c.h.b16 %v788
  %v1451 = vunpack.c.l.b16 %v789
  %v1452 = vunpack.c.h.b16 %v789
  %v1453 = vunpack.c.l.b16 %v790
  %v1454 = vunpack.c.h.b16 %v790
  %v1455 = vunpack.c.l.b16 %v791
  %v1456 = vunpack.c.h.b16 %v791
  %v1457 = vunpack.c.l.b16 %v792
  %v1458 = vunpack.c.h.b16 %v792
  %v1459 = vunpack.c.l.b16 %v793
  %v1460 = vunpack.c.h.b16 %v793
  %v1461 = vunpack.c.l.b16 %v794
  %v1462 = vunpack.c.h.b16 %v794
  %v1463 = vunpack.c.l.b16 %v795
  %v1464 = vunpack.c.h.b16 %v795
  %v1465 = vunpack.c.l.b16 %v796
  %v1466 = vunpack.c.h.b16 %v796
  %v1467 = vunpack.c.l.b16 %v797
  %v1468 = vunpack.c.h.b16 %v797
  %v1469 = vunpack.c.l.b16 %v798
  %v1470 = vunpack.c.h.b16 %v798
  %v1471 = vunpack.c.l.b16 %v799
  %v1472 = vunpack.c.h.b16 %v799
  %v1473 = vunpack.c.l.b16 %v800
  %v1474 = vunpack.c.h.b16 %v800
  %v1475 = vunpack.c.l.b16 %v801
  %v1476 = vunpack.c.h.b16 %v801
  %v1477 = vunpack.c.l.b16 %v802
  %v1478 = vunpack.c.h.b16 %v802
  %v1479 = vunpack.c.l.b16 %v803
  %v1480 = vunpack.c.h.b16 %v803
  %v1481 = vunpack.c.l.b16 %v804
  %v1482 = vunpack.c.h.b16 %v804
  %v1483 = vunpack.c.l.b16 %v805
  %v1484 = vunpack.c.h.b16 %v805
  %v1485 = vunpack.c.l.b16 %v806
  %v1486 = vunpack.c.h.b16 %v806
  %v1487 = vunpack.c.l.b16 %v807
  %v1488 = vunpack.c.h.b16 %v807
  %v1489 = vunpack.c.l.b16 %v808
  %v1490 = vunpack.c.h.b16 %v808
  %v1491 = vunpack.c.l.b16 %v809
  %v1492 = vunpack.c.h.b16 %v809
  %v1493 = vunpack.c.l.b16 %v810
  %v1494 = vunpack.c.h.b16 %v810
  %v1495 = vunpack.c.l.b16 %v811
  %v1496 = vunpack.c.h.b16 %v811
  %v1497 = vunpack.c.l.b16 %v812
  %v1498 = vunpack.c.h.b16 %v812
  %v1499 = vunpack.c.l.b16 %v813
  %v1500 = vunpack.c.h.b16 %v813
  %v1501 = vunpack.c.l.b16 %v814
  %v1502 = vunpack.c.h.b16 %v814
  %v1503 = vunpack.c.l.b16 %v815
  %v1504 = vunpack.c.h.b16 %v815
  %v1505 = vunpack.c.l.b16 %v816
  %v1506 = vunpack.c.h.b16 %v816
  %v1507 = vunpack.c.l.b16 %v817
  %v1508 = vunpack.c.h.b16 %v817
  %v1509 = vunpack.c.l.b16 %v818
  %v1510 = vunpack.c.h.b16 %v818
  %v1511 = vunpack.c.l.b16 %v819
  %v1512 = vunpack.c.h.b16 %v819
  %v1513 = vunpack.c.l.b16 %v820
  %v1514 = vunpack.c.h.b16 %v820
  %v1515 = vunpack.c.l.b16 %v821
  %v1516 = vunpack.c.h.b16 %v821
  %v1517 = vunpack.c.l.b16 %v822
  %v1518 = vunpack.c.h.b16 %v822
  %v1519 = vunpack.c.l.b16 %v823
  %v1520 = vunpack.c.h.b16 %v823
  %v1521 = vunpack.c.l.b16 %v824
  %v1522 = vunpack.c.h.b16 %v824
  %v1523 = vunpack.c.l.b16 %v825
  %v1524 = vunpack.c.h.b16 %v825
  %v1525 = vunpack.c.l.b16 %v826
  %v1526 = vunpack.c.h.b16 %v826
  %v1527 = vunpack.c.l.b16 %v827
  %v1528 = vunpack.c.h.b16 %v827
  %v1529 = vunpack.c.l.b16 %v828
  %v1530 = vunpack.c.h.b16 %v828
  %v1531 = vunpack.c.l.b16 %v829
  %v1532 = vunpack.c.h.b16 %v829
  %v1533 = vunpack.c.l.b16 %v830
  %v1534 = vunpack.c.h.b16 %v830
  %v1535 = vunpack.c.l.b16 %v831
  %v1536 = vunpack.c.h.b16 %v831
  %v1537 = vunpack.c.l.b16 %v832
  %v1538 = vunpack.c.h.b16 %v832
  %v1539 = vunpack.c.l.b16 %v833
  %v1540 = vunpack.c.h.b16 %v833
  %v1541 = vunpack.c.l.b16 %v834
  %v1542 = vunpack.c.h.b16 %v834
  %v1543 = vunpack.c.l.b16 %v835
  %v1544 = vunpack.c.h.b16 %v835
  %v1545 = vunpack.c.l.b16 %v836
  %v1546 = vunpack.c.h.b16 %v836
  %v1547 = vunpack.c.l.b16 %v837
  %v1548 = vunpack.c.h.b16 %v837
  %v1549 = vunpack.c.l.b16 %v838
  %v1550 = vunpack.c.h.b16 %v838
  %v1551 = vunpack.c.l.b16 %v839
  %v1552 = vunpack.c.h.b16 %v839
  %v1553 = vunpack.c.l.b16 %v840
  %v1554 = vunpack.c.h.b16 %v840
  %v1555 = vunpack.c.l.b16 %v841
  %v1556 = vunpack.c.h.b16 %v841
  %v1557 = vunpack.c.l.b16 %v842
  %v1558 = vunpack.c.h.b16 %v842
  %v1559 = vunpack.c.l.b16 %v843
  %v1560 = vunpack.c.h.b16 %v843
  %v1561 = vunpack.c.l.b16 %v844
  %v1562 = vunpack.c.h.b16 %v844
  %v1563 = vunpack.c.l.b16 %v845
  %v1564 = vunpack.c.h.b16 %v845
  %v1565 = vunpack.c.l.b16 %v846
  %v1566 = vunpack.c.h.b16 %v846
  %v1567 = vunpack.c.l.b16 %v847
  %v1568 = vunpack.c.h.b16 %v847
  %v1569 = vunpack.c.l.b16 %v848
  %v1570 = vunpack.c.h.b16 %v848
  %v1571 = vunpack.c.l.b16 %v849
  %v1572 = vunpack.c.h.b16 %v849
  %v1573 = vunpack.c.l.b16 %v850
  %v1574 = vunpack.c.h.b16 %v850
  %v1575 = vunpack.c.l.b16 %v851
  %v1576 = vunpack.c.h.b16 %v851
  %v1577 = vunpack.c.l.b16 %v852
  %v1578 = vunpack.c.h.b16 %v852
  %v1579 = vunpack.c.l.b16 %v853
  %v1580 = vunpack.c.h.b16 %v853
  %v1581 = vunpack.c.l.b16 %v854
  %v1582 = vunpack.c.h.b16 %v854
  %v1583 = vunpack.c.l.b16 %v855
  %v1584 = vunpack.c.h.b16 %v855
  %v1585 = vunpack.c.l.b16 %v856
  %v1586 = vunpack.c.h.b16 %v856
  %v1587 = vunpack.c.l.b16 %v857
  %v1588 = vunpack.c.h.b16 %v857
  %v1589 = vunpack.c.l.b16 %v858
  %v1590 = vunpack.c.h.b16 %v858
  %v1591 = vunpack.c.l.b16 %v859
  %v1592 = vunpack.c.h.b16 %v859
  %v1593 = vunpack.c.l.b16 %v860
  %v1594 = vunpack.c.h.b16 %v860
  %v1595 = vunpack.c.l.b16 %v861
  %v1596 = vunpack.c.h.b16 %v861
  %v1597 = vunpack.c.l.b16 %v862
  %v1598 = vunpack.c.h.b16 %v862
  %v1599 = vunpack.c.l.b16 %v863
  %v1600 = vunpack.c.h.b16 %v863
  %v1601 = vunpack.c.l.b16 %v864
  %v1602 = vunpack.c.h.b16 %v864
  %v1603 = vunpack.c.l.b16 %v865
  %v1604 = vunpack.c.h.b16 %v865
  %v1605 = vunpack.c.l.b16 %v866
  %v1606 = vunpack.c.h.b16 %v866
  %v1607 = vunpack.c.l.b16 %v867
  %v1608 = vunpack.c.h.b16 %v867
  %v1609 = vunpack.c.l.b16 %v868
  %v1610 = vunpack.c.h.b16 %v868
  %v1611 = vunpack.c.l.b16 %v869
  %v1612 = vunpack.c.h.b16 %v869
  %v1613 = vunpack.c.l.b16 %v870
  %v1614 = vunpack.c.h.b16 %v870
  %v1615 = vunpack.c.l.b16 %v871
  %v1616 = vunpack.c.h.b16 %v871
  %v1617 = vunpack.c.l.b16 %v872
  %v1618 = vunpack.c.h.b16 %v872
  %v1619 = vunpack.c.l.b16 %v873
  %v1620 = vunpack.c.h.b16 %v873
  %v1621 = vunpack.c.l.b16 %v874
  %v1622 = vunpack.c.h.b16 %v874
  %v1623 = vunpack.c.l.b16 %v875
  %v1624 = vunpack.c.h.b16 %v875
  %v1625 = vunpack.c.l.b16 %v876
  %v1626 = vunpack.c.h.b16 %v876
  %v1627 = vunpack.c.l.b16 %v877
  %v1628 = vunpack.c.h.b16 %v877
  %v1629 = vunpack.c.l.b16 %v878
  %v1630 = vunpack.c.h.b16 %v878
  %v1631 = vunpack.c.l.b16 %v879
  %v1632 = vunpack.c.h.b16 %v879
  %v1633 = vunpack.c.l.b16 %v880
  %v1634 = vunpack.c.h.b16 %v880
  %v1635 = vunpack.c.l.b16 %v881
  %v1636 = vunpack.c.h.b16 %v881
  %v1637 = vunpack.c.l.b16 %v882
  %v1638 = vunpack.c.h.b16 %v882
  %v1639 = vunpack.c.l.b16 %v883
  %v1640 = vunpack.c.h.b16 %v883
  %v1641 = vunpack.c.l.b16 %v884
  %v1642 = vunpack.c.h.b16 %v884
  %v1643 = vunpack.c.l.b16 %v885
  %v1644 = vunpack.c.h.b16 %v885
  %v1645 = vunpack.c.l.b16 %v886
  %v1646 = vunpack.c.h.b16 %v886
  %v1647 = vunpack.c.l.b16 %v887
  %v1648 = vunpack.c.h.b16 %v887
  %v1649 = vunpack.c.l.b16 %v888
  %v1650 = vunpack.c.h.b16 %v888
  %v1651 = vunpack.c.l.b16 %v889
  %v1652 = vunpack.c.h.b16 %v889
  %v1653 = vunpack.c.l.b16 %v890
  %v1654 = vunpack.c.h.b16 %v890
  %v1655 = vunpack.c.l.b16 %v891
  %v1656 = vunpack.c.h.b16 %v891
  %v1657 = vunpack.c.l.b16 %v892
  %v1658 = vunpack.c.h.b16 %v892
  %v1659 = vunpack.c.l.b16 %v893
  %v1660 = vunpack.c.h.b16 %v893
  %v1661 = vunpack.c.l.b16 %v894
  %v1662 = vunpack.c.h.b16 %v894
  %v1663 = vunpack.c.l.b16 %v895
  %v1664 = vunpack.c.h.b16 %v895
  %v1665 = vunpack.c.l.b16 %v896
  %v1666 = vunpack.c.h.b16 %v896
  %v1667 = vunpack.c.l.b16 %v897
  %v1668 = vunpack.c.h.b16 %v897
  %v1669 = vunpack.c.l.b16 %v898
  %v1670 = vunpack.c.h.b16 %v898
  %v1671 = vunpack.c.l.b16 %v899
  %v1672 = vunpack.c.h.b16 %v899
  %v1673 = vunpack.c.l.b16 %v900
  %v1674 = vunpack.c.h.b16 %v900
  %v1675 = vunpack.c.l.b16 %v901
  %v1676 = vunpack.c.h.b16 %v901
  %v1677 = vunpack.c.l.b16 %v902
  %v1678 = vunpack.c.h.b16 %v902
  %v1679 = vunpack.c.l.b16 %v903
  %v1680 = vunpack.c.h.b16 %v903
  %v1681 = vunpack.c.l.b16 %v904
  %v1682 = vunpack.c.h.b16 %v904
  %v1683 = vunpack.c.l.b16 %v905
  %v1684 = vunpack.c.h.b16 %v905
  %v1685 = vunpack.c.l.b16 %v906
  %v1686 = vunpack.c.h.b16 %v906
  %v1687 = vunpack.c.l.b16 %v907
  %v1688 = vunpack.c.h.b16 %v907
  %v1689 = vunpack.c.l.b16 %v908
  %v1690 = vunpack.c.h.b16 %v908
  %v1691 = vunpack.c.l.b16 %v909
  %v1692 = vunpack.c.h.b16 %v909
  %v1693 = vunpack.c.l.b16 %v910
  %v1694 = vunpack.c.h.b16 %v910
  %v1695 = vunpack.c.l.b16 %v911
  %v1696 = vunpack.c.h.b16 %v911
  %v1697 = vunpack.c.l.b16 %v912
  %v1698 = vunpack.c.h.b16 %v912
  %v1699 = vunpack.c.l.b16 %v913
  %v1700 = vunpack.c.h.b16 %v913
  %v1701 = vunpack.c.l.b16 %v914
  %v1702 = vunpack.c.h.b16 %v914
  %v1703 = vunpack.c.l.b16 %v915
  %v1704 = vunpack.c.h.b16 %v915
  %v1705 = vunpack.c.l.b16 %v916
  %v1706 = vunpack.c.h.b16 %v916
  %v1707 = vunpack.c.l.b16 %v917
  %v1708 = vunpack.c.h.b16 %v917
  %v1709 = vunpack.c.l.b16 %v918
  %v1710 = vunpack.c.h.b16 %v918
  %v1711 = vunpack.c.l.b16 %v919
  %v1712 = vunpack.c.h.b16 %v919
  %v1713 = vunpack.c.l.b16 %v920
  %v1714 = vunpack.c.h.b16 %v920
  %v1715 = vunpack.c.l.b16 %v921
  %v1716 = vunpack.c.h.b16 %v921
  %v1717 = vunpack.c.l.b16 %v922
  %v1718 = vunpack.c.h.b16 %v922
  %v1719 = vunpack.c.l.b16 %v923
  %v1720 = vunpack.c.h.b16 %v923
  %v1721 = vunpack.c.l.b16 %v924
  %v1722 = vunpack.c.h.b16 %v924
  %v1723 = vunpack.c.l.b16 %v925
  %v1724 = vunpack.c.h.b16 %v925
  %v1725 = vunpack.c.l.b16 %v926
  %v1726 = vunpack.c.h.b16 %v926
  %v1727 = vunpack.c.l.b16 %v927
  %v1728 = vunpack.c.h.b16 %v927
  %v1729 = vunpack.c.l.b16 %v928
  %v1730 = vunpack.c.h.b16 %v928
  %v1731 = vunpack.c.l.b16 %v929
  %v1732 = vunpack.c.h.b16 %v929
  %v1733 = vunpack.c.l.b16 %v930
  %v1734 = vunpack.c.h.b16 %v930
  %v1735 = vunpack.c.l.b16 %v931
  %v1736 = vunpack.c.h.b16 %v931
  %v1737 = vunpack.c.l.b16 %v932
  %v1738 = vunpack.c.h.b16 %v932
  %v1739 = vunpack.c.l.b16 %v933
  %v1740 = vunpack.c.h.b16 %v933
  %v1741 = vunpack.c.l.b16 %v934
  %v1742 = vunpack.c.h.b16 %v934
  %v1743 = vunpack.c.l.b16 %v935
  %v1744 = vunpack.c.h.b16 %v935
  %v1745 = vunpack.c.l.b16 %v936
  %v1746 = vunpack.c.h.b16 %v936
  %v1747 = vpack.c.b16 %v1243, %v1235
  %v1748 = vpack.c.b16 %v1244, %v1236
  %v1749 = vpack.c.b16 %v1245, %v1237
  %v1750 = vpack.c.b16 %v1246, %v1238
  %v1751 = vpack.c.b16 %v1247, %v1239
  %v1752 = vpack.c.b16 %v1248, %v1240
  %v1753 = vpack.c.b16 %v1249, %v1241
  %v1754 = vpack.c.b16 %v1250, %v1242
  %v1755 = vpack.c.b16 %v1259, %v1251
  %v1756 = vpack.c.b16 %v1260, %v1252
  %v1757 = vpack.c.b16 %v1261, %v1253
  %v1758 = vpack.c.b16 %v1262, %v1254
  %v1759 = vpack.c.b16 %v1263, %v1255
  %v1760 = vpack.c.b16 %v1264, %v1256
  %v1761 = vpack.c.b16 %v1265, %v1257
  %v1762 = vpack.c.b16 %v1266, %v1258
  %v1763 = vpack.c.b16 %v1275, %v1267
  %v1764 = vpack.c.b16 %v1276, %v1268
  %v1765 = vpack.c.b16 %v1277, %v1269
  %v1766 = vpack.c.b16 %v1278, %v1270
  %v1767 = vpack.c.b16 %v1279, %v1271
  %v1768 = vpack.c.b16 %v1280, %v1272
  %v1769 = vpack.c.b16 %v1281, %v1273
  %v1770 = vpack.c.b16 %v1282, %v1274
  %v1771 = vpack.c.b16 %v1291, %v1283
  %v1772 = vpack.c.b16 %v1292, %v1284
  %v1773 = vpack.c.b16 %v1293, %v1285
  %v1774 = vpack.c.b16 %v1294, %v1286
  %v1775 = vpack.c.b16 %v1295, %v1287
  %v1776 = vpack.c.b16 %v1296, %v1288
  %v1777 = vpack.c.b16 %v1297, %v1289
  %v1778 = vpack.c.b16 %v1298, %v1290
  %v1779 = vpack.c.b16 %v1307, %v1299
  %v1780 = vpack.c.b16 %v1308, %v1300
  %v1781 = vpack.c.b16 %v1309, %v1301
  %v1782 = vpack.c.b16 %v1310, %v1302
  %v1783 = vpack.c.b16 %v1311, %v1303
  %v1784 = vpack.c.b16 %v1312, %v1304
  %v1785 = vpack.c.b16 %v1313, %v1305
  %v1786 = vpack.c.b16 %v1314, %v1306
  %v1787 = vpack.c.b16 %v1323, %v1315
  %v1788 = vpack.c.b16 %v1324, %v1316
  %v1789 = vpack.c.b16 %v1325, %v1317
  %v1790 = vpack.c.b16 %v1326, %v1318
  %v1791 = vpack.c.b16 %v1327, %v1319
  %v1792 = vpack.c.b16 %v1328, %v1320
  %v1793 = vpack.c.b16 %v1329, %v1321
  %v1794 = vpack.c.b16 %v1330, %v1322
  %v1795 = vpack.c.b16 %v1339, %v1331
  %v1796 = vpack.c.b16 %v1340, %v1332
  %v1797 = vpack.c.b16 %v1341, %v1333
  %v1798 = vpack.c.b16 %v1342, %v1334
  %v1799 = vpack.c.b16 %v1343, %v1335
  %v1800 = vpack.c.b16 %v1344, %v1336
  %v1801 = vpack.c.b16 %v1345, %v1337
  %v1802 = vpack.c.b16 %v1346, %v1338
  %v1803 = vpack.c.b16 %v1355, %v1347
  %v1804 = vpack.c.b16 %v1356, %v1348
  %v1805 = vpack.c.b16 %v1357, %v1349
  %v1806 = vpack.c.b16 %v1358, %v1350
  %v1807 = vpack.c.b16 %v1359, %v1351
  %v1808 = vpack.c.b16 %v1360, %v1352
  %v1809 = vpack.c.b16 %v1361, %v1353
  %v1810 = vpack.c.b16 %v1362, %v1354
  %v1811 = vpack.c.b16 %v1371, %v1363
  %v1812 = vpack.c.b16 %v1372, %v1364
  %v1813 = vpack.c.b16 %v1373, %v1365
  %v1814 = vpack.c.b16 %v1374, %v1366
  %v1815 = vpack.c.b16 %v1375, %v1367
  %v1816 = vpack.c.b16 %v1376, %v1368
  %v1817 = vpack.c.b16 %v1377, %v1369
  %v1818 = vpack.c.b16 %v1378, %v1370
  %v1819 = vpack.c.b16 %v1387, %v1379
  %v1820 = vpack.c.b16 %v1388, %v1380
  %v1821 = vpack.c.b16 %v1389, %v1381
  %v1822 = vpack.c.b16 %v1390, %v1382
  %v1823 = vpack.c.b16 %v1391, %v1383
  %v1824 = vpack.c.b16 %v1392, %v1384
  %v1825 = vpack.c.b16 %v1393, %v1385
  %v1826 = vpack.c.b16 %v1394, %v1386
  %v1827 = vpack.c.b16 %v1403, %v1395
  %v1828 = vpack.c.b16 %v1404, %v1396
  %v1829 = vpack.c.b16 %v1405, %v1397
  %v1830 = vpack.c.b16 %v1406, %v1398
  %v1831 = vpack.c.b16 %v1407, %v1399
  %v1832 = vpack.c.b16 %v1408, %v1400
  %v1833 = vpack.c.b16 %v1409, %v1401
  %v1834 = vpack.c.b16 %v1410, %v1402
  %v1835 = vpack.c.b16 %v1419, %v1411
  %v1836 = vpack.c.b16 %v1420, %v1412
  %v1837 = vpack.c.b16 %v1421, %v1413
  %v1838 = vpack.c.b16 %v1422, %v1414
  %v1839 = vpack.c.b16 %v1423, %v1415
  %v1840 = vpack.c.b16 %v1424, %v1416
  %v1841 = vpack.c.b16 %v1425, %v1417
  %v1842 = vpack.c.b16 %v1426, %v1418
  %v1843 = vpack.c.b16 %v1435, %v1427
  %v1844 = vpack.c.b16 %v1436, %v1428
  %v1845 = vpack.c.b16 %v1437, %v1429
  %v1846 = vpack.c.b16 %v1438, %v1430
  %v1847 = vpack.c.b16 %v1439, %v1431
  %v1848 = vpack.c.b16 %v1440, %v1432
  %v1849 = vpack.c.b16 %v1441, %v1433
  %v1850 = vpack.c.b16 %v1442, %v1434
  %v1851 = vpack.c.b16 %v1451, %v1443
  %v1852 = vpack.c.b16 %v1452, %v1444
  %v1853 = vpack.c.b16 %v1453, %v1445
  %v1854 = vpack.c.b16 %v1454, %v1446
  %v1855 = vpack.c.b16 %v1455, %v1447
  %v1856 = vpack.c.b16 %v1456, %v1448
  %v1857 = vpack.c.b16 %v1457, %v1449
  %v1858 = vpack.c.b16 %v1458, %v1450
  %v1859 = vpack.c.b16 %v1467, %v1459
  %v1860 = vpack.c.b16 %v1468, %v1460
  %v1861 = vpack.c.b16 %v1469, %v1461
  %v1862 = vpack.c.b16 %v1470, %v1462
  %v1863 = vpack.c.b16 %v1471, %v1463
  %v1864 = vpack.c.b16 %v1472, %v1464
  %v1865 = vpack.c.b16 %v1473, %v1465
  %v1866 = vpack.c.b16 %v1474, %v1466
  %v1867 = vpack.c.b16 %v1483, %v1475
  %v1868 = vpack.c.b16 %v1484, %v1476
  %v1869 = vpack.c.b16 %v1485, %v1477
  %v1870 = vpack.c.b16 %v1486, %v1478
  %v1871 = vpack.c.b16 %v1487, %v1479
  %v1872 = vpack.c.b16 %v1488, %v1480
  %v1873 = vpack.c.b16 %v1489, %v1481
  %v1874 = vpack.c.b16 %v1490, %v1482
  %v1875 = vpack.c.b16 %v1499, %v1491
  %v1876 = vpack.c.b16 %v1500, %v1492
  %v1877 = vpack.c.b16 %v1501, %v1493
  %v1878 = vpack.c.b16 %v1502, %v1494
  %v1879 = vpack.c.b16 %v1503, %v1495
  %v1880 = vpack.c.b16 %v1504, %v1496
  %v1881 = vpack.c.b16 %v1505, %v1497
  %v1882 = vpack.c.b16 %v1506, %v1498
  %v1883 = vpack.c.b16 %v1515, %v1507
  %v1884 = vpack.c.b16 %v1516, %v1508
  %v1885 = vpack.c.b16 %v1517, %v1509
  %v1886 = vpack.c.b16 %v1518, %v1510
  %v1887 = vpack.c.b16 %v1519, %v1511
  %v1888 = vpack.c.b16 %v1520, %v1512
  %v1889 = vpack.c.b16 %v1521, %v1513
  %v1890 = vpack.c.b16 %v1522, %v1514
  %v1891 = vpack.c.b16 %v1531, %v1523
  %v1892 = vpack.c.b16 %v1532, %v1524
  %v1893 = vpack.c.b16 %v1533, %v1525
  %v1894 = vpack.c.b16 %v1534, %v1526
  %v1895 = vpack.c.b16 %v1535, %v1527
  %v1896 = vpack.c.b16 %v1536, %v1528
  %v1897 = vpack.c.b16 %v1537, %v1529
  %v1898 = vpack.c.b16 %v1538, %v1530
  %v1899 = vpack.c.b16 %v1547, %v1539
  %v1900 = vpack.c.b16 %v1548, %v1540
  %v1901 = vpack.c.b16 %v1549, %v1541
  %v1902 = vpack.c.b16 %v1550, %v1542
  %v1903 = vpack.c.b16 %v1551, %v1543
  %v1904 = vpack.c.b16 %v1552, %v1544
  %v1905 = vpack.c.b16 %v1553, %v1545
  %v1906 = vpack.c.b16 %v1554, %v1546
  %v1907 = vpack.c.b16 %v1563, %v1555
  %v1908 = vpack.c.b16 %v1564, %v1556
  %v1909 = vpack.c.b16 %v1565, %v1557
  %v1910 = vpack.c.b16 %v1566, %v1558
  %v1911 = vpack.c.b16 %v1567, %v1559
  %v1912 = vpack.c.b16 %v1568, %v1560
  %v1913 = vpack.c.b16 %v1569, %v1561
  %v1914 = vpack.c.b16 %v1570, %v1562
  %v1915 = vpack.c.b16 %v1579, %v1571
  %v1916 = vpack.c.b16 %v1580, %v1572
  %v1917 = vpack.c.b16 %v1581, %v1573
  %v1918 = vpack.c.b16 %v1582, %v1574
  %v1919 = vpack.c.b16 %v1583, %v1575
  %v1920 = vpack.c.b16 %v1584, %v1576
  %v1921 = vpack.c.b16 %v1585, %v1577
  %v1922 = vpack.c.b16 %v1586, %v1578
  %v1923 = vpack.c.b16 %v1595, %v1587
  %v1924 = vpack.c.b16 %v1596, %v1588
  %v1925 = vpack.c.b16 %v1597, %v1589
  %v1926 = vpack.c.b16 %v1598, %v1590
  %v1927 = vpack.c.b16 %v1599, %v1591
  %v1928 = vpack.c.b16 %v1600, %v1592
  %v1929 = vpack.c.b16 %v1601, %v1593
  %v1930 = vpack.c.b16 %v1602, %v1594
  %v1931 = vpack.c.b16 %v1611, %v1603
  %v1932 = vpack.c.b16 %v1612, %v1604
  %v1933 = vpack.c.b16 %v1613, %v1605
  %v1934 = vpack.c.b16 %v1614, %v1606
  %v1935 = vpack.c.b16 %v1615, %v1607
  %v1936 = vpack.c.b16 %v1616, %v1608
  %v1937 = vpack.c.b16 %v1617, %v1609
  %v1938 = vpack.c.b16 %v1618, %v1610
  %v1939 = vpack.c.b16 %v1627, %v1619
  %v1940 = vpack.c.b16 %v1628, %v1620
  %v1941 = vpack.c.b16 %v1629, %v1621
  %v1942 = vpack.c.b16 %v1630, %v1622
  %v1943 = vpack.c.b16 %v1631, %v1623
  %v1944 = vpack.c.b16 %v1632, %v1624
  %v1945 = vpack.c.b16 %v1633, %v1625
  %v1946 = vpack.c.b16 %v1634, %v1626
  %v1947 = vpack.c.b16 %v1643, %v1635
  %v1948 = vpack.c.b16 %v1644, %v1636
  %v1949 = vpack.c.b16 %v1645, %v1637
  %v1950 = vpack.c.b16 %v1646, %v1638
  %v1951 = vpack.c.b16 %v1647, %v1639
  %v1952 = vpack.c.b16 %v1648, %v1640
  %v1953 = vpack.c.b16 %v1649, %v1641
  %v1954 = vpack.c.b16 %v1650, %v1642
  %v1955 = vpack.c.b16 %v1659, %v1651
  %v1956 = vpack.c.b16 %v1660, %v1652
  %v1957 = vpack.c.b16 %v1661, %v1653
  %v1958 = vpack.c.b16 %v1662, %v1654
  %v1959 = vpack.c.b16 %v1663, %v1655
  %v1960 = vpack.c.b16 %v1664, %v1656
  %v1961 = vpack.c.b16 %v1665, %v1657
  %v1962 = vpack.c.b16 %v1666, %v1658
  %v1963 = vpack.c.b16 %v1675, %v1667
  %v1964 = vpack.c.b16 %v1676, %v1668
  %v1965 = vpack.c.b16 %v1677, %v1669
  %v1966 = vpack.c.b16 %v1678, %v1670
  %v1967 = vpack.c.b16 %v1679, %v1671
  %v1968 = vpack.c.b16 %v1680, %v1672
  %v1969 = vpack.c.b16 %v1681, %v1673
  %v1970 = vpack.c.b16 %v1682, %v1674
  %v1971 = vpack.c.b16 %v1691, %v1683
  %v1972 = vpack.c.b16 %v1692, %v1684
  %v1973 = vpack.c.b16 %v1693, %v1685
  %v1974 = vpack.c.b16 %v1694, %v1686
  %v1975 = vpack.c.b16 %v1695, %v1687
  %v1976 = vpack.c.b16 %v1696, %v1688
  %v1977 = vpack.c.b16 %v1697, %v1689
  %v1978 = vpack.c.b16 %v1698, %v1690
  %v1979 = vpack.c.b16 %v1707, %v1699
  %v1980 = vpack.c.b16 %v1708, %v1700
  %v1981 = vpack.c.b16 %v1709, %v1701
  %v1982 = vpack.c.b16 %v1710, %v1702
  %v1983 = vpack.c.b16 %v1711, %v1703
  %v1984 = vpack.c.b16 %v1712, %v1704
  %v1985 = vpack.c.b16 %v1713, %v1705
  %v1986 = vpack.c.b16 %v1714, %v1706
  %v1987 = vpack.c.b16 %v1723, %v1715
  %v1988 = vpack.c.b16 %v1724, %v1716
  %v1989 = vpack.c.b16 %v1725, %v1717
  %v1990 = vpack.c.b16 %v1726, %v1718
  %v1991 = vpack.c.b16 %v1727, %v1719
  %v1992 = vpack.c.b16 %v1728, %v1720
  %v1993 = vpack.c.b16 %v1729, %v1721
  %v1994 = vpack.c.b16 %v1730, %v1722
  %v1995 = vpack.c.b16 %v1739, %v1731
  %v1996 = vpack.c.b16 %v1740, %v1732
  %v1997 = vpack.c.b16 %v1741, %v1733
  %v1998 = vpack.c.b16 %v1742, %v1734
  %v1999 = vpack.c.b16 %v1743, %v1735
  %v2000 = vpack.c.b16 %v1744, %v1736
  %v2001 = vpack.c.b16 %v1745, %v1737
  %v2002 = vpack.c.b16 %v1746, %v1738
  %2259 = vmatprep.subr.bf16.mxu0 %v1804
  %2260 = vmatpush1.bf16.msra.mxu0 %v1803
  %2261 = vmatprep.subr.bf16.mxu0 %v1796
  %2262 = vmatpush1.bf16.msra.mxu0 %v1795
  %2263 = vmatprep.subr.bf16.mxu0 %v1788
  %2264 = vmatpush1.bf16.msra.mxu0 %v1787
  %2265 = vmatprep.subr.bf16.mxu0 %v1780
  %2266 = vmatpush1.bf16.msra.mxu0 %v1779
  %2267 = vmatprep.subr.bf16.mxu0 %v1772
  %2268 = vmatpush1.bf16.msra.mxu0 %v1771
  %2269 = vmatprep.subr.bf16.mxu0 %v1764
  %2270 = vmatpush1.bf16.msra.mxu0 %v1763
  %2271 = vmatprep.subr.bf16.mxu0 %v1756
  %2272 = vmatpush1.bf16.msra.mxu0 %v1755
  %2273 = vmatprep.subr.bf16.mxu0 %v1748
  %2274 = vmatpush1.bf16.msra.mxu0 %v1747
  %2275 = vmatprep.subr.bf16.mxu0 %v1868
  %2276 = vmatpush2.bf16.msra.mxu0 %v1867
  %2277 = vmatprep.subr.bf16.mxu0 %v1860
  %2278 = vmatpush2.bf16.msra.mxu0 %v1859
  %2279 = vmatprep.subr.bf16.mxu0 %v1852
  %2280 = vmatpush2.bf16.msra.mxu0 %v1851
  %2281 = vmatprep.subr.bf16.mxu0 %v1844
  %2282 = vmatpush2.bf16.msra.mxu0 %v1843
  %2283 = vmatprep.subr.bf16.mxu0 %v1836
  %2284 = vmatpush2.bf16.msra.mxu0 %v1835
  %2285 = vmatprep.subr.bf16.mxu0 %v1828
  %2286 = vmatpush2.bf16.msra.mxu0 %v1827
  %2287 = vmatprep.subr.bf16.mxu0 %v1820
  %2288 = vmatpush2.bf16.msra.mxu0 %v1819
  %2289 = vmatprep.subr.bf16.mxu0 %v1812
  %2290 = vmatpush2.bf16.msra.mxu0 %v1811
  %2291 = vmatprep.mubr.bf16.mxu0 %v678
  %2292 = vmatmul.mubr.bf16.gmra.mxu0 %v677
  %v2293 = vpop.f32.mrf.mxu0
  %v2294 = vadd.f32 %v942, %v2293
  %v2295 = vpop.f32.mrf.mxu0
  %v2296 = vadd.f32 %v946, %v2295
  %v2297 = vpop.f32.mrf.mxu0
  %v2298 = vadd.f32 %v942, %v2297
  %v2299 = vpop.f32.mrf.mxu0
  %v2300 = vadd.f32 %v946, %v2299
  %2301 = vdwg.mxu0
  %2302 = vmatprep.subr.bf16.mxu0 %v1932
  %2303 = vmatpush1.bf16.msra.mxu0 %v1931
  %2304 = vmatprep.subr.bf16.mxu0 %v1924
  %2305 = vmatpush1.bf16.msra.mxu0 %v1923
  %2306 = vmatprep.subr.bf16.mxu0 %v1916
  %2307 = vmatpush1.bf16.msra.mxu0 %v1915
  %2308 = vmatprep.subr.bf16.mxu0 %v1908
  %2309 = vmatpush1.bf16.msra.mxu0 %v1907
  %2310 = vmatprep.subr.bf16.mxu0 %v1900
  %2311 = vmatpush1.bf16.msra.mxu0 %v1899
  %2312 = vmatprep.subr.bf16.mxu0 %v1892
  %2313 = vmatpush1.bf16.msra.mxu0 %v1891
  %2314 = vmatprep.subr.bf16.mxu0 %v1884
  %2315 = vmatpush1.bf16.msra.mxu0 %v1883
  %2316 = vmatprep.subr.bf16.mxu0 %v1876
  %2317 = vmatpush1.bf16.msra.mxu0 %v1875
  %2318 = vmatprep.subr.bf16.mxu0 %v1996
  %2319 = vmatpush2.bf16.msra.mxu0 %v1995
  %2320 = vmatprep.subr.bf16.mxu0 %v1988
  %2321 = vmatpush2.bf16.msra.mxu0 %v1987
  %2322 = vmatprep.subr.bf16.mxu0 %v1980
  %2323 = vmatpush2.bf16.msra.mxu0 %v1979
  %2324 = vmatprep.subr.bf16.mxu0 %v1972
  %2325 = vmatpush2.bf16.msra.mxu0 %v1971
  %2326 = vmatprep.subr.bf16.mxu0 %v1964
  %2327 = vmatpush2.bf16.msra.mxu0 %v1963
  %2328 = vmatprep.subr.bf16.mxu0 %v1956
  %2329 = vmatpush2.bf16.msra.mxu0 %v1955
  %2330 = vmatprep.subr.bf16.mxu0 %v1948
  %2331 = vmatpush2.bf16.msra.mxu0 %v1947
  %2332 = vmatprep.subr.bf16.mxu0 %v1940
  %2333 = vmatpush2.bf16.msra.mxu0 %v1939
  %2334 = vmatprep.mubr.bf16.mxu0 %v680
  %2335 = vmatmul.mubr.bf16.gmra.mxu0 %v679
  %v2336 = vpop.f32.mrf.mxu0
  %v2337 = vadd.f32 %v2294, %v2336
  %v2338 = vpop.f32.mrf.mxu0
  %v2339 = vadd.f32 %v2296, %v2338
  %v2340 = vpop.f32.mrf.mxu0
  %v2341 = vadd.f32 %v2298, %v2340
  %v2342 = vpop.f32.mrf.mxu0
  %v2343 = vadd.f32 %v2300, %v2342
  %2344 = vdwg.mxu0
  %2345 = vmatprep.subr.bf16.mxu0 %v1806
  %2346 = vmatpush1.bf16.msra.mxu0 %v1805
  %2347 = vmatprep.subr.bf16.mxu0 %v1798
  %2348 = vmatpush1.bf16.msra.mxu0 %v1797
  %2349 = vmatprep.subr.bf16.mxu0 %v1790
  %2350 = vmatpush1.bf16.msra.mxu0 %v1789
  %2351 = vmatprep.subr.bf16.mxu0 %v1782
  %2352 = vmatpush1.bf16.msra.mxu0 %v1781
  %2353 = vmatprep.subr.bf16.mxu0 %v1774
  %2354 = vmatpush1.bf16.msra.mxu0 %v1773
  %2355 = vmatprep.subr.bf16.mxu0 %v1766
  %2356 = vmatpush1.bf16.msra.mxu0 %v1765
  %2357 = vmatprep.subr.bf16.mxu0 %v1758
  %2358 = vmatpush1.bf16.msra.mxu0 %v1757
  %2359 = vmatprep.subr.bf16.mxu0 %v1750
  %2360 = vmatpush1.bf16.msra.mxu0 %v1749
  %2361 = vmatprep.subr.bf16.mxu0 %v1870
  %2362 = vmatpush2.bf16.msra.mxu0 %v1869
  %2363 = vmatprep.subr.bf16.mxu0 %v1862
  %2364 = vmatpush2.bf16.msra.mxu0 %v1861
  %2365 = vmatprep.subr.bf16.mxu0 %v1854
  %2366 = vmatpush2.bf16.msra.mxu0 %v1853
  %2367 = vmatprep.subr.bf16.mxu0 %v1846
  %2368 = vmatpush2.bf16.msra.mxu0 %v1845
  %2369 = vmatprep.subr.bf16.mxu0 %v1838
  %2370 = vmatpush2.bf16.msra.mxu0 %v1837
  %2371 = vmatprep.subr.bf16.mxu0 %v1830
  %2372 = vmatpush2.bf16.msra.mxu0 %v1829
  %2373 = vmatprep.subr.bf16.mxu0 %v1822
  %2374 = vmatpush2.bf16.msra.mxu0 %v1821
  %2375 = vmatprep.subr.bf16.mxu0 %v1814
  %2376 = vmatpush2.bf16.msra.mxu0 %v1813
  %2377 = vmatprep.mubr.bf16.mxu0 %v678
  %2378 = vmatmul.mubr.bf16.gmra.mxu0 %v677
  %v2379 = vpop.f32.mrf.mxu0
  %v2380 = vadd.f32 %v950, %v2379
  %v2381 = vpop.f32.mrf.mxu0
  %v2382 = vadd.f32 %v954, %v2381
  %v2383 = vpop.f32.mrf.mxu0
  %v2384 = vadd.f32 %v950, %v2383
  %v2385 = vpop.f32.mrf.mxu0
  %v2386 = vadd.f32 %v954, %v2385
  %2387 = vdwg.mxu0
  %2388 = vmatprep.subr.bf16.mxu0 %v1934
  %2389 = vmatpush1.bf16.msra.mxu0 %v1933
  %2390 = vmatprep.subr.bf16.mxu0 %v1926
  %2391 = vmatpush1.bf16.msra.mxu0 %v1925
  %2392 = vmatprep.subr.bf16.mxu0 %v1918
  %2393 = vmatpush1.bf16.msra.mxu0 %v1917
  %2394 = vmatprep.subr.bf16.mxu0 %v1910
  %2395 = vmatpush1.bf16.msra.mxu0 %v1909
  %2396 = vmatprep.subr.bf16.mxu0 %v1902
  %2397 = vmatpush1.bf16.msra.mxu0 %v1901
  %2398 = vmatprep.subr.bf16.mxu0 %v1894
  %2399 = vmatpush1.bf16.msra.mxu0 %v1893
  %2400 = vmatprep.subr.bf16.mxu0 %v1886
  %2401 = vmatpush1.bf16.msra.mxu0 %v1885
  %2402 = vmatprep.subr.bf16.mxu0 %v1878
  %2403 = vmatpush1.bf16.msra.mxu0 %v1877
  %2404 = vmatprep.subr.bf16.mxu0 %v1998
  %2405 = vmatpush2.bf16.msra.mxu0 %v1997
  %2406 = vmatprep.subr.bf16.mxu0 %v1990
  %2407 = vmatpush2.bf16.msra.mxu0 %v1989
  %2408 = vmatprep.subr.bf16.mxu0 %v1982
  %2409 = vmatpush2.bf16.msra.mxu0 %v1981
  %2410 = vmatprep.subr.bf16.mxu0 %v1974
  %2411 = vmatpush2.bf16.msra.mxu0 %v1973
  %2412 = vmatprep.subr.bf16.mxu0 %v1966
  %2413 = vmatpush2.bf16.msra.mxu0 %v1965
  %2414 = vmatprep.subr.bf16.mxu0 %v1958
  %2415 = vmatpush2.bf16.msra.mxu0 %v1957
  %2416 = vmatprep.subr.bf16.mxu0 %v1950
  %2417 = vmatpush2.bf16.msra.mxu0 %v1949
  %2418 = vmatprep.subr.bf16.mxu0 %v1942
  %2419 = vmatpush2.bf16.msra.mxu0 %v1941
  %2420 = vmatprep.mubr.bf16.mxu0 %v680
  %2421 = vmatmul.mubr.bf16.gmra.mxu0 %v679
  %v2422 = vpop.f32.mrf.mxu0
  %v2423 = vadd.f32 %v2380, %v2422
  %v2424 = vpop.f32.mrf.mxu0
  %v2425 = vadd.f32 %v2382, %v2424
  %v2426 = vpop.f32.mrf.mxu0
  %v2427 = vadd.f32 %v2384, %v2426
  %v2428 = vpop.f32.mrf.mxu0
  %v2429 = vadd.f32 %v2386, %v2428
  %2430 = vdwg.mxu0
  %2431 = vmatprep.subr.bf16.mxu0 %v1808
  %2432 = vmatpush1.bf16.msra.mxu0 %v1807
  %2433 = vmatprep.subr.bf16.mxu0 %v1800
  %2434 = vmatpush1.bf16.msra.mxu0 %v1799
  %2435 = vmatprep.subr.bf16.mxu0 %v1792
  %2436 = vmatpush1.bf16.msra.mxu0 %v1791
  %2437 = vmatprep.subr.bf16.mxu0 %v1784
  %2438 = vmatpush1.bf16.msra.mxu0 %v1783
  %2439 = vmatprep.subr.bf16.mxu0 %v1776
  %2440 = vmatpush1.bf16.msra.mxu0 %v1775
  %2441 = vmatprep.subr.bf16.mxu0 %v1768
  %2442 = vmatpush1.bf16.msra.mxu0 %v1767
  %2443 = vmatprep.subr.bf16.mxu0 %v1760
  %2444 = vmatpush1.bf16.msra.mxu0 %v1759
  %2445 = vmatprep.subr.bf16.mxu0 %v1752
  %2446 = vmatpush1.bf16.msra.mxu0 %v1751
  %2447 = vmatprep.subr.bf16.mxu0 %v1872
  %2448 = vmatpush2.bf16.msra.mxu0 %v1871
  %2449 = vmatprep.subr.bf16.mxu0 %v1864
  %2450 = vmatpush2.bf16.msra.mxu0 %v1863
  %2451 = vmatprep.subr.bf16.mxu0 %v1856
  %2452 = vmatpush2.bf16.msra.mxu0 %v1855
  %2453 = vmatprep.subr.bf16.mxu0 %v1848
  %2454 = vmatpush2.bf16.msra.mxu0 %v1847
  %2455 = vmatprep.subr.bf16.mxu0 %v1840
  %2456 = vmatpush2.bf16.msra.mxu0 %v1839
  %2457 = vmatprep.subr.bf16.mxu0 %v1832
  %2458 = vmatpush2.bf16.msra.mxu0 %v1831
  %2459 = vmatprep.subr.bf16.mxu0 %v1824
  %2460 = vmatpush2.bf16.msra.mxu0 %v1823
  %2461 = vmatprep.subr.bf16.mxu0 %v1816
  %2462 = vmatpush2.bf16.msra.mxu0 %v1815
  %2463 = vmatprep.mubr.bf16.mxu0 %v678
  %2464 = vmatmul.mubr.bf16.gmra.mxu0 %v677
  %v2465 = vpop.f32.mrf.mxu0
  %v2466 = vadd.f32 %v958, %v2465
  %v2467 = vpop.f32.mrf.mxu0
  %v2468 = vadd.f32 %v962, %v2467
  %v2469 = vpop.f32.mrf.mxu0
  %v2470 = vadd.f32 %v958, %v2469
  %v2471 = vpop.f32.mrf.mxu0
  %v2472 = vadd.f32 %v962, %v2471
  %2473 = vdwg.mxu0
  %2474 = vmatprep.subr.bf16.mxu0 %v1936
  %2475 = vmatpush1.bf16.msra.mxu0 %v1935
  %2476 = vmatprep.subr.bf16.mxu0 %v1928
  %2477 = vmatpush1.bf16.msra.mxu0 %v1927
  %2478 = vmatprep.subr.bf16.mxu0 %v1920
  %2479 = vmatpush1.bf16.msra.mxu0 %v1919
  %2480 = vmatprep.subr.bf16.mxu0 %v1912
  %2481 = vmatpush1.bf16.msra.mxu0 %v1911
  %2482 = vmatprep.subr.bf16.mxu0 %v1904
  %2483 = vmatpush1.bf16.msra.mxu0 %v1903
  %2484 = vmatprep.subr.bf16.mxu0 %v1896
  %2485 = vmatpush1.bf16.msra.mxu0 %v1895
  %2486 = vmatprep.subr.bf16.mxu0 %v1888
  %2487 = vmatpush1.bf16.msra.mxu0 %v1887
  %2488 = vmatprep.subr.bf16.mxu0 %v1880
  %2489 = vmatpush1.bf16.msra.mxu0 %v1879
  %2490 = vmatprep.subr.bf16.mxu0 %v2000
  %2491 = vmatpush2.bf16.msra.mxu0 %v1999
  %2492 = vmatprep.subr.bf16.mxu0 %v1992
  %2493 = vmatpush2.bf16.msra.mxu0 %v1991
  %2494 = vmatprep.subr.bf16.mxu0 %v1984
  %2495 = vmatpush2.bf16.msra.mxu0 %v1983
  %2496 = vmatprep.subr.bf16.mxu0 %v1976
  %2497 = vmatpush2.bf16.msra.mxu0 %v1975
  %2498 = vmatprep.subr.bf16.mxu0 %v1968
  %2499 = vmatpush2.bf16.msra.mxu0 %v1967
  %2500 = vmatprep.subr.bf16.mxu0 %v1960
  %2501 = vmatpush2.bf16.msra.mxu0 %v1959
  %2502 = vmatprep.subr.bf16.mxu0 %v1952
  %2503 = vmatpush2.bf16.msra.mxu0 %v1951
  %2504 = vmatprep.subr.bf16.mxu0 %v1944
  %2505 = vmatpush2.bf16.msra.mxu0 %v1943
  %2506 = vmatprep.mubr.bf16.mxu0 %v680
  %2507 = vmatmul.mubr.bf16.gmra.mxu0 %v679
  %v2508 = vpop.f32.mrf.mxu0
  %v2509 = vadd.f32 %v2466, %v2508
  %v2510 = vpop.f32.mrf.mxu0
  %v2511 = vadd.f32 %v2468, %v2510
  %v2512 = vpop.f32.mrf.mxu0
  %v2513 = vadd.f32 %v2470, %v2512
  %v2514 = vpop.f32.mrf.mxu0
  %v2515 = vadd.f32 %v2472, %v2514
  %2516 = vdwg.mxu0
  %2517 = vmatprep.subr.bf16.mxu0 %v1810
  %2518 = vmatpush1.bf16.msra.mxu0 %v1809
  %2519 = vmatprep.subr.bf16.mxu0 %v1802
  %2520 = vmatpush1.bf16.msra.mxu0 %v1801
  %2521 = vmatprep.subr.bf16.mxu0 %v1794
  %2522 = vmatpush1.bf16.msra.mxu0 %v1793
  %2523 = vmatprep.subr.bf16.mxu0 %v1786
  %2524 = vmatpush1.bf16.msra.mxu0 %v1785
  %2525 = vmatprep.subr.bf16.mxu0 %v1778
  %2526 = vmatpush1.bf16.msra.mxu0 %v1777
  %2527 = vmatprep.subr.bf16.mxu0 %v1770
  %2528 = vmatpush1.bf16.msra.mxu0 %v1769
  %2529 = vmatprep.subr.bf16.mxu0 %v1762
  %2530 = vmatpush1.bf16.msra.mxu0 %v1761
  %2531 = vmatprep.subr.bf16.mxu0 %v1754
  %2532 = vmatpush1.bf16.msra.mxu0 %v1753
  %2533 = vmatprep.subr.bf16.mxu0 %v1874
  %2534 = vmatpush2.bf16.msra.mxu0 %v1873
  %2535 = vmatprep.subr.bf16.mxu0 %v1866
  %2536 = vmatpush2.bf16.msra.mxu0 %v1865
  %2537 = vmatprep.subr.bf16.mxu0 %v1858
  %2538 = vmatpush2.bf16.msra.mxu0 %v1857
  %2539 = vmatprep.subr.bf16.mxu0 %v1850
  %2540 = vmatpush2.bf16.msra.mxu0 %v1849
  %2541 = vmatprep.subr.bf16.mxu0 %v1842
  %2542 = vmatpush2.bf16.msra.mxu0 %v1841
  %2543 = vmatprep.subr.bf16.mxu0 %v1834
  %2544 = vmatpush2.bf16.msra.mxu0 %v1833
  %2545 = vmatprep.subr.bf16.mxu0 %v1826
  %2546 = vmatpush2.bf16.msra.mxu0 %v1825
  %2547 = vmatprep.subr.bf16.mxu0 %v1818
  %2548 = vmatpush2.bf16.msra.mxu0 %v1817
  %2549 = vmatprep.mubr.bf16.mxu0 %v678
  %2550 = vmatmul.mubr.bf16.gmra.mxu0 %v677
  %v2551 = vpop.f32.mrf.mxu0
  %v2552 = vadd.f32 %v966, %v2551
  %v2553 = vpop.f32.mrf.mxu0
  %v2554 = vadd.f32 %v970, %v2553
  %v2555 = vpop.f32.mrf.mxu0
  %v2556 = vadd.f32 %v966, %v2555
  %v2557 = vpop.f32.mrf.mxu0
  %v2558 = vadd.f32 %v970, %v2557
  %2559 = vdwg.mxu0
  %2560 = vmatprep.subr.bf16.mxu0 %v1938
  %2561 = vmatpush1.bf16.msra.mxu0 %v1937
  %2562 = vmatprep.subr.bf16.mxu0 %v1930
  %2563 = vmatpush1.bf16.msra.mxu0 %v1929
  %2564 = vmatprep.subr.bf16.mxu0 %v1922
  %2565 = vmatpush1.bf16.msra.mxu0 %v1921
  %2566 = vmatprep.subr.bf16.mxu0 %v1914
  %2567 = vmatpush1.bf16.msra.mxu0 %v1913
  %2568 = vmatprep.subr.bf16.mxu0 %v1906
  %2569 = vmatpush1.bf16.msra.mxu0 %v1905
  %2570 = vmatprep.subr.bf16.mxu0 %v1898
  %2571 = vmatpush1.bf16.msra.mxu0 %v1897
  %2572 = vmatprep.subr.bf16.mxu0 %v1890
  %2573 = vmatpush1.bf16.msra.mxu0 %v1889
  %2574 = vmatprep.subr.bf16.mxu0 %v1882
  %2575 = vmatpush1.bf16.msra.mxu0 %v1881
  %2576 = vmatprep.subr.bf16.mxu0 %v2002
  %2577 = vmatpush2.bf16.msra.mxu0 %v2001
  %2578 = vmatprep.subr.bf16.mxu0 %v1994
  %2579 = vmatpush2.bf16.msra.mxu0 %v1993
  %2580 = vmatprep.subr.bf16.mxu0 %v1986
  %2581 = vmatpush2.bf16.msra.mxu0 %v1985
  %2582 = vmatprep.subr.bf16.mxu0 %v1978
  %2583 = vmatpush2.bf16.msra.mxu0 %v1977
  %2584 = vmatprep.subr.bf16.mxu0 %v1970
  %2585 = vmatpush2.bf16.msra.mxu0 %v1969
  %2586 = vmatprep.subr.bf16.mxu0 %v1962
  %2587 = vmatpush2.bf16.msra.mxu0 %v1961
  %2588 = vmatprep.subr.bf16.mxu0 %v1954
  %2589 = vmatpush2.bf16.msra.mxu0 %v1953
  %2590 = vmatprep.subr.bf16.mxu0 %v1946
  %2591 = vmatpush2.bf16.msra.mxu0 %v1945
  %2592 = vmatprep.mubr.bf16.mxu0 %v680
  %2593 = vmatmul.mubr.bf16.gmra.mxu0 %v679
  %v2594 = vpop.f32.mrf.mxu0
  %v2595 = vadd.f32 %v2552, %v2594
  %v2596 = vpop.f32.mrf.mxu0
  %v2597 = vadd.f32 %v2554, %v2596
  %v2598 = vpop.f32.mrf.mxu0
  %v2599 = vadd.f32 %v2556, %v2598
  %v2600 = vpop.f32.mrf.mxu0
  %v2601 = vadd.f32 %v2558, %v2600
  %2602 = vdwg.mxu0
  %vm2603 = vcmp.gt.f32.partialorder %v2337, 0.0
  %vm2604 = vcmp.gt.f32.partialorder %v2339, 0.0
  %vm2605 = vcmp.gt.f32.partialorder %v2423, 0.0
  %vm2606 = vcmp.gt.f32.partialorder %v2425, 0.0
  %vm2607 = vcmp.gt.f32.partialorder %v2509, 0.0
  %vm2608 = vcmp.gt.f32.partialorder %v2511, 0.0
  %vm2609 = vcmp.gt.f32.partialorder %v2595, 0.0
  %vm2610 = vcmp.gt.f32.partialorder %v2597, 0.0
  %vm2611 = vcmp.gt.f32.partialorder %v2341, 0.0
  %vm2612 = vcmp.gt.f32.partialorder %v2343, 0.0
  %vm2613 = vcmp.gt.f32.partialorder %v2427, 0.0
  %vm2614 = vcmp.gt.f32.partialorder %v2429, 0.0
  %vm2615 = vcmp.gt.f32.partialorder %v2513, 0.0
  %vm2616 = vcmp.gt.f32.partialorder %v2515, 0.0
  %vm2617 = vcmp.gt.f32.partialorder %v2599, 0.0
  %vm2618 = vcmp.gt.f32.partialorder %v2601, 0.0
  %v2619 = vmul.f32 %v2337, 0.2
  %v2620 = vmul.f32 %v2339, 0.2
  %v2621 = vmul.f32 %v2423, 0.2
  %v2622 = vmul.f32 %v2425, 0.2
  %v2623 = vmul.f32 %v2509, 0.2
  %v2624 = vmul.f32 %v2511, 0.2
  %v2625 = vmul.f32 %v2595, 0.2
  %v2626 = vmul.f32 %v2597, 0.2
  %v2627 = vmul.f32 %v2341, 0.2
  %v2628 = vmul.f32 %v2343, 0.2
  %v2629 = vmul.f32 %v2427, 0.2
  %v2630 = vmul.f32 %v2429, 0.2
  %v2631 = vmul.f32 %v2513, 0.2
  %v2632 = vmul.f32 %v2515, 0.2
  %v2633 = vmul.f32 %v2599, 0.2
  %v2634 = vmul.f32 %v2601, 0.2
  %v2635 = vsel %vm2603, %v2337, %v2619
  %v2636 = vsel %vm2604, %v2339, %v2620
  %v2637 = vsel %vm2605, %v2423, %v2621
  %v2638 = vsel %vm2606, %v2425, %v2622
  %v2639 = vsel %vm2607, %v2509, %v2623
  %v2640 = vsel %vm2608, %v2511, %v2624
  %v2641 = vsel %vm2609, %v2595, %v2625
  %v2642 = vsel %vm2610, %v2597, %v2626
  %v2643 = vsel %vm2611, %v2341, %v2627
  %v2644 = vsel %vm2612, %v2343, %v2628
  %v2645 = vsel %vm2613, %v2427, %v2629
  %v2646 = vsel %vm2614, %v2429, %v2630
  %v2647 = vsel %vm2615, %v2513, %v2631
  %v2648 = vsel %vm2616, %v2515, %v2632
  %v2649 = vsel %vm2617, %v2599, %v2633
  %v2650 = vsel %vm2618, %v2601, %v2634
  %v2651 = vpack.c.bf16 %v2643, %v2635
  %v2652 = vpack.c.bf16 %v2644, %v2636
  %v2653 = vpack.c.bf16 %v2645, %v2637
  %v2654 = vpack.c.bf16 %v2646, %v2638
  %v2655 = vpack.c.bf16 %v2647, %v2639
  %v2656 = vpack.c.bf16 %v2648, %v2640
  %v2657 = vpack.c.bf16 %v2649, %v2641
  %v2658 = vpack.c.bf16 %v2650, %v2642
  %v2659 = vld [vmem:[%s7] sm:$0xff]
  %v2660 = vld [vmem:[%s7 + $0x8] sm:$0xff]
  %v2661 = vld [vmem:[%s7 + $0x10] sm:$0xff]
  %v2662 = vld [vmem:[%s7 + $0x18] sm:$0xf]
  %v2663 = vld [vmem:[%s7 + $0x1c] sm:$0xff]
  %v2664 = vld [vmem:[%s7 + $0x24] sm:$0xff]
  %v2665 = vld [vmem:[%s7 + $0x2c] sm:$0xff]
  %v2666 = vld [vmem:[%s7 + $0x34] sm:$0xf]
  %v2667 = vld [vmem:[%s7 + $0x38] sm:$0xff]
  %v2668 = vld [vmem:[%s7 + $0x40] sm:$0xff]
  %v2669 = vld [vmem:[%s7 + $0x48] sm:$0xff]
  %v2670 = vld [vmem:[%s7 + $0x50] sm:$0xf]
  %v2671 = vld [vmem:[%s7 + $0x54] sm:$0xff]
  %v2672 = vld [vmem:[%s7 + $0x5c] sm:$0xff]
  %v2673 = vld [vmem:[%s7 + $0x64] sm:$0xff]
  %v2674 = vld [vmem:[%s7 + $0x6c] sm:$0xf]
  %v2675 = vld [vmem:[%s7 + $0x70] sm:$0xff]
  %v2676 = vld [vmem:[%s7 + $0x78] sm:$0xff]
  %v2677 = vld [vmem:[%s7 + $0x80] sm:$0xff]
  %v2678 = vld [vmem:[%s7 + $0x88] sm:$0xf]
  %v2679 = vld [vmem:[%s7 + $0x8c] sm:$0xff]
  %v2680 = vld [vmem:[%s7 + $0x94] sm:$0xff]
  %v2681 = vld [vmem:[%s7 + $0x9c] sm:$0xff]
  %v2682 = vld [vmem:[%s7 + $0xa4] sm:$0xf]
  %v2683 = vld [vmem:[%s7 + $0xa8] sm:$0xff]
  %v2684 = vld [vmem:[%s7 + $0xb0] sm:$0xff]
  %v2685 = vld [vmem:[%s7 + $0xb8] sm:$0xff]
  %v2686 = vld [vmem:[%s7 + $0xc0] sm:$0xf]
  %v2687 = vld [vmem:[%s7 + $0xc4] sm:$0xff]
  %v2688 = vld [vmem:[%s7 + $0xcc] sm:$0xff]
  %v2689 = vld [vmem:[%s7 + $0xd4] sm:$0xff]
  %v2690 = vld [vmem:[%s7 + $0xdc] sm:$0xf]
  %v2691 = vld [vmem:[%s7 + $0xe0] sm:$0xff]
  %v2692 = vld [vmem:[%s7 + $0xe8] sm:$0xff]
  %v2693 = vld [vmem:[%s7 + $0xf0] sm:$0xff]
  %v2694 = vld [vmem:[%s7 + $0xf8] sm:$0xf]
  %v2695 = vld [vmem:[%s7 + $0xfc] sm:$0xff]
  %v2696 = vld [vmem:[%s7 + $0x104] sm:$0xff]
  %v2697 = vld [vmem:[%s7 + $0x10c] sm:$0xff]
  %v2698 = vld [vmem:[%s7 + $0x114] sm:$0xf]
  %v2699 = vld [vmem:[%s7 + $0x118] sm:$0xff]
  %v2700 = vld [vmem:[%s7 + $0x120] sm:$0xff]
  %v2701 = vld [vmem:[%s7 + $0x128] sm:$0xff]
  %v2702 = vld [vmem:[%s7 + $0x130] sm:$0xf]
  %v2703 = vld [vmem:[%s7 + $0x134] sm:$0xff]
  %v2704 = vld [vmem:[%s7 + $0x13c] sm:$0xff]
  %v2705 = vld [vmem:[%s7 + $0x144] sm:$0xff]
  %v2706 = vld [vmem:[%s7 + $0x14c] sm:$0xf]
  %v2707 = vld [vmem:[%s7 + $0x150] sm:$0xff]
  %v2708 = vld [vmem:[%s7 + $0x158] sm:$0xff]
  %v2709 = vld [vmem:[%s7 + $0x160] sm:$0xff]
  %v2710 = vld [vmem:[%s7 + $0x168] sm:$0xf]
  %v2711 = vld [vmem:[%s7 + $0x16c] sm:$0xff]
  %v2712 = vld [vmem:[%s7 + $0x174] sm:$0xff]
  %v2713 = vld [vmem:[%s7 + $0x17c] sm:$0xff]
  %v2714 = vld [vmem:[%s7 + $0x184] sm:$0xf]
  %v2715 = vld [vmem:[%s7 + $0x188] sm:$0xff]
  %v2716 = vld [vmem:[%s7 + $0x190] sm:$0xff]
  %v2717 = vld [vmem:[%s7 + $0x198] sm:$0xff]
  %v2718 = vld [vmem:[%s7 + $0x1a0] sm:$0xf]
  %v2719 = vld [vmem:[%s7 + $0x1a4] sm:$0xff]
  %v2720 = vld [vmem:[%s7 + $0x1ac] sm:$0xff]
  %v2721 = vld [vmem:[%s7 + $0x1b4] sm:$0xff]
  %v2722 = vld [vmem:[%s7 + $0x1bc] sm:$0xf]
  %v2723 = vld [vmem:[%s7 + $0x1c0] sm:$0xff]
  %v2724 = vld [vmem:[%s7 + $0x1c8] sm:$0xff]
  %v2725 = vld [vmem:[%s7 + $0x1d0] sm:$0xff]
  %v2726 = vld [vmem:[%s7 + $0x1d8] sm:$0xf]
  %v2727 = vld [vmem:[%s7 + $0x1dc] sm:$0xff]
  %v2728 = vld [vmem:[%s7 + $0x1e4] sm:$0xff]
  %v2729 = vld [vmem:[%s7 + $0x1ec] sm:$0xff]
  %v2730 = vld [vmem:[%s7 + $0x1f4] sm:$0xf]
  %v2731 = vld [vmem:[%s7 + $0x1f8] sm:$0xff]
  %v2732 = vld [vmem:[%s7 + $0x200] sm:$0xff]
  %v2733 = vld [vmem:[%s7 + $0x208] sm:$0xff]
  %v2734 = vld [vmem:[%s7 + $0x210] sm:$0xf]
  %v2735 = vld [vmem:[%s7 + $0x214] sm:$0xff]
  %v2736 = vld [vmem:[%s7 + $0x21c] sm:$0xff]
  %v2737 = vld [vmem:[%s7 + $0x224] sm:$0xff]
  %v2738 = vld [vmem:[%s7 + $0x22c] sm:$0xf]
  %v2739 = vld [vmem:[%s7 + $0x230] sm:$0xff]
  %v2740 = vld [vmem:[%s7 + $0x238] sm:$0xff]
  %v2741 = vld [vmem:[%s7 + $0x240] sm:$0xff]
  %v2742 = vld [vmem:[%s7 + $0x248] sm:$0xf]
  %v2743 = vld [vmem:[%s7 + $0x24c] sm:$0xff]
  %v2744 = vld [vmem:[%s7 + $0x254] sm:$0xff]
  %v2745 = vld [vmem:[%s7 + $0x25c] sm:$0xff]
  %v2746 = vld [vmem:[%s7 + $0x264] sm:$0xf]
  %v2747 = vld [vmem:[%s7 + $0x268] sm:$0xff]
  %v2748 = vld [vmem:[%s7 + $0x270] sm:$0xff]
  %v2749 = vld [vmem:[%s7 + $0x278] sm:$0xff]
  %v2750 = vld [vmem:[%s7 + $0x280] sm:$0xf]
  %v2751 = vld [vmem:[%s7 + $0x284] sm:$0xff]
  %v2752 = vld [vmem:[%s7 + $0x28c] sm:$0xff]
  %v2753 = vld [vmem:[%s7 + $0x294] sm:$0xff]
  %v2754 = vld [vmem:[%s7 + $0x29c] sm:$0xf]
  %v2755 = vld [vmem:[%s7 + $0x2a0] sm:$0xff]
  %v2756 = vld [vmem:[%s7 + $0x2a8] sm:$0xff]
  %v2757 = vld [vmem:[%s7 + $0x2b0] sm:$0xff]
  %v2758 = vld [vmem:[%s7 + $0x2b8] sm:$0xf]
  %v2759 = vld [vmem:[%s7 + $0x2bc] sm:$0xff]
  %v2760 = vld [vmem:[%s7 + $0x2c4] sm:$0xff]
  %v2761 = vld [vmem:[%s7 + $0x2cc] sm:$0xff]
  %v2762 = vld [vmem:[%s7 + $0x2d4] sm:$0xf]
  %v2763 = vld [vmem:[%s7 + $0x2d8] sm:$0xff]
  %v2764 = vld [vmem:[%s7 + $0x2e0] sm:$0xff]
  %v2765 = vld [vmem:[%s7 + $0x2e8] sm:$0xff]
  %v2766 = vld [vmem:[%s7 + $0x2f0] sm:$0xf]
  %v2767 = vld [vmem:[%s7 + $0x2f4] sm:$0xff]
  %v2768 = vld [vmem:[%s7 + $0x2fc] sm:$0xff]
  %v2769 = vld [vmem:[%s7 + $0x304] sm:$0xff]
  %v2770 = vld [vmem:[%s7 + $0x30c] sm:$0xf]
  %v2771 = vld [vmem:[%s7 + $0x310] sm:$0xff]
  %v2772 = vld [vmem:[%s7 + $0x318] sm:$0xff]
  %v2773 = vld [vmem:[%s7 + $0x320] sm:$0xff]
  %v2774 = vld [vmem:[%s7 + $0x328] sm:$0xf]
  %v2775 = vld [vmem:[%s7 + $0x32c] sm:$0xff]
  %v2776 = vld [vmem:[%s7 + $0x334] sm:$0xff]
  %v2777 = vld [vmem:[%s7 + $0x33c] sm:$0xff]
  %v2778 = vld [vmem:[%s7 + $0x344] sm:$0xf]
  %v2779 = vld [vmem:[%s7 + $0x348] sm:$0xff]
  %v2780 = vld [vmem:[%s7 + $0x350] sm:$0xff]
  %v2781 = vld [vmem:[%s7 + $0x358] sm:$0xff]
  %v2782 = vld [vmem:[%s7 + $0x360] sm:$0xf]
  %v2783 = vld [vmem:[%s7 + $0x364] sm:$0xff]
  %v2784 = vld [vmem:[%s7 + $0x36c] sm:$0xff]
  %v2785 = vld [vmem:[%s7 + $0x374] sm:$0xff]
  %v2786 = vld [vmem:[%s7 + $0x37c] sm:$0xf]
  %v2787 = vld [vmem:[%s7 + $0x380] sm:$0xff]
  %v2788 = vld [vmem:[%s7 + $0x388] sm:$0xff]
  %v2789 = vld [vmem:[%s7 + $0x390] sm:$0xff]
  %v2790 = vld [vmem:[%s7 + $0x398] sm:$0xf]
  %v2791 = vld [vmem:[%s7 + $0x39c] sm:$0xff]
  %v2792 = vld [vmem:[%s7 + $0x3a4] sm:$0xff]
  %v2793 = vld [vmem:[%s7 + $0x3ac] sm:$0xff]
  %v2794 = vld [vmem:[%s7 + $0x3b4] sm:$0xf]
  %v2795 = vld [vmem:[%s7 + $0x3b8] sm:$0xff]
  %v2796 = vld [vmem:[%s7 + $0x3c0] sm:$0xff]
  %v2797 = vld [vmem:[%s7 + $0x3c8] sm:$0xff]
  %v2798 = vld [vmem:[%s7 + $0x3d0] sm:$0xf]
  %v2799 = vld [vmem:[%s7 + $0x3d4] sm:$0xff]
  %v2800 = vld [vmem:[%s7 + $0x3dc] sm:$0xff]
  %v2801 = vld [vmem:[%s7 + $0x3e4] sm:$0xff]
  %v2802 = vld [vmem:[%s7 + $0x3ec] sm:$0xf]
  %v2803 = vld [vmem:[%s7 + $0x3f0] sm:$0xff]
  %v2804 = vld [vmem:[%s7 + $0x3f8] sm:$0xff]
  %v2805 = vld [vmem:[%s7 + $0x400] sm:$0xff]
  %v2806 = vld [vmem:[%s7 + $0x408] sm:$0xf]
  %v2807 = vld [vmem:[%s7 + $0x40c] sm:$0xff]
  %v2808 = vld [vmem:[%s7 + $0x414] sm:$0xff]
  %v2809 = vld [vmem:[%s7 + $0x41c] sm:$0xff]
  %v2810 = vld [vmem:[%s7 + $0x424] sm:$0xf]
  %v2811 = vld [vmem:[%s7 + $0x428] sm:$0xff]
  %v2812 = vld [vmem:[%s7 + $0x430] sm:$0xff]
  %v2813 = vld [vmem:[%s7 + $0x438] sm:$0xff]
  %v2814 = vld [vmem:[%s7 + $0x440] sm:$0xf]
  %v2815 = vld [vmem:[%s7 + $0x444] sm:$0xff]
  %v2816 = vld [vmem:[%s7 + $0x44c] sm:$0xff]
  %v2817 = vld [vmem:[%s7 + $0x454] sm:$0xff]
  %v2818 = vld [vmem:[%s7 + $0x45c] sm:$0xf]
  %v2819 = vld [vmem:[%s7 + $0x460] sm:$0xff]
  %v2820 = vld [vmem:[%s7 + $0x468] sm:$0xff]
  %v2821 = vld [vmem:[%s7 + $0x470] sm:$0xff]
  %v2822 = vld [vmem:[%s7 + $0x478] sm:$0xf]
  %v2823 = vld [vmem:[%s7 + $0x47c] sm:$0xff]
  %v2824 = vld [vmem:[%s7 + $0x484] sm:$0xff]
  %v2825 = vld [vmem:[%s7 + $0x48c] sm:$0xff]
  %v2826 = vld [vmem:[%s7 + $0x494] sm:$0xf]
  %v2827 = vld [vmem:[%s7 + $0x498] sm:$0xff]
  %v2828 = vld [vmem:[%s7 + $0x4a0] sm:$0xff]
  %v2829 = vld [vmem:[%s7 + $0x4a8] sm:$0xff]
  %v2830 = vld [vmem:[%s7 + $0x4b0] sm:$0xf]
  %v2831 = vld [vmem:[%s7 + $0x4b4] sm:$0xff]
  %v2832 = vld [vmem:[%s7 + $0x4bc] sm:$0xff]
  %v2833 = vld [vmem:[%s7 + $0x4c4] sm:$0xff]
  %v2834 = vld [vmem:[%s7 + $0x4cc] sm:$0xf]
  %v2835 = vld [vmem:[%s7 + $0x4d0] sm:$0xff]
  %v2836 = vld [vmem:[%s7 + $0x4d8] sm:$0xff]
  %v2837 = vld [vmem:[%s7 + $0x4e0] sm:$0xff]
  %v2838 = vld [vmem:[%s7 + $0x4e8] sm:$0xf]
  %v2839 = vld [vmem:[%s7 + $0x4ec] sm:$0xff]
  %v2840 = vld [vmem:[%s7 + $0x4f4] sm:$0xff]
  %v2841 = vld [vmem:[%s7 + $0x4fc] sm:$0xff]
  %v2842 = vld [vmem:[%s7 + $0x504] sm:$0xf]
  %v2843 = vld [vmem:[%s7 + $0x508] sm:$0xff]
  %v2844 = vld [vmem:[%s7 + $0x510] sm:$0xff]
  %v2845 = vld [vmem:[%s7 + $0x518] sm:$0xff]
  %v2846 = vld [vmem:[%s7 + $0x520] sm:$0xf]
  %v2847 = vld [vmem:[%s7 + $0x524] sm:$0xff]
  %v2848 = vld [vmem:[%s7 + $0x52c] sm:$0xff]
  %v2849 = vld [vmem:[%s7 + $0x534] sm:$0xff]
  %v2850 = vld [vmem:[%s7 + $0x53c] sm:$0xf]
  %v2851 = vld [vmem:[%s7 + $0x540] sm:$0xff]
  %v2852 = vld [vmem:[%s7 + $0x548] sm:$0xff]
  %v2853 = vld [vmem:[%s7 + $0x550] sm:$0xff]
  %v2854 = vld [vmem:[%s7 + $0x558] sm:$0xf]
  %v2855 = vld [vmem:[%s7 + $0x55c] sm:$0xff]
  %v2856 = vld [vmem:[%s7 + $0x564] sm:$0xff]
  %v2857 = vld [vmem:[%s7 + $0x56c] sm:$0xff]
  %v2858 = vld [vmem:[%s7 + $0x574] sm:$0xf]
  %v2859 = vld [vmem:[%s7 + $0x578] sm:$0xff]
  %v2860 = vld [vmem:[%s7 + $0x580] sm:$0xff]
  %v2861 = vld [vmem:[%s7 + $0x588] sm:$0xff]
  %v2862 = vld [vmem:[%s7 + $0x590] sm:$0xf]
  %v2863 = vld [vmem:[%s7 + $0x594] sm:$0xff]
  %v2864 = vld [vmem:[%s7 + $0x59c] sm:$0xff]
  %v2865 = vld [vmem:[%s7 + $0x5a4] sm:$0xff]
  %v2866 = vld [vmem:[%s7 + $0x5ac] sm:$0xf]
  %v2867 = vld [vmem:[%s7 + $0x5b0] sm:$0xff]
  %v2868 = vld [vmem:[%s7 + $0x5b8] sm:$0xff]
  %v2869 = vld [vmem:[%s7 + $0x5c0] sm:$0xff]
  %v2870 = vld [vmem:[%s7 + $0x5c8] sm:$0xf]
  %v2871 = vld [vmem:[%s7 + $0x5cc] sm:$0xff]
  %v2872 = vld [vmem:[%s7 + $0x5d4] sm:$0xff]
  %v2873 = vld [vmem:[%s7 + $0x5dc] sm:$0xff]
  %v2874 = vld [vmem:[%s7 + $0x5e4] sm:$0xf]
  %v2875 = vld [vmem:[%s7 + $0x5e8] sm:$0xff]
  %v2876 = vld [vmem:[%s7 + $0x5f0] sm:$0xff]
  %v2877 = vld [vmem:[%s7 + $0x5f8] sm:$0xff]
  %v2878 = vld [vmem:[%s7 + $0x600] sm:$0xf]
  %v2879 = vld [vmem:[%s7 + $0x604] sm:$0xff]
  %v2880 = vld [vmem:[%s7 + $0x60c] sm:$0xff]
  %v2881 = vld [vmem:[%s7 + $0x614] sm:$0xff]
  %v2882 = vld [vmem:[%s7 + $0x61c] sm:$0xf]
  %v2883 = vld [vmem:[%s7 + $0x620] sm:$0xff]
  %v2884 = vld [vmem:[%s7 + $0x628] sm:$0xff]
  %v2885 = vld [vmem:[%s7 + $0x630] sm:$0xff]
  %v2886 = vld [vmem:[%s7 + $0x638] sm:$0xf]
  %v2887 = vld [vmem:[%s7 + $0x63c] sm:$0xff]
  %v2888 = vld [vmem:[%s7 + $0x644] sm:$0xff]
  %v2889 = vld [vmem:[%s7 + $0x64c] sm:$0xff]
  %v2890 = vld [vmem:[%s7 + $0x654] sm:$0xf]
  %v2891 = vld [vmem:[%s7 + $0x658] sm:$0xff]
  %v2892 = vld [vmem:[%s7 + $0x660] sm:$0xff]
  %v2893 = vld [vmem:[%s7 + $0x668] sm:$0xff]
  %v2894 = vld [vmem:[%s7 + $0x670] sm:$0xf]
  %v2895 = vld [vmem:[%s7 + $0x674] sm:$0xff]
  %v2896 = vld [vmem:[%s7 + $0x67c] sm:$0xff]
  %v2897 = vld [vmem:[%s7 + $0x684] sm:$0xff]
  %v2898 = vld [vmem:[%s7 + $0x68c] sm:$0xf]
  %v2899 = vld [vmem:[%s7 + $0x690] sm:$0xff]
  %v2900 = vld [vmem:[%s7 + $0x698] sm:$0xff]
  %v2901 = vld [vmem:[%s7 + $0x6a0] sm:$0xff]
  %v2902 = vld [vmem:[%s7 + $0x6a8] sm:$0xf]
  %v2903 = vld [vmem:[%s7 + $0x6ac] sm:$0xff]
  %v2904 = vld [vmem:[%s7 + $0x6b4] sm:$0xff]
  %v2905 = vld [vmem:[%s7 + $0x6bc] sm:$0xff]
  %v2906 = vld [vmem:[%s7 + $0x6c4] sm:$0xf]
  %v2907 = vld [vmem:[%s7 + $0x6c8] sm:$0xff]
  %v2908 = vld [vmem:[%s7 + $0x6d0] sm:$0xff]
  %v2909 = vld [vmem:[%s7 + $0x6d8] sm:$0xff]
  %v2910 = vld [vmem:[%s7 + $0x6e0] sm:$0xf]
  %v2911 = vld [vmem:[%s7 + $0x6e4] sm:$0xff]
  %v2912 = vld [vmem:[%s7 + $0x6ec] sm:$0xff]
  %v2913 = vld [vmem:[%s7 + $0x6f4] sm:$0xff]
  %v2914 = vld [vmem:[%s7 + $0x6fc] sm:$0xf]
  %v2915 = vld [vmem:[%s7 + $0x700] sm:$0xff]
  %v2916 = vld [vmem:[%s7 + $0x708] sm:$0xff]
  %v2917 = vld [vmem:[%s7 + $0x710] sm:$0xff]
  %v2918 = vld [vmem:[%s7 + $0x718] sm:$0xf]
  %v2919 = vld [vmem:[%s7 + $0x71c] sm:$0xff]
  %v2920 = vld [vmem:[%s7 + $0x724] sm:$0xff]
  %v2921 = vld [vmem:[%s7 + $0x72c] sm:$0xff]
  %v2922 = vld [vmem:[%s7 + $0x734] sm:$0xf]
  %v2923 = vld [vmem:[%s7 + $0x738] sm:$0xff]
  %v2924 = vld [vmem:[%s7 + $0x740] sm:$0xff]
  %v2925 = vld [vmem:[%s7 + $0x748] sm:$0xff]
  %v2926 = vld [vmem:[%s7 + $0x750] sm:$0xf]
  %v2927 = vld [vmem:[%s7 + $0x754] sm:$0xff]
  %v2928 = vld [vmem:[%s7 + $0x75c] sm:$0xff]
  %v2929 = vld [vmem:[%s7 + $0x764] sm:$0xff]
  %v2930 = vld [vmem:[%s7 + $0x76c] sm:$0xf]
  %v2931 = vld [vmem:[%s7 + $0x770] sm:$0xff]
  %v2932 = vld [vmem:[%s7 + $0x778] sm:$0xff]
  %v2933 = vld [vmem:[%s7 + $0x780] sm:$0xff]
  %v2934 = vld [vmem:[%s7 + $0x788] sm:$0xf]
  %v2935 = vld [vmem:[%s7 + $0x78c] sm:$0xff]
  %v2936 = vld [vmem:[%s7 + $0x794] sm:$0xff]
  %v2937 = vld [vmem:[%s7 + $0x79c] sm:$0xff]
  %v2938 = vld [vmem:[%s7 + $0x7a4] sm:$0xf]
  %v2939 = vld [vmem:[%s7 + $0x7a8] sm:$0xff]
  %v2940 = vld [vmem:[%s7 + $0x7b0] sm:$0xff]
  %v2941 = vld [vmem:[%s7 + $0x7b8] sm:$0xff]
  %v2942 = vld [vmem:[%s7 + $0x7c0] sm:$0xf]
  %v2943 = vld [vmem:[%s7 + $0x7c4] sm:$0xff]
  %v2944 = vld [vmem:[%s7 + $0x7cc] sm:$0xff]
  %v2945 = vld [vmem:[%s7 + $0x7d4] sm:$0xff]
  %v2946 = vld [vmem:[%s7 + $0x7dc] sm:$0xf]
  %v2947 = vld [vmem:[%s7 + $0x7e0] sm:$0xff]
  %v2948 = vld [vmem:[%s7 + $0x7e8] sm:$0xff]
  %v2949 = vld [vmem:[%s7 + $0x7f0] sm:$0xff]
  %v2950 = vld [vmem:[%s7 + $0x7f8] sm:$0xf]
  %v2951 = vld [vmem:[%s7 + $0x7fc] sm:$0xff]
  %v2952 = vld [vmem:[%s7 + $0x804] sm:$0xff]
  %v2953 = vld [vmem:[%s7 + $0x80c] sm:$0xff]
  %v2954 = vld [vmem:[%s7 + $0x814] sm:$0xf]
  %v2955 = vld [vmem:[%s7 + $0x818] sm:$0xff]
  %v2956 = vld [vmem:[%s7 + $0x820] sm:$0xff]
  %v2957 = vld [vmem:[%s7 + $0x828] sm:$0xff]
  %v2958 = vld [vmem:[%s7 + $0x830] sm:$0xf]
  %v2959 = vld [vmem:[%s7 + $0x834] sm:$0xff]
  %v2960 = vld [vmem:[%s7 + $0x83c] sm:$0xff]
  %v2961 = vld [vmem:[%s7 + $0x844] sm:$0xff]
  %v2962 = vld [vmem:[%s7 + $0x84c] sm:$0xf]
  %v2963 = vld [vmem:[%s7 + $0x850] sm:$0xff]
  %v2964 = vld [vmem:[%s7 + $0x858] sm:$0xff]
  %v2965 = vld [vmem:[%s7 + $0x860] sm:$0xff]
  %v2966 = vld [vmem:[%s7 + $0x868] sm:$0xf]
  %v2967 = vld [vmem:[%s7 + $0x86c] sm:$0xff]
  %v2968 = vld [vmem:[%s7 + $0x874] sm:$0xff]
  %v2969 = vld [vmem:[%s7 + $0x87c] sm:$0xff]
  %v2970 = vld [vmem:[%s7 + $0x884] sm:$0xf]
  %v2971 = vld [vmem:[%s7 + $0x888] sm:$0xff]
  %v2972 = vld [vmem:[%s7 + $0x890] sm:$0xff]
  %v2973 = vld [vmem:[%s7 + $0x898] sm:$0xff]
  %v2974 = vld [vmem:[%s7 + $0x8a0] sm:$0xf]
  %v2975 = vld [vmem:[%s7 + $0x8a4] sm:$0xff]
  %v2976 = vld [vmem:[%s7 + $0x8ac] sm:$0xff]
  %v2977 = vld [vmem:[%s7 + $0x8b4] sm:$0xff]
  %v2978 = vld [vmem:[%s7 + $0x8bc] sm:$0xf]
  %v2979 = vld [vmem:[%s7 + $0x8c0] sm:$0xff]
  %v2980 = vld [vmem:[%s7 + $0x8c8] sm:$0xff]
  %v2981 = vld [vmem:[%s7 + $0x8d0] sm:$0xff]
  %v2982 = vld [vmem:[%s7 + $0x8d8] sm:$0xf]
  %v2983 = vld [vmem:[%s7 + $0x8dc] sm:$0xff]
  %v2984 = vld [vmem:[%s7 + $0x8e4] sm:$0xff]
  %v2985 = vld [vmem:[%s7 + $0x8ec] sm:$0xff]
  %v2986 = vld [vmem:[%s7 + $0x8f4] sm:$0xf]
  %v2987 = vld [vmem:[%s7 + $0x8f8] sm:$0xff]
  %v2988 = vld [vmem:[%s7 + $0x900] sm:$0xff]
  %v2989 = vld [vmem:[%s7 + $0x908] sm:$0xff]
  %v2990 = vld [vmem:[%s7 + $0x910] sm:$0xf]
  %v2991 = vld [vmem:[%s7 + $0x914] sm:$0xff]
  %v2992 = vld [vmem:[%s7 + $0x91c] sm:$0xff]
  %v2993 = vld [vmem:[%s7 + $0x924] sm:$0xff]
  %v2994 = vld [vmem:[%s7 + $0x92c] sm:$0xf]
  %v2995 = vld [vmem:[%s7 + $0x930] sm:$0xff]
  %v2996 = vld [vmem:[%s7 + $0x938] sm:$0xff]
  %v2997 = vld [vmem:[%s7 + $0x940] sm:$0xff]
  %v2998 = vld [vmem:[%s7 + $0x948] sm:$0xf]
  %v2999 = vld [vmem:[%s7 + $0x94c] sm:$0xff]
  %v3000 = vld [vmem:[%s7 + $0x954] sm:$0xff]
  %v3001 = vld [vmem:[%s7 + $0x95c] sm:$0xff]
  %v3002 = vld [vmem:[%s7 + $0x964] sm:$0xf]
  %v3003 = vld [vmem:[%s7 + $0x968] sm:$0xff]
  %v3004 = vld [vmem:[%s7 + $0x970] sm:$0xff]
  %v3005 = vld [vmem:[%s7 + $0x978] sm:$0xff]
  %v3006 = vld [vmem:[%s7 + $0x980] sm:$0xf]
  %v3007 = vld [vmem:[%s7 + $0x984] sm:$0xff]
  %v3008 = vld [vmem:[%s7 + $0x98c] sm:$0xff]
  %v3009 = vld [vmem:[%s7 + $0x994] sm:$0xff]
  %v3010 = vld [vmem:[%s7 + $0x99c] sm:$0xf]
  %v3011 = vld [vmem:[%s7 + $0x9a0] sm:$0xff]
  %v3012 = vld [vmem:[%s7 + $0x9a8] sm:$0xff]
  %v3013 = vld [vmem:[%s7 + $0x9b0] sm:$0xff]
  %v3014 = vld [vmem:[%s7 + $0x9b8] sm:$0xf]
  %v3015 = vld [vmem:[%s7 + $0x9bc] sm:$0xff]
  %v3016 = vld [vmem:[%s7 + $0x9c4] sm:$0xff]
  %v3017 = vld [vmem:[%s7 + $0x9cc] sm:$0xff]
  %v3018 = vld [vmem:[%s7 + $0x9d4] sm:$0xf]
  %v3019 = vld [vmem:[%s7 + $0x9d8] sm:$0xff]
  %v3020 = vld [vmem:[%s7 + $0x9e0] sm:$0xff]
  %v3021 = vld [vmem:[%s7 + $0x9e8] sm:$0xff]
  %v3022 = vld [vmem:[%s7 + $0x9f0] sm:$0xf]
  %v3023 = vld [vmem:[%s7 + $0x9f4] sm:$0xff]
  %v3024 = vld [vmem:[%s7 + $0x9fc] sm:$0xff]
  %v3025 = vld [vmem:[%s7 + $0xa04] sm:$0xff]
  %v3026 = vld [vmem:[%s7 + $0xa0c] sm:$0xf]
  %v3027 = vld [vmem:[%s7 + $0xa10] sm:$0xff]
  %v3028 = vld [vmem:[%s7 + $0xa18] sm:$0xff]
  %v3029 = vld [vmem:[%s7 + $0xa20] sm:$0xff]
  %v3030 = vld [vmem:[%s7 + $0xa28] sm:$0xf]
  %v3031 = vld [vmem:[%s7 + $0xa2c] sm:$0xff]
  %v3032 = vld [vmem:[%s7 + $0xa34] sm:$0xff]
  %v3033 = vld [vmem:[%s7 + $0xa3c] sm:$0xff]
  %v3034 = vld [vmem:[%s7 + $0xa44] sm:$0xf]
  %v3035 = vld [vmem:[%s7 + $0xa48] sm:$0xff]
  %v3036 = vld [vmem:[%s7 + $0xa50] sm:$0xff]
  %v3037 = vld [vmem:[%s7 + $0xa58] sm:$0xff]
  %v3038 = vld [vmem:[%s7 + $0xa60] sm:$0xf]
  %v3039 = vld [vmem:[%s7 + $0xa64] sm:$0xff]
  %v3040 = vld [vmem:[%s7 + $0xa6c] sm:$0xff]
  %v3041 = vld [vmem:[%s7 + $0xa74] sm:$0xff]
  %v3042 = vld [vmem:[%s7 + $0xa7c] sm:$0xf]
  %v3043 = vld [vmem:[%s7 + $0xa80] sm:$0xff]
  %v3044 = vld [vmem:[%s7 + $0xa88] sm:$0xff]
  %v3045 = vld [vmem:[%s7 + $0xa90] sm:$0xff]
  %v3046 = vld [vmem:[%s7 + $0xa98] sm:$0xf]
  %v3047 = vld [vmem:[%s7 + $0xa9c] sm:$0xff]
  %v3048 = vld [vmem:[%s7 + $0xaa4] sm:$0xff]
  %v3049 = vld [vmem:[%s7 + $0xaac] sm:$0xff]
  %v3050 = vld [vmem:[%s7 + $0xab4] sm:$0xf]
  %v3051 = vld [vmem:[%s7 + $0xab8] sm:$0xff]
  %v3052 = vld [vmem:[%s7 + $0xac0] sm:$0xff]
  %v3053 = vld [vmem:[%s7 + $0xac8] sm:$0xff]
  %v3054 = vld [vmem:[%s7 + $0xad0] sm:$0xf]
  %v3055 = vld [vmem:[%s7 + $0xad4] sm:$0xff]
  %v3056 = vld [vmem:[%s7 + $0xadc] sm:$0xff]
  %v3057 = vld [vmem:[%s7 + $0xae4] sm:$0xff]
  %v3058 = vld [vmem:[%s7 + $0xaec] sm:$0xf]
  %v3059 = vld [vmem:[%s7 + $0xaf0] sm:$0xff]
  %v3060 = vld [vmem:[%s7 + $0xaf8] sm:$0xff]
  %v3061 = vld [vmem:[%s7 + $0xb00] sm:$0xff]
  %v3062 = vld [vmem:[%s7 + $0xb08] sm:$0xf]
  %v3063 = vld [vmem:[%s7 + $0xb0c] sm:$0xff]
  %v3064 = vld [vmem:[%s7 + $0xb14] sm:$0xff]
  %v3065 = vld [vmem:[%s7 + $0xb1c] sm:$0xff]
  %v3066 = vld [vmem:[%s7 + $0xb24] sm:$0xf]
  %v3067 = vld [vmem:[%s7 + $0xb28] sm:$0xff]
  %v3068 = vld [vmem:[%s7 + $0xb30] sm:$0xff]
  %v3069 = vld [vmem:[%s7 + $0xb38] sm:$0xff]
  %v3070 = vld [vmem:[%s7 + $0xb40] sm:$0xf]
  %v3071 = vld [vmem:[%s7 + $0xb44] sm:$0xff]
  %v3072 = vld [vmem:[%s7 + $0xb4c] sm:$0xff]
  %v3073 = vld [vmem:[%s7 + $0xb54] sm:$0xff]
  %v3074 = vld [vmem:[%s7 + $0xb5c] sm:$0xf]
  %v3075 = vld [vmem:[%s7 + $0xb60] sm:$0xff]
  %v3076 = vld [vmem:[%s7 + $0xb68] sm:$0xff]
  %v3077 = vld [vmem:[%s7 + $0xb70] sm:$0xff]
  %v3078 = vld [vmem:[%s7 + $0xb78] sm:$0xf]
  %v3079 = vld [vmem:[%s7 + $0xb7c] sm:$0xff]
  %v3080 = vld [vmem:[%s7 + $0xb84] sm:$0xff]
  %v3081 = vld [vmem:[%s7 + $0xb8c] sm:$0xff]
  %v3082 = vld [vmem:[%s7 + $0xb94] sm:$0xf]
  %v3083 = vld [vmem:[%s7 + $0xb98] sm:$0xff]
  %v3084 = vld [vmem:[%s7 + $0xba0] sm:$0xff]
  %v3085 = vld [vmem:[%s7 + $0xba8] sm:$0xff]
  %v3086 = vld [vmem:[%s7 + $0xbb0] sm:$0xf]
  %v3087 = vld [vmem:[%s7 + $0xbb4] sm:$0xff]
  %v3088 = vld [vmem:[%s7 + $0xbbc] sm:$0xff]
  %v3089 = vld [vmem:[%s7 + $0xbc4] sm:$0xff]
  %v3090 = vld [vmem:[%s7 + $0xbcc] sm:$0xf]
  %v3091 = vld [vmem:[%s7 + $0xbd0] sm:$0xff]
  %v3092 = vld [vmem:[%s7 + $0xbd8] sm:$0xff]
  %v3093 = vld [vmem:[%s7 + $0xbe0] sm:$0xff]
  %v3094 = vld [vmem:[%s7 + $0xbe8] sm:$0xf]
  %v3095 = vld [vmem:[%s7 + $0xbec] sm:$0xff]
  %v3096 = vld [vmem:[%s7 + $0xbf4] sm:$0xff]
  %v3097 = vld [vmem:[%s7 + $0xbfc] sm:$0xff]
  %v3098 = vld [vmem:[%s7 + $0xc04] sm:$0xf]
  %v3099 = vld [vmem:[%s7 + $0xc08] sm:$0xff]
  %v3100 = vld [vmem:[%s7 + $0xc10] sm:$0xff]
  %v3101 = vld [vmem:[%s7 + $0xc18] sm:$0xff]
  %v3102 = vld [vmem:[%s7 + $0xc20] sm:$0xf]
  %v3103 = vld [vmem:[%s7 + $0xc24] sm:$0xff]
  %v3104 = vld [vmem:[%s7 + $0xc2c] sm:$0xff]
  %v3105 = vld [vmem:[%s7 + $0xc34] sm:$0xff]
  %v3106 = vld [vmem:[%s7 + $0xc3c] sm:$0xf]
  %v3107 = vld [vmem:[%s7 + $0xc40] sm:$0xff]
  %v3108 = vld [vmem:[%s7 + $0xc48] sm:$0xff]
  %v3109 = vld [vmem:[%s7 + $0xc50] sm:$0xff]
  %v3110 = vld [vmem:[%s7 + $0xc58] sm:$0xf]
  %v3111 = vld [vmem:[%s7 + $0xc5c] sm:$0xff]
  %v3112 = vld [vmem:[%s7 + $0xc64] sm:$0xff]
  %v3113 = vld [vmem:[%s7 + $0xc6c] sm:$0xff]
  %v3114 = vld [vmem:[%s7 + $0xc74] sm:$0xf]
  %v3115 = vld [vmem:[%s7 + $0xc78] sm:$0xff]
  %v3116 = vld [vmem:[%s7 + $0xc80] sm:$0xff]
  %v3117 = vld [vmem:[%s7 + $0xc88] sm:$0xff]
  %v3118 = vld [vmem:[%s7 + $0xc90] sm:$0xf]
  %v3119 = vld [vmem:[%s7 + $0xc94] sm:$0xff]
  %v3120 = vld [vmem:[%s7 + $0xc9c] sm:$0xff]
  %v3121 = vld [vmem:[%s7 + $0xca4] sm:$0xff]
  %v3122 = vld [vmem:[%s7 + $0xcac] sm:$0xf]
  %v3123 = vld [vmem:[%s7 + $0xcb0] sm:$0xff]
  %v3124 = vld [vmem:[%s7 + $0xcb8] sm:$0xff]
  %v3125 = vld [vmem:[%s7 + $0xcc0] sm:$0xff]
  %v3126 = vld [vmem:[%s7 + $0xcc8] sm:$0xf]
  %v3127 = vld [vmem:[%s7 + $0xccc] sm:$0xff]
  %v3128 = vld [vmem:[%s7 + $0xcd4] sm:$0xff]
  %v3129 = vld [vmem:[%s7 + $0xcdc] sm:$0xff]
  %v3130 = vld [vmem:[%s7 + $0xce4] sm:$0xf]
  %v3131 = vld [vmem:[%s7 + $0xce8] sm:$0xff]
  %v3132 = vld [vmem:[%s7 + $0xcf0] sm:$0xff]
  %v3133 = vld [vmem:[%s7 + $0xcf8] sm:$0xff]
  %v3134 = vld [vmem:[%s7 + $0xd00] sm:$0xf]
  %v3135 = vld [vmem:[%s7 + $0xd04] sm:$0xff]
  %v3136 = vld [vmem:[%s7 + $0xd0c] sm:$0xff]
  %v3137 = vld [vmem:[%s7 + $0xd14] sm:$0xff]
  %v3138 = vld [vmem:[%s7 + $0xd1c] sm:$0xf]
  %v3139 = vld [vmem:[%s7 + $0xd20] sm:$0xff]
  %v3140 = vld [vmem:[%s7 + $0xd28] sm:$0xff]
  %v3141 = vld [vmem:[%s7 + $0xd30] sm:$0xff]
  %v3142 = vld [vmem:[%s7 + $0xd38] sm:$0xf]
  %v3143 = vld [vmem:[%s7 + $0xd3c] sm:$0xff]
  %v3144 = vld [vmem:[%s7 + $0xd44] sm:$0xff]
  %v3145 = vld [vmem:[%s7 + $0xd4c] sm:$0xff]
  %v3146 = vld [vmem:[%s7 + $0xd54] sm:$0xf]
  %v3147 = vld [vmem:[%s7 + $0xd58] sm:$0xff]
  %v3148 = vld [vmem:[%s7 + $0xd60] sm:$0xff]
  %v3149 = vld [vmem:[%s7 + $0xd68] sm:$0xff]
  %v3150 = vld [vmem:[%s7 + $0xd70] sm:$0xf]
  %v3151 = vld [vmem:[%s7 + $0xd74] sm:$0xff]
  %v3152 = vld [vmem:[%s7 + $0xd7c] sm:$0xff]
  %v3153 = vld [vmem:[%s7 + $0xd84] sm:$0xff]
  %v3154 = vld [vmem:[%s7 + $0xd8c] sm:$0xf]
  %v3155 = vld [vmem:[%s7 + $0xd90] sm:$0xff]
  %v3156 = vld [vmem:[%s7 + $0xd98] sm:$0xff]
  %v3157 = vld [vmem:[%s7 + $0xda0] sm:$0xff]
  %v3158 = vld [vmem:[%s7 + $0xda8] sm:$0xf]
  %v3159 = vld [vmem:[%s7 + $0xdac] sm:$0xff]
  %v3160 = vld [vmem:[%s7 + $0xdb4] sm:$0xff]
  %v3161 = vld [vmem:[%s7 + $0xdbc] sm:$0xff]
  %v3162 = vld [vmem:[%s7 + $0xdc4] sm:$0xf]
  %v3163 = vld [vmem:[%s7 + $0xdc8] sm:$0xff]
  %v3164 = vld [vmem:[%s7 + $0xdd0] sm:$0xff]
  %v3165 = vld [vmem:[%s7 + $0xdd8] sm:$0xff]
  %v3166 = vld [vmem:[%s7 + $0xde0] sm:$0xf]
  %v3167 = vld [vmem:[%s7 + $0xde4] sm:$0xff]
  %v3168 = vld [vmem:[%s7 + $0xdec] sm:$0xff]
  %v3169 = vld [vmem:[%s7 + $0xdf4] sm:$0xff]
  %v3170 = vld [vmem:[%s7 + $0xdfc] sm:$0xf]
  %v3171 = vld [vmem:[%s8] sm:$0x7f]
  %v3173 = vlaneseq
  %v3174 = vshrl.u32 %v3173, 7
  %v3175 = vsub.s32 0, %v3174
  %v3176 = vrot.slane %v3171, %v3175
  %v3177 = vlaneseq
  %v3178 = vshrl.u32 %v3177, 7
  %v3179 = vsub.s32 1, %v3178
  %v3180 = vrot.slane %v3171, %v3179
  %v3181 = vlaneseq
  %v3182 = vshrl.u32 %v3181, 7
  %v3183 = vsub.s32 2, %v3182
  %v3184 = vrot.slane %v3171, %v3183
  %v3185 = vlaneseq
  %v3186 = vshrl.u32 %v3185, 7
  %v3187 = vsub.s32 3, %v3186
  %v3188 = vrot.slane %v3171, %v3187
  %v3189 = vlaneseq
  %v3190 = vshrl.u32 %v3189, 7
  %v3191 = vsub.s32 4, %v3190
  %v3192 = vrot.slane %v3171, %v3191
  %v3193 = vlaneseq
  %v3194 = vshrl.u32 %v3193, 7
  %v3195 = vsub.s32 5, %v3194
  %v3196 = vrot.slane %v3171, %v3195
  %v3197 = vlaneseq
  %v3198 = vshrl.u32 %v3197, 7
  %v3199 = vsub.s32 6, %v3198
  %v3200 = vrot.slane %v3171, %v3199
  %v3720 = vunpack.c.l.b16 %v2659
  %v3721 = vunpack.c.h.b16 %v2659
  %v3722 = vunpack.c.l.b16 %v2660
  %v3723 = vunpack.c.h.b16 %v2660
  %v3724 = vunpack.c.l.b16 %v2661
  %v3725 = vunpack.c.h.b16 %v2661
  %v3726 = vunpack.c.l.b16 %v2662
  %v3727 = vunpack.c.l.b16 %v2663
  %v3728 = vunpack.c.h.b16 %v2663
  %v3729 = vunpack.c.l.b16 %v2664
  %v3730 = vunpack.c.h.b16 %v2664
  %v3731 = vunpack.c.l.b16 %v2665
  %v3732 = vunpack.c.h.b16 %v2665
  %v3733 = vunpack.c.l.b16 %v2666
  %v3734 = vunpack.c.l.b16 %v2667
  %v3735 = vunpack.c.h.b16 %v2667
  %v3736 = vunpack.c.l.b16 %v2668
  %v3737 = vunpack.c.h.b16 %v2668
  %v3738 = vunpack.c.l.b16 %v2669
  %v3739 = vunpack.c.h.b16 %v2669
  %v3740 = vunpack.c.l.b16 %v2670
  %v3741 = vunpack.c.l.b16 %v2671
  %v3742 = vunpack.c.h.b16 %v2671
  %v3743 = vunpack.c.l.b16 %v2672
  %v3744 = vunpack.c.h.b16 %v2672
  %v3745 = vunpack.c.l.b16 %v2673
  %v3746 = vunpack.c.h.b16 %v2673
  %v3747 = vunpack.c.l.b16 %v2674
  %v3748 = vunpack.c.l.b16 %v2675
  %v3749 = vunpack.c.h.b16 %v2675
  %v3750 = vunpack.c.l.b16 %v2676
  %v3751 = vunpack.c.h.b16 %v2676
  %v3752 = vunpack.c.l.b16 %v2677
  %v3753 = vunpack.c.h.b16 %v2677
  %v3754 = vunpack.c.l.b16 %v2678
  %v3755 = vunpack.c.l.b16 %v2679
  %v3756 = vunpack.c.h.b16 %v2679
  %v3757 = vunpack.c.l.b16 %v2680
  %v3758 = vunpack.c.h.b16 %v2680
  %v3759 = vunpack.c.l.b16 %v2681
  %v3760 = vunpack.c.h.b16 %v2681
  %v3761 = vunpack.c.l.b16 %v2682
  %v3762 = vunpack.c.l.b16 %v2683
  %v3763 = vunpack.c.h.b16 %v2683
  %v3764 = vunpack.c.l.b16 %v2684
  %v3765 = vunpack.c.h.b16 %v2684
  %v3766 = vunpack.c.l.b16 %v2685
  %v3767 = vunpack.c.h.b16 %v2685
  %v3768 = vunpack.c.l.b16 %v2686
  %v3769 = vunpack.c.l.b16 %v2687
  %v3770 = vunpack.c.h.b16 %v2687
  %v3771 = vunpack.c.l.b16 %v2688
  %v3772 = vunpack.c.h.b16 %v2688
  %v3773 = vunpack.c.l.b16 %v2689
  %v3774 = vunpack.c.h.b16 %v2689
  %v3775 = vunpack.c.l.b16 %v2690
  %v3776 = vunpack.c.l.b16 %v2691
  %v3777 = vunpack.c.h.b16 %v2691
  %v3778 = vunpack.c.l.b16 %v2692
  %v3779 = vunpack.c.h.b16 %v2692
  %v3780 = vunpack.c.l.b16 %v2693
  %v3781 = vunpack.c.h.b16 %v2693
  %v3782 = vunpack.c.l.b16 %v2694
  %v3783 = vunpack.c.l.b16 %v2695
  %v3784 = vunpack.c.h.b16 %v2695
  %v3785 = vunpack.c.l.b16 %v2696
  %v3786 = vunpack.c.h.b16 %v2696
  %v3787 = vunpack.c.l.b16 %v2697
  %v3788 = vunpack.c.h.b16 %v2697
  %v3789 = vunpack.c.l.b16 %v2698
  %v3790 = vunpack.c.l.b16 %v2699
  %v3791 = vunpack.c.h.b16 %v2699
  %v3792 = vunpack.c.l.b16 %v2700
  %v3793 = vunpack.c.h.b16 %v2700
  %v3794 = vunpack.c.l.b16 %v2701
  %v3795 = vunpack.c.h.b16 %v2701
  %v3796 = vunpack.c.l.b16 %v2702
  %v3797 = vunpack.c.l.b16 %v2703
  %v3798 = vunpack.c.h.b16 %v2703
  %v3799 = vunpack.c.l.b16 %v2704
  %v3800 = vunpack.c.h.b16 %v2704
  %v3801 = vunpack.c.l.b16 %v2705
  %v3802 = vunpack.c.h.b16 %v2705
  %v3803 = vunpack.c.l.b16 %v2706
  %v3804 = vunpack.c.l.b16 %v2707
  %v3805 = vunpack.c.h.b16 %v2707
  %v3806 = vunpack.c.l.b16 %v2708
  %v3807 = vunpack.c.h.b16 %v2708
  %v3808 = vunpack.c.l.b16 %v2709
  %v3809 = vunpack.c.h.b16 %v2709
  %v3810 = vunpack.c.l.b16 %v2710
  %v3811 = vunpack.c.l.b16 %v2711
  %v3812 = vunpack.c.h.b16 %v2711
  %v3813 = vunpack.c.l.b16 %v2712
  %v3814 = vunpack.c.h.b16 %v2712
  %v3815 = vunpack.c.l.b16 %v2713
  %v3816 = vunpack.c.h.b16 %v2713
  %v3817 = vunpack.c.l.b16 %v2714
  %v3818 = vunpack.c.l.b16 %v2715
  %v3819 = vunpack.c.h.b16 %v2715
  %v3820 = vunpack.c.l.b16 %v2716
  %v3821 = vunpack.c.h.b16 %v2716
  %v3822 = vunpack.c.l.b16 %v2717
  %v3823 = vunpack.c.h.b16 %v2717
  %v3824 = vunpack.c.l.b16 %v2718
  %v3825 = vunpack.c.l.b16 %v2719
  %v3826 = vunpack.c.h.b16 %v2719
  %v3827 = vunpack.c.l.b16 %v2720
  %v3828 = vunpack.c.h.b16 %v2720
  %v3829 = vunpack.c.l.b16 %v2721
  %v3830 = vunpack.c.h.b16 %v2721
  %v3831 = vunpack.c.l.b16 %v2722
  %v3832 = vunpack.c.l.b16 %v2723
  %v3833 = vunpack.c.h.b16 %v2723
  %v3834 = vunpack.c.l.b16 %v2724
  %v3835 = vunpack.c.h.b16 %v2724
  %v3836 = vunpack.c.l.b16 %v2725
  %v3837 = vunpack.c.h.b16 %v2725
  %v3838 = vunpack.c.l.b16 %v2726
  %v3839 = vunpack.c.l.b16 %v2727
  %v3840 = vunpack.c.h.b16 %v2727
  %v3841 = vunpack.c.l.b16 %v2728
  %v3842 = vunpack.c.h.b16 %v2728
  %v3843 = vunpack.c.l.b16 %v2729
  %v3844 = vunpack.c.h.b16 %v2729
  %v3845 = vunpack.c.l.b16 %v2730
  %v3846 = vunpack.c.l.b16 %v2731
  %v3847 = vunpack.c.h.b16 %v2731
  %v3848 = vunpack.c.l.b16 %v2732
  %v3849 = vunpack.c.h.b16 %v2732
  %v3850 = vunpack.c.l.b16 %v2733
  %v3851 = vunpack.c.h.b16 %v2733
  %v3852 = vunpack.c.l.b16 %v2734
  %v3853 = vunpack.c.l.b16 %v2735
  %v3854 = vunpack.c.h.b16 %v2735
  %v3855 = vunpack.c.l.b16 %v2736
  %v3856 = vunpack.c.h.b16 %v2736
  %v3857 = vunpack.c.l.b16 %v2737
  %v3858 = vunpack.c.h.b16 %v2737
  %v3859 = vunpack.c.l.b16 %v2738
  %v3860 = vunpack.c.l.b16 %v2739
  %v3861 = vunpack.c.h.b16 %v2739
  %v3862 = vunpack.c.l.b16 %v2740
  %v3863 = vunpack.c.h.b16 %v2740
  %v3864 = vunpack.c.l.b16 %v2741
  %v3865 = vunpack.c.h.b16 %v2741
  %v3866 = vunpack.c.l.b16 %v2742
  %v3867 = vunpack.c.l.b16 %v2743
  %v3868 = vunpack.c.h.b16 %v2743
  %v3869 = vunpack.c.l.b16 %v2744
  %v3870 = vunpack.c.h.b16 %v2744
  %v3871 = vunpack.c.l.b16 %v2745
  %v3872 = vunpack.c.h.b16 %v2745
  %v3873 = vunpack.c.l.b16 %v2746
  %v3874 = vunpack.c.l.b16 %v2747
  %v3875 = vunpack.c.h.b16 %v2747
  %v3876 = vunpack.c.l.b16 %v2748
  %v3877 = vunpack.c.h.b16 %v2748
  %v3878 = vunpack.c.l.b16 %v2749
  %v3879 = vunpack.c.h.b16 %v2749
  %v3880 = vunpack.c.l.b16 %v2750
  %v3881 = vunpack.c.l.b16 %v2751
  %v3882 = vunpack.c.h.b16 %v2751
  %v3883 = vunpack.c.l.b16 %v2752
  %v3884 = vunpack.c.h.b16 %v2752
  %v3885 = vunpack.c.l.b16 %v2753
  %v3886 = vunpack.c.h.b16 %v2753
  %v3887 = vunpack.c.l.b16 %v2754
  %v3888 = vunpack.c.l.b16 %v2755
  %v3889 = vunpack.c.h.b16 %v2755
  %v3890 = vunpack.c.l.b16 %v2756
  %v3891 = vunpack.c.h.b16 %v2756
  %v3892 = vunpack.c.l.b16 %v2757
  %v3893 = vunpack.c.h.b16 %v2757
  %v3894 = vunpack.c.l.b16 %v2758
  %v3895 = vunpack.c.l.b16 %v2759
  %v3896 = vunpack.c.h.b16 %v2759
  %v3897 = vunpack.c.l.b16 %v2760
  %v3898 = vunpack.c.h.b16 %v2760
  %v3899 = vunpack.c.l.b16 %v2761
  %v3900 = vunpack.c.h.b16 %v2761
  %v3901 = vunpack.c.l.b16 %v2762
  %v3902 = vunpack.c.l.b16 %v2763
  %v3903 = vunpack.c.h.b16 %v2763
  %v3904 = vunpack.c.l.b16 %v2764
  %v3905 = vunpack.c.h.b16 %v2764
  %v3906 = vunpack.c.l.b16 %v2765
  %v3907 = vunpack.c.h.b16 %v2765
  %v3908 = vunpack.c.l.b16 %v2766
  %v3909 = vunpack.c.l.b16 %v2767
  %v3910 = vunpack.c.h.b16 %v2767
  %v3911 = vunpack.c.l.b16 %v2768
  %v3912 = vunpack.c.h.b16 %v2768
  %v3913 = vunpack.c.l.b16 %v2769
  %v3914 = vunpack.c.h.b16 %v2769
  %v3915 = vunpack.c.l.b16 %v2770
  %v3916 = vunpack.c.l.b16 %v2771
  %v3917 = vunpack.c.h.b16 %v2771
  %v3918 = vunpack.c.l.b16 %v2772
  %v3919 = vunpack.c.h.b16 %v2772
  %v3920 = vunpack.c.l.b16 %v2773
  %v3921 = vunpack.c.h.b16 %v2773
  %v3922 = vunpack.c.l.b16 %v2774
  %v3923 = vunpack.c.l.b16 %v2775
  %v3924 = vunpack.c.h.b16 %v2775
  %v3925 = vunpack.c.l.b16 %v2776
  %v3926 = vunpack.c.h.b16 %v2776
  %v3927 = vunpack.c.l.b16 %v2777
  %v3928 = vunpack.c.h.b16 %v2777
  %v3929 = vunpack.c.l.b16 %v2778
  %v3930 = vunpack.c.l.b16 %v2779
  %v3931 = vunpack.c.h.b16 %v2779
  %v3932 = vunpack.c.l.b16 %v2780
  %v3933 = vunpack.c.h.b16 %v2780
  %v3934 = vunpack.c.l.b16 %v2781
  %v3935 = vunpack.c.h.b16 %v2781
  %v3936 = vunpack.c.l.b16 %v2782
  %v3937 = vunpack.c.l.b16 %v2783
  %v3938 = vunpack.c.h.b16 %v2783
  %v3939 = vunpack.c.l.b16 %v2784
  %v3940 = vunpack.c.h.b16 %v2784
  %v3941 = vunpack.c.l.b16 %v2785
  %v3942 = vunpack.c.h.b16 %v2785
  %v3943 = vunpack.c.l.b16 %v2786
  %v3944 = vunpack.c.l.b16 %v2787
  %v3945 = vunpack.c.h.b16 %v2787
  %v3946 = vunpack.c.l.b16 %v2788
  %v3947 = vunpack.c.h.b16 %v2788
  %v3948 = vunpack.c.l.b16 %v2789
  %v3949 = vunpack.c.h.b16 %v2789
  %v3950 = vunpack.c.l.b16 %v2790
  %v3951 = vunpack.c.l.b16 %v2791
  %v3952 = vunpack.c.h.b16 %v2791
  %v3953 = vunpack.c.l.b16 %v2792
  %v3954 = vunpack.c.h.b16 %v2792
  %v3955 = vunpack.c.l.b16 %v2793
  %v3956 = vunpack.c.h.b16 %v2793
  %v3957 = vunpack.c.l.b16 %v2794
  %v3958 = vunpack.c.l.b16 %v2795
  %v3959 = vunpack.c.h.b16 %v2795
  %v3960 = vunpack.c.l.b16 %v2796
  %v3961 = vunpack.c.h.b16 %v2796
  %v3962 = vunpack.c.l.b16 %v2797
  %v3963 = vunpack.c.h.b16 %v2797
  %v3964 = vunpack.c.l.b16 %v2798
  %v3965 = vunpack.c.l.b16 %v2799
  %v3966 = vunpack.c.h.b16 %v2799
  %v3967 = vunpack.c.l.b16 %v2800
  %v3968 = vunpack.c.h.b16 %v2800
  %v3969 = vunpack.c.l.b16 %v2801
  %v3970 = vunpack.c.h.b16 %v2801
  %v3971 = vunpack.c.l.b16 %v2802
  %v3972 = vunpack.c.l.b16 %v2803
  %v3973 = vunpack.c.h.b16 %v2803
  %v3974 = vunpack.c.l.b16 %v2804
  %v3975 = vunpack.c.h.b16 %v2804
  %v3976 = vunpack.c.l.b16 %v2805
  %v3977 = vunpack.c.h.b16 %v2805
  %v3978 = vunpack.c.l.b16 %v2806
  %v3979 = vunpack.c.l.b16 %v2807
  %v3980 = vunpack.c.h.b16 %v2807
  %v3981 = vunpack.c.l.b16 %v2808
  %v3982 = vunpack.c.h.b16 %v2808
  %v3983 = vunpack.c.l.b16 %v2809
  %v3984 = vunpack.c.h.b16 %v2809
  %v3985 = vunpack.c.l.b16 %v2810
  %v3986 = vunpack.c.l.b16 %v2811
  %v3987 = vunpack.c.h.b16 %v2811
  %v3988 = vunpack.c.l.b16 %v2812
  %v3989 = vunpack.c.h.b16 %v2812
  %v3990 = vunpack.c.l.b16 %v2813
  %v3991 = vunpack.c.h.b16 %v2813
  %v3992 = vunpack.c.l.b16 %v2814
  %v3993 = vunpack.c.l.b16 %v2815
  %v3994 = vunpack.c.h.b16 %v2815
  %v3995 = vunpack.c.l.b16 %v2816
  %v3996 = vunpack.c.h.b16 %v2816
  %v3997 = vunpack.c.l.b16 %v2817
  %v3998 = vunpack.c.h.b16 %v2817
  %v3999 = vunpack.c.l.b16 %v2818
  %v4000 = vunpack.c.l.b16 %v2819
  %v4001 = vunpack.c.h.b16 %v2819
  %v4002 = vunpack.c.l.b16 %v2820
  %v4003 = vunpack.c.h.b16 %v2820
  %v4004 = vunpack.c.l.b16 %v2821
  %v4005 = vunpack.c.h.b16 %v2821
  %v4006 = vunpack.c.l.b16 %v2822
  %v4007 = vunpack.c.l.b16 %v2823
  %v4008 = vunpack.c.h.b16 %v2823
  %v4009 = vunpack.c.l.b16 %v2824
  %v4010 = vunpack.c.h.b16 %v2824
  %v4011 = vunpack.c.l.b16 %v2825
  %v4012 = vunpack.c.h.b16 %v2825
  %v4013 = vunpack.c.l.b16 %v2826
  %v4014 = vunpack.c.l.b16 %v2827
  %v4015 = vunpack.c.h.b16 %v2827
  %v4016 = vunpack.c.l.b16 %v2828
  %v4017 = vunpack.c.h.b16 %v2828
  %v4018 = vunpack.c.l.b16 %v2829
  %v4019 = vunpack.c.h.b16 %v2829
  %v4020 = vunpack.c.l.b16 %v2830
  %v4021 = vunpack.c.l.b16 %v2831
  %v4022 = vunpack.c.h.b16 %v2831
  %v4023 = vunpack.c.l.b16 %v2832
  %v4024 = vunpack.c.h.b16 %v2832
  %v4025 = vunpack.c.l.b16 %v2833
  %v4026 = vunpack.c.h.b16 %v2833
  %v4027 = vunpack.c.l.b16 %v2834
  %v4028 = vunpack.c.l.b16 %v2835
  %v4029 = vunpack.c.h.b16 %v2835
  %v4030 = vunpack.c.l.b16 %v2836
  %v4031 = vunpack.c.h.b16 %v2836
  %v4032 = vunpack.c.l.b16 %v2837
  %v4033 = vunpack.c.h.b16 %v2837
  %v4034 = vunpack.c.l.b16 %v2838
  %v4035 = vunpack.c.l.b16 %v2839
  %v4036 = vunpack.c.h.b16 %v2839
  %v4037 = vunpack.c.l.b16 %v2840
  %v4038 = vunpack.c.h.b16 %v2840
  %v4039 = vunpack.c.l.b16 %v2841
  %v4040 = vunpack.c.h.b16 %v2841
  %v4041 = vunpack.c.l.b16 %v2842
  %v4042 = vunpack.c.l.b16 %v2843
  %v4043 = vunpack.c.h.b16 %v2843
  %v4044 = vunpack.c.l.b16 %v2844
  %v4045 = vunpack.c.h.b16 %v2844
  %v4046 = vunpack.c.l.b16 %v2845
  %v4047 = vunpack.c.h.b16 %v2845
  %v4048 = vunpack.c.l.b16 %v2846
  %v4049 = vunpack.c.l.b16 %v2847
  %v4050 = vunpack.c.h.b16 %v2847
  %v4051 = vunpack.c.l.b16 %v2848
  %v4052 = vunpack.c.h.b16 %v2848
  %v4053 = vunpack.c.l.b16 %v2849
  %v4054 = vunpack.c.h.b16 %v2849
  %v4055 = vunpack.c.l.b16 %v2850
  %v4056 = vunpack.c.l.b16 %v2851
  %v4057 = vunpack.c.h.b16 %v2851
  %v4058 = vunpack.c.l.b16 %v2852
  %v4059 = vunpack.c.h.b16 %v2852
  %v4060 = vunpack.c.l.b16 %v2853
  %v4061 = vunpack.c.h.b16 %v2853
  %v4062 = vunpack.c.l.b16 %v2854
  %v4063 = vunpack.c.l.b16 %v2855
  %v4064 = vunpack.c.h.b16 %v2855
  %v4065 = vunpack.c.l.b16 %v2856
  %v4066 = vunpack.c.h.b16 %v2856
  %v4067 = vunpack.c.l.b16 %v2857
  %v4068 = vunpack.c.h.b16 %v2857
  %v4069 = vunpack.c.l.b16 %v2858
  %v4070 = vunpack.c.l.b16 %v2859
  %v4071 = vunpack.c.h.b16 %v2859
  %v4072 = vunpack.c.l.b16 %v2860
  %v4073 = vunpack.c.h.b16 %v2860
  %v4074 = vunpack.c.l.b16 %v2861
  %v4075 = vunpack.c.h.b16 %v2861
  %v4076 = vunpack.c.l.b16 %v2862
  %v4077 = vunpack.c.l.b16 %v2863
  %v4078 = vunpack.c.h.b16 %v2863
  %v4079 = vunpack.c.l.b16 %v2864
  %v4080 = vunpack.c.h.b16 %v2864
  %v4081 = vunpack.c.l.b16 %v2865
  %v4082 = vunpack.c.h.b16 %v2865
  %v4083 = vunpack.c.l.b16 %v2866
  %v4084 = vunpack.c.l.b16 %v2867
  %v4085 = vunpack.c.h.b16 %v2867
  %v4086 = vunpack.c.l.b16 %v2868
  %v4087 = vunpack.c.h.b16 %v2868
  %v4088 = vunpack.c.l.b16 %v2869
  %v4089 = vunpack.c.h.b16 %v2869
  %v4090 = vunpack.c.l.b16 %v2870
  %v4091 = vunpack.c.l.b16 %v2871
  %v4092 = vunpack.c.h.b16 %v2871
  %v4093 = vunpack.c.l.b16 %v2872
  %v4094 = vunpack.c.h.b16 %v2872
  %v4095 = vunpack.c.l.b16 %v2873
  %v4096 = vunpack.c.h.b16 %v2873
  %v4097 = vunpack.c.l.b16 %v2874
  %v4098 = vunpack.c.l.b16 %v2875
  %v4099 = vunpack.c.h.b16 %v2875
  %v4100 = vunpack.c.l.b16 %v2876
  %v4101 = vunpack.c.h.b16 %v2876
  %v4102 = vunpack.c.l.b16 %v2877
  %v4103 = vunpack.c.h.b16 %v2877
  %v4104 = vunpack.c.l.b16 %v2878
  %v4105 = vunpack.c.l.b16 %v2879
  %v4106 = vunpack.c.h.b16 %v2879
  %v4107 = vunpack.c.l.b16 %v2880
  %v4108 = vunpack.c.h.b16 %v2880
  %v4109 = vunpack.c.l.b16 %v2881
  %v4110 = vunpack.c.h.b16 %v2881
  %v4111 = vunpack.c.l.b16 %v2882
  %v4112 = vunpack.c.l.b16 %v2883
  %v4113 = vunpack.c.h.b16 %v2883
  %v4114 = vunpack.c.l.b16 %v2884
  %v4115 = vunpack.c.h.b16 %v2884
  %v4116 = vunpack.c.l.b16 %v2885
  %v4117 = vunpack.c.h.b16 %v2885
  %v4118 = vunpack.c.l.b16 %v2886
  %v4119 = vunpack.c.l.b16 %v2887
  %v4120 = vunpack.c.h.b16 %v2887
  %v4121 = vunpack.c.l.b16 %v2888
  %v4122 = vunpack.c.h.b16 %v2888
  %v4123 = vunpack.c.l.b16 %v2889
  %v4124 = vunpack.c.h.b16 %v2889
  %v4125 = vunpack.c.l.b16 %v2890
  %v4126 = vunpack.c.l.b16 %v2891
  %v4127 = vunpack.c.h.b16 %v2891
  %v4128 = vunpack.c.l.b16 %v2892
  %v4129 = vunpack.c.h.b16 %v2892
  %v4130 = vunpack.c.l.b16 %v2893
  %v4131 = vunpack.c.h.b16 %v2893
  %v4132 = vunpack.c.l.b16 %v2894
  %v4133 = vunpack.c.l.b16 %v2895
  %v4134 = vunpack.c.h.b16 %v2895
  %v4135 = vunpack.c.l.b16 %v2896
  %v4136 = vunpack.c.h.b16 %v2896
  %v4137 = vunpack.c.l.b16 %v2897
  %v4138 = vunpack.c.h.b16 %v2897
  %v4139 = vunpack.c.l.b16 %v2898
  %v4140 = vunpack.c.l.b16 %v2899
  %v4141 = vunpack.c.h.b16 %v2899
  %v4142 = vunpack.c.l.b16 %v2900
  %v4143 = vunpack.c.h.b16 %v2900
  %v4144 = vunpack.c.l.b16 %v2901
  %v4145 = vunpack.c.h.b16 %v2901
  %v4146 = vunpack.c.l.b16 %v2902
  %v4147 = vunpack.c.l.b16 %v2903
  %v4148 = vunpack.c.h.b16 %v2903
  %v4149 = vunpack.c.l.b16 %v2904
  %v4150 = vunpack.c.h.b16 %v2904
  %v4151 = vunpack.c.l.b16 %v2905
  %v4152 = vunpack.c.h.b16 %v2905
  %v4153 = vunpack.c.l.b16 %v2906
  %v4154 = vunpack.c.l.b16 %v2907
  %v4155 = vunpack.c.h.b16 %v2907
  %v4156 = vunpack.c.l.b16 %v2908
  %v4157 = vunpack.c.h.b16 %v2908
  %v4158 = vunpack.c.l.b16 %v2909
  %v4159 = vunpack.c.h.b16 %v2909
  %v4160 = vunpack.c.l.b16 %v2910
  %v4161 = vunpack.c.l.b16 %v2911
  %v4162 = vunpack.c.h.b16 %v2911
  %v4163 = vunpack.c.l.b16 %v2912
  %v4164 = vunpack.c.h.b16 %v2912
  %v4165 = vunpack.c.l.b16 %v2913
  %v4166 = vunpack.c.h.b16 %v2913
  %v4167 = vunpack.c.l.b16 %v2914
  %v4168 = vunpack.c.l.b16 %v2915
  %v4169 = vunpack.c.h.b16 %v2915
  %v4170 = vunpack.c.l.b16 %v2916
  %v4171 = vunpack.c.h.b16 %v2916
  %v4172 = vunpack.c.l.b16 %v2917
  %v4173 = vunpack.c.h.b16 %v2917
  %v4174 = vunpack.c.l.b16 %v2918
  %v4175 = vunpack.c.l.b16 %v2919
  %v4176 = vunpack.c.h.b16 %v2919
  %v4177 = vunpack.c.l.b16 %v2920
  %v4178 = vunpack.c.h.b16 %v2920
  %v4179 = vunpack.c.l.b16 %v2921
  %v4180 = vunpack.c.h.b16 %v2921
  %v4181 = vunpack.c.l.b16 %v2922
  %v4182 = vunpack.c.l.b16 %v2923
  %v4183 = vunpack.c.h.b16 %v2923
  %v4184 = vunpack.c.l.b16 %v2924
  %v4185 = vunpack.c.h.b16 %v2924
  %v4186 = vunpack.c.l.b16 %v2925
  %v4187 = vunpack.c.h.b16 %v2925
  %v4188 = vunpack.c.l.b16 %v2926
  %v4189 = vunpack.c.l.b16 %v2927
  %v4190 = vunpack.c.h.b16 %v2927
  %v4191 = vunpack.c.l.b16 %v2928
  %v4192 = vunpack.c.h.b16 %v2928
  %v4193 = vunpack.c.l.b16 %v2929
  %v4194 = vunpack.c.h.b16 %v2929
  %v4195 = vunpack.c.l.b16 %v2930
  %v4196 = vunpack.c.l.b16 %v2931
  %v4197 = vunpack.c.h.b16 %v2931
  %v4198 = vunpack.c.l.b16 %v2932
  %v4199 = vunpack.c.h.b16 %v2932
  %v4200 = vunpack.c.l.b16 %v2933
  %v4201 = vunpack.c.h.b16 %v2933
  %v4202 = vunpack.c.l.b16 %v2934
  %v4203 = vunpack.c.l.b16 %v2935
  %v4204 = vunpack.c.h.b16 %v2935
  %v4205 = vunpack.c.l.b16 %v2936
  %v4206 = vunpack.c.h.b16 %v2936
  %v4207 = vunpack.c.l.b16 %v2937
  %v4208 = vunpack.c.h.b16 %v2937
  %v4209 = vunpack.c.l.b16 %v2938
  %v4210 = vunpack.c.l.b16 %v2939
  %v4211 = vunpack.c.h.b16 %v2939
  %v4212 = vunpack.c.l.b16 %v2940
  %v4213 = vunpack.c.h.b16 %v2940
  %v4214 = vunpack.c.l.b16 %v2941
  %v4215 = vunpack.c.h.b16 %v2941
  %v4216 = vunpack.c.l.b16 %v2942
  %v4217 = vunpack.c.l.b16 %v2943
  %v4218 = vunpack.c.h.b16 %v2943
  %v4219 = vunpack.c.l.b16 %v2944
  %v4220 = vunpack.c.h.b16 %v2944
  %v4221 = vunpack.c.l.b16 %v2945
  %v4222 = vunpack.c.h.b16 %v2945
  %v4223 = vunpack.c.l.b16 %v2946
  %v4224 = vunpack.c.l.b16 %v2947
  %v4225 = vunpack.c.h.b16 %v2947
  %v4226 = vunpack.c.l.b16 %v2948
  %v4227 = vunpack.c.h.b16 %v2948
  %v4228 = vunpack.c.l.b16 %v2949
  %v4229 = vunpack.c.h.b16 %v2949
  %v4230 = vunpack.c.l.b16 %v2950
  %v4231 = vunpack.c.l.b16 %v2951
  %v4232 = vunpack.c.h.b16 %v2951
  %v4233 = vunpack.c.l.b16 %v2952
  %v4234 = vunpack.c.h.b16 %v2952
  %v4235 = vunpack.c.l.b16 %v2953
  %v4236 = vunpack.c.h.b16 %v2953
  %v4237 = vunpack.c.l.b16 %v2954
  %v4238 = vunpack.c.l.b16 %v2955
  %v4239 = vunpack.c.h.b16 %v2955
  %v4240 = vunpack.c.l.b16 %v2956
  %v4241 = vunpack.c.h.b16 %v2956
  %v4242 = vunpack.c.l.b16 %v2957
  %v4243 = vunpack.c.h.b16 %v2957
  %v4244 = vunpack.c.l.b16 %v2958
  %v4245 = vunpack.c.l.b16 %v2959
  %v4246 = vunpack.c.h.b16 %v2959
  %v4247 = vunpack.c.l.b16 %v2960
  %v4248 = vunpack.c.h.b16 %v2960
  %v4249 = vunpack.c.l.b16 %v2961
  %v4250 = vunpack.c.h.b16 %v2961
  %v4251 = vunpack.c.l.b16 %v2962
  %v4252 = vunpack.c.l.b16 %v2963
  %v4253 = vunpack.c.h.b16 %v2963
  %v4254 = vunpack.c.l.b16 %v2964
  %v4255 = vunpack.c.h.b16 %v2964
  %v4256 = vunpack.c.l.b16 %v2965
  %v4257 = vunpack.c.h.b16 %v2965
  %v4258 = vunpack.c.l.b16 %v2966
  %v4259 = vunpack.c.l.b16 %v2967
  %v4260 = vunpack.c.h.b16 %v2967
  %v4261 = vunpack.c.l.b16 %v2968
  %v4262 = vunpack.c.h.b16 %v2968
  %v4263 = vunpack.c.l.b16 %v2969
  %v4264 = vunpack.c.h.b16 %v2969
  %v4265 = vunpack.c.l.b16 %v2970
  %v4266 = vunpack.c.l.b16 %v2971
  %v4267 = vunpack.c.h.b16 %v2971
  %v4268 = vunpack.c.l.b16 %v2972
  %v4269 = vunpack.c.h.b16 %v2972
  %v4270 = vunpack.c.l.b16 %v2973
  %v4271 = vunpack.c.h.b16 %v2973
  %v4272 = vunpack.c.l.b16 %v2974
  %v4273 = vunpack.c.l.b16 %v2975
  %v4274 = vunpack.c.h.b16 %v2975
  %v4275 = vunpack.c.l.b16 %v2976
  %v4276 = vunpack.c.h.b16 %v2976
  %v4277 = vunpack.c.l.b16 %v2977
  %v4278 = vunpack.c.h.b16 %v2977
  %v4279 = vunpack.c.l.b16 %v2978
  %v4280 = vunpack.c.l.b16 %v2979
  %v4281 = vunpack.c.h.b16 %v2979
  %v4282 = vunpack.c.l.b16 %v2980
  %v4283 = vunpack.c.h.b16 %v2980
  %v4284 = vunpack.c.l.b16 %v2981
  %v4285 = vunpack.c.h.b16 %v2981
  %v4286 = vunpack.c.l.b16 %v2982
  %v4287 = vunpack.c.l.b16 %v2983
  %v4288 = vunpack.c.h.b16 %v2983
  %v4289 = vunpack.c.l.b16 %v2984
  %v4290 = vunpack.c.h.b16 %v2984
  %v4291 = vunpack.c.l.b16 %v2985
  %v4292 = vunpack.c.h.b16 %v2985
  %v4293 = vunpack.c.l.b16 %v2986
  %v4294 = vunpack.c.l.b16 %v2987
  %v4295 = vunpack.c.h.b16 %v2987
  %v4296 = vunpack.c.l.b16 %v2988
  %v4297 = vunpack.c.h.b16 %v2988
  %v4298 = vunpack.c.l.b16 %v2989
  %v4299 = vunpack.c.h.b16 %v2989
  %v4300 = vunpack.c.l.b16 %v2990
  %v4301 = vunpack.c.l.b16 %v2991
  %v4302 = vunpack.c.h.b16 %v2991
  %v4303 = vunpack.c.l.b16 %v2992
  %v4304 = vunpack.c.h.b16 %v2992
  %v4305 = vunpack.c.l.b16 %v2993
  %v4306 = vunpack.c.h.b16 %v2993
  %v4307 = vunpack.c.l.b16 %v2994
  %v4308 = vunpack.c.l.b16 %v2995
  %v4309 = vunpack.c.h.b16 %v2995
  %v4310 = vunpack.c.l.b16 %v2996
  %v4311 = vunpack.c.h.b16 %v2996
  %v4312 = vunpack.c.l.b16 %v2997
  %v4313 = vunpack.c.h.b16 %v2997
  %v4314 = vunpack.c.l.b16 %v2998
  %v4315 = vunpack.c.l.b16 %v2999
  %v4316 = vunpack.c.h.b16 %v2999
  %v4317 = vunpack.c.l.b16 %v3000
  %v4318 = vunpack.c.h.b16 %v3000
  %v4319 = vunpack.c.l.b16 %v3001
  %v4320 = vunpack.c.h.b16 %v3001
  %v4321 = vunpack.c.l.b16 %v3002
  %v4322 = vunpack.c.l.b16 %v3003
  %v4323 = vunpack.c.h.b16 %v3003
  %v4324 = vunpack.c.l.b16 %v3004
  %v4325 = vunpack.c.h.b16 %v3004
  %v4326 = vunpack.c.l.b16 %v3005
  %v4327 = vunpack.c.h.b16 %v3005
  %v4328 = vunpack.c.l.b16 %v3006
  %v4329 = vunpack.c.l.b16 %v3007
  %v4330 = vunpack.c.h.b16 %v3007
  %v4331 = vunpack.c.l.b16 %v3008
  %v4332 = vunpack.c.h.b16 %v3008
  %v4333 = vunpack.c.l.b16 %v3009
  %v4334 = vunpack.c.h.b16 %v3009
  %v4335 = vunpack.c.l.b16 %v3010
  %v4336 = vunpack.c.l.b16 %v3011
  %v4337 = vunpack.c.h.b16 %v3011
  %v4338 = vunpack.c.l.b16 %v3012
  %v4339 = vunpack.c.h.b16 %v3012
  %v4340 = vunpack.c.l.b16 %v3013
  %v4341 = vunpack.c.h.b16 %v3013
  %v4342 = vunpack.c.l.b16 %v3014
  %v4343 = vunpack.c.l.b16 %v3015
  %v4344 = vunpack.c.h.b16 %v3015
  %v4345 = vunpack.c.l.b16 %v3016
  %v4346 = vunpack.c.h.b16 %v3016
  %v4347 = vunpack.c.l.b16 %v3017
  %v4348 = vunpack.c.h.b16 %v3017
  %v4349 = vunpack.c.l.b16 %v3018
  %v4350 = vunpack.c.l.b16 %v3019
  %v4351 = vunpack.c.h.b16 %v3019
  %v4352 = vunpack.c.l.b16 %v3020
  %v4353 = vunpack.c.h.b16 %v3020
  %v4354 = vunpack.c.l.b16 %v3021
  %v4355 = vunpack.c.h.b16 %v3021
  %v4356 = vunpack.c.l.b16 %v3022
  %v4357 = vunpack.c.l.b16 %v3023
  %v4358 = vunpack.c.h.b16 %v3023
  %v4359 = vunpack.c.l.b16 %v3024
  %v4360 = vunpack.c.h.b16 %v3024
  %v4361 = vunpack.c.l.b16 %v3025
  %v4362 = vunpack.c.h.b16 %v3025
  %v4363 = vunpack.c.l.b16 %v3026
  %v4364 = vunpack.c.l.b16 %v3027
  %v4365 = vunpack.c.h.b16 %v3027
  %v4366 = vunpack.c.l.b16 %v3028
  %v4367 = vunpack.c.h.b16 %v3028
  %v4368 = vunpack.c.l.b16 %v3029
  %v4369 = vunpack.c.h.b16 %v3029
  %v4370 = vunpack.c.l.b16 %v3030
  %v4371 = vunpack.c.l.b16 %v3031
  %v4372 = vunpack.c.h.b16 %v3031
  %v4373 = vunpack.c.l.b16 %v3032
  %v4374 = vunpack.c.h.b16 %v3032
  %v4375 = vunpack.c.l.b16 %v3033
  %v4376 = vunpack.c.h.b16 %v3033
  %v4377 = vunpack.c.l.b16 %v3034
  %v4378 = vunpack.c.l.b16 %v3035
  %v4379 = vunpack.c.h.b16 %v3035
  %v4380 = vunpack.c.l.b16 %v3036
  %v4381 = vunpack.c.h.b16 %v3036
  %v4382 = vunpack.c.l.b16 %v3037
  %v4383 = vunpack.c.h.b16 %v3037
  %v4384 = vunpack.c.l.b16 %v3038
  %v4385 = vunpack.c.l.b16 %v3039
  %v4386 = vunpack.c.h.b16 %v3039
  %v4387 = vunpack.c.l.b16 %v3040
  %v4388 = vunpack.c.h.b16 %v3040
  %v4389 = vunpack.c.l.b16 %v3041
  %v4390 = vunpack.c.h.b16 %v3041
  %v4391 = vunpack.c.l.b16 %v3042
  %v4392 = vunpack.c.l.b16 %v3043
  %v4393 = vunpack.c.h.b16 %v3043
  %v4394 = vunpack.c.l.b16 %v3044
  %v4395 = vunpack.c.h.b16 %v3044
  %v4396 = vunpack.c.l.b16 %v3045
  %v4397 = vunpack.c.h.b16 %v3045
  %v4398 = vunpack.c.l.b16 %v3046
  %v4399 = vunpack.c.l.b16 %v3047
  %v4400 = vunpack.c.h.b16 %v3047
  %v4401 = vunpack.c.l.b16 %v3048
  %v4402 = vunpack.c.h.b16 %v3048
  %v4403 = vunpack.c.l.b16 %v3049
  %v4404 = vunpack.c.h.b16 %v3049
  %v4405 = vunpack.c.l.b16 %v3050
  %v4406 = vunpack.c.l.b16 %v3051
  %v4407 = vunpack.c.h.b16 %v3051
  %v4408 = vunpack.c.l.b16 %v3052
  %v4409 = vunpack.c.h.b16 %v3052
  %v4410 = vunpack.c.l.b16 %v3053
  %v4411 = vunpack.c.h.b16 %v3053
  %v4412 = vunpack.c.l.b16 %v3054
  %v4413 = vunpack.c.l.b16 %v3055
  %v4414 = vunpack.c.h.b16 %v3055
  %v4415 = vunpack.c.l.b16 %v3056
  %v4416 = vunpack.c.h.b16 %v3056
  %v4417 = vunpack.c.l.b16 %v3057
  %v4418 = vunpack.c.h.b16 %v3057
  %v4419 = vunpack.c.l.b16 %v3058
  %v4420 = vunpack.c.l.b16 %v3059
  %v4421 = vunpack.c.h.b16 %v3059
  %v4422 = vunpack.c.l.b16 %v3060
  %v4423 = vunpack.c.h.b16 %v3060
  %v4424 = vunpack.c.l.b16 %v3061
  %v4425 = vunpack.c.h.b16 %v3061
  %v4426 = vunpack.c.l.b16 %v3062
  %v4427 = vunpack.c.l.b16 %v3063
  %v4428 = vunpack.c.h.b16 %v3063
  %v4429 = vunpack.c.l.b16 %v3064
  %v4430 = vunpack.c.h.b16 %v3064
  %v4431 = vunpack.c.l.b16 %v3065
  %v4432 = vunpack.c.h.b16 %v3065
  %v4433 = vunpack.c.l.b16 %v3066
  %v4434 = vunpack.c.l.b16 %v3067
  %v4435 = vunpack.c.h.b16 %v3067
  %v4436 = vunpack.c.l.b16 %v3068
  %v4437 = vunpack.c.h.b16 %v3068
  %v4438 = vunpack.c.l.b16 %v3069
  %v4439 = vunpack.c.h.b16 %v3069
  %v4440 = vunpack.c.l.b16 %v3070
  %v4441 = vunpack.c.l.b16 %v3071
  %v4442 = vunpack.c.h.b16 %v3071
  %v4443 = vunpack.c.l.b16 %v3072
  %v4444 = vunpack.c.h.b16 %v3072
  %v4445 = vunpack.c.l.b16 %v3073
  %v4446 = vunpack.c.h.b16 %v3073
  %v4447 = vunpack.c.l.b16 %v3074
  %v4448 = vunpack.c.l.b16 %v3075
  %v4449 = vunpack.c.h.b16 %v3075
  %v4450 = vunpack.c.l.b16 %v3076
  %v4451 = vunpack.c.h.b16 %v3076
  %v4452 = vunpack.c.l.b16 %v3077
  %v4453 = vunpack.c.h.b16 %v3077
  %v4454 = vunpack.c.l.b16 %v3078
  %v4455 = vunpack.c.l.b16 %v3079
  %v4456 = vunpack.c.h.b16 %v3079
  %v4457 = vunpack.c.l.b16 %v3080
  %v4458 = vunpack.c.h.b16 %v3080
  %v4459 = vunpack.c.l.b16 %v3081
  %v4460 = vunpack.c.h.b16 %v3081
  %v4461 = vunpack.c.l.b16 %v3082
  %v4462 = vunpack.c.l.b16 %v3083
  %v4463 = vunpack.c.h.b16 %v3083
  %v4464 = vunpack.c.l.b16 %v3084
  %v4465 = vunpack.c.h.b16 %v3084
  %v4466 = vunpack.c.l.b16 %v3085
  %v4467 = vunpack.c.h.b16 %v3085
  %v4468 = vunpack.c.l.b16 %v3086
  %v4469 = vunpack.c.l.b16 %v3087
  %v4470 = vunpack.c.h.b16 %v3087
  %v4471 = vunpack.c.l.b16 %v3088
  %v4472 = vunpack.c.h.b16 %v3088
  %v4473 = vunpack.c.l.b16 %v3089
  %v4474 = vunpack.c.h.b16 %v3089
  %v4475 = vunpack.c.l.b16 %v3090
  %v4476 = vunpack.c.l.b16 %v3091
  %v4477 = vunpack.c.h.b16 %v3091
  %v4478 = vunpack.c.l.b16 %v3092
  %v4479 = vunpack.c.h.b16 %v3092
  %v4480 = vunpack.c.l.b16 %v3093
  %v4481 = vunpack.c.h.b16 %v3093
  %v4482 = vunpack.c.l.b16 %v3094
  %v4483 = vunpack.c.l.b16 %v3095
  %v4484 = vunpack.c.h.b16 %v3095
  %v4485 = vunpack.c.l.b16 %v3096
  %v4486 = vunpack.c.h.b16 %v3096
  %v4487 = vunpack.c.l.b16 %v3097
  %v4488 = vunpack.c.h.b16 %v3097
  %v4489 = vunpack.c.l.b16 %v3098
  %v4490 = vunpack.c.l.b16 %v3099
  %v4491 = vunpack.c.h.b16 %v3099
  %v4492 = vunpack.c.l.b16 %v3100
  %v4493 = vunpack.c.h.b16 %v3100
  %v4494 = vunpack.c.l.b16 %v3101
  %v4495 = vunpack.c.h.b16 %v3101
  %v4496 = vunpack.c.l.b16 %v3102
  %v4497 = vunpack.c.l.b16 %v3103
  %v4498 = vunpack.c.h.b16 %v3103
  %v4499 = vunpack.c.l.b16 %v3104
  %v4500 = vunpack.c.h.b16 %v3104
  %v4501 = vunpack.c.l.b16 %v3105
  %v4502 = vunpack.c.h.b16 %v3105
  %v4503 = vunpack.c.l.b16 %v3106
  %v4504 = vunpack.c.l.b16 %v3107
  %v4505 = vunpack.c.h.b16 %v3107
  %v4506 = vunpack.c.l.b16 %v3108
  %v4507 = vunpack.c.h.b16 %v3108
  %v4508 = vunpack.c.l.b16 %v3109
  %v4509 = vunpack.c.h.b16 %v3109
  %v4510 = vunpack.c.l.b16 %v3110
  %v4511 = vunpack.c.l.b16 %v3111
  %v4512 = vunpack.c.h.b16 %v3111
  %v4513 = vunpack.c.l.b16 %v3112
  %v4514 = vunpack.c.h.b16 %v3112
  %v4515 = vunpack.c.l.b16 %v3113
  %v4516 = vunpack.c.h.b16 %v3113
  %v4517 = vunpack.c.l.b16 %v3114
  %v4518 = vunpack.c.l.b16 %v3115
  %v4519 = vunpack.c.h.b16 %v3115
  %v4520 = vunpack.c.l.b16 %v3116
  %v4521 = vunpack.c.h.b16 %v3116
  %v4522 = vunpack.c.l.b16 %v3117
  %v4523 = vunpack.c.h.b16 %v3117
  %v4524 = vunpack.c.l.b16 %v3118
  %v4525 = vunpack.c.l.b16 %v3119
  %v4526 = vunpack.c.h.b16 %v3119
  %v4527 = vunpack.c.l.b16 %v3120
  %v4528 = vunpack.c.h.b16 %v3120
  %v4529 = vunpack.c.l.b16 %v3121
  %v4530 = vunpack.c.h.b16 %v3121
  %v4531 = vunpack.c.l.b16 %v3122
  %v4532 = vunpack.c.l.b16 %v3123
  %v4533 = vunpack.c.h.b16 %v3123
  %v4534 = vunpack.c.l.b16 %v3124
  %v4535 = vunpack.c.h.b16 %v3124
  %v4536 = vunpack.c.l.b16 %v3125
  %v4537 = vunpack.c.h.b16 %v3125
  %v4538 = vunpack.c.l.b16 %v3126
  %v4539 = vunpack.c.l.b16 %v3127
  %v4540 = vunpack.c.h.b16 %v3127
  %v4541 = vunpack.c.l.b16 %v3128
  %v4542 = vunpack.c.h.b16 %v3128
  %v4543 = vunpack.c.l.b16 %v3129
  %v4544 = vunpack.c.h.b16 %v3129
  %v4545 = vunpack.c.l.b16 %v3130
  %v4546 = vunpack.c.l.b16 %v3131
  %v4547 = vunpack.c.h.b16 %v3131
  %v4548 = vunpack.c.l.b16 %v3132
  %v4549 = vunpack.c.h.b16 %v3132
  %v4550 = vunpack.c.l.b16 %v3133
  %v4551 = vunpack.c.h.b16 %v3133
  %v4552 = vunpack.c.l.b16 %v3134
  %v4553 = vunpack.c.l.b16 %v3135
  %v4554 = vunpack.c.h.b16 %v3135
  %v4555 = vunpack.c.l.b16 %v3136
  %v4556 = vunpack.c.h.b16 %v3136
  %v4557 = vunpack.c.l.b16 %v3137
  %v4558 = vunpack.c.h.b16 %v3137
  %v4559 = vunpack.c.l.b16 %v3138
  %v4560 = vunpack.c.l.b16 %v3139
  %v4561 = vunpack.c.h.b16 %v3139
  %v4562 = vunpack.c.l.b16 %v3140
  %v4563 = vunpack.c.h.b16 %v3140
  %v4564 = vunpack.c.l.b16 %v3141
  %v4565 = vunpack.c.h.b16 %v3141
  %v4566 = vunpack.c.l.b16 %v3142
  %v4567 = vunpack.c.l.b16 %v3143
  %v4568 = vunpack.c.h.b16 %v3143
  %v4569 = vunpack.c.l.b16 %v3144
  %v4570 = vunpack.c.h.b16 %v3144
  %v4571 = vunpack.c.l.b16 %v3145
  %v4572 = vunpack.c.h.b16 %v3145
  %v4573 = vunpack.c.l.b16 %v3146
  %v4574 = vunpack.c.l.b16 %v3147
  %v4575 = vunpack.c.h.b16 %v3147
  %v4576 = vunpack.c.l.b16 %v3148
  %v4577 = vunpack.c.h.b16 %v3148
  %v4578 = vunpack.c.l.b16 %v3149
  %v4579 = vunpack.c.h.b16 %v3149
  %v4580 = vunpack.c.l.b16 %v3150
  %v4581 = vunpack.c.l.b16 %v3151
  %v4582 = vunpack.c.h.b16 %v3151
  %v4583 = vunpack.c.l.b16 %v3152
  %v4584 = vunpack.c.h.b16 %v3152
  %v4585 = vunpack.c.l.b16 %v3153
  %v4586 = vunpack.c.h.b16 %v3153
  %v4587 = vunpack.c.l.b16 %v3154
  %v4588 = vunpack.c.l.b16 %v3155
  %v4589 = vunpack.c.h.b16 %v3155
  %v4590 = vunpack.c.l.b16 %v3156
  %v4591 = vunpack.c.h.b16 %v3156
  %v4592 = vunpack.c.l.b16 %v3157
  %v4593 = vunpack.c.h.b16 %v3157
  %v4594 = vunpack.c.l.b16 %v3158
  %v4595 = vunpack.c.l.b16 %v3159
  %v4596 = vunpack.c.h.b16 %v3159
  %v4597 = vunpack.c.l.b16 %v3160
  %v4598 = vunpack.c.h.b16 %v3160
  %v4599 = vunpack.c.l.b16 %v3161
  %v4600 = vunpack.c.h.b16 %v3161
  %v4601 = vunpack.c.l.b16 %v3162
  %v4602 = vunpack.c.l.b16 %v3163
  %v4603 = vunpack.c.h.b16 %v3163
  %v4604 = vunpack.c.l.b16 %v3164
  %v4605 = vunpack.c.h.b16 %v3164
  %v4606 = vunpack.c.l.b16 %v3165
  %v4607 = vunpack.c.h.b16 %v3165
  %v4608 = vunpack.c.l.b16 %v3166
  %v4609 = vunpack.c.l.b16 %v3167
  %v4610 = vunpack.c.h.b16 %v3167
  %v4611 = vunpack.c.l.b16 %v3168
  %v4612 = vunpack.c.h.b16 %v3168
  %v4613 = vunpack.c.l.b16 %v3169
  %v4614 = vunpack.c.h.b16 %v3169
  %v4615 = vunpack.c.l.b16 %v3170
  %v4616 = vpack.c.b16 %v3727, %v3720
  %v4617 = vpack.c.b16 %v3728, %v3721
  %v4618 = vpack.c.b16 %v3729, %v3722
  %v4619 = vpack.c.b16 %v3730, %v3723
  %v4620 = vpack.c.b16 %v3731, %v3724
  %v4621 = vpack.c.b16 %v3732, %v3725
  %v4622 = vpack.c.b16 %v3733, %v3726
  %v4623 = vpack.c.b16 %v3741, %v3734
  %v4624 = vpack.c.b16 %v3742, %v3735
  %v4625 = vpack.c.b16 %v3743, %v3736
  %v4626 = vpack.c.b16 %v3744, %v3737
  %v4627 = vpack.c.b16 %v3745, %v3738
  %v4628 = vpack.c.b16 %v3746, %v3739
  %v4629 = vpack.c.b16 %v3747, %v3740
  %v4630 = vpack.c.b16 %v3755, %v3748
  %v4631 = vpack.c.b16 %v3756, %v3749
  %v4632 = vpack.c.b16 %v3757, %v3750
  %v4633 = vpack.c.b16 %v3758, %v3751
  %v4634 = vpack.c.b16 %v3759, %v3752
  %v4635 = vpack.c.b16 %v3760, %v3753
  %v4636 = vpack.c.b16 %v3761, %v3754
  %v4637 = vpack.c.b16 %v3769, %v3762
  %v4638 = vpack.c.b16 %v3770, %v3763
  %v4639 = vpack.c.b16 %v3771, %v3764
  %v4640 = vpack.c.b16 %v3772, %v3765
  %v4641 = vpack.c.b16 %v3773, %v3766
  %v4642 = vpack.c.b16 %v3774, %v3767
  %v4643 = vpack.c.b16 %v3775, %v3768
  %v4644 = vpack.c.b16 %v3783, %v3776
  %v4645 = vpack.c.b16 %v3784, %v3777
  %v4646 = vpack.c.b16 %v3785, %v3778
  %v4647 = vpack.c.b16 %v3786, %v3779
  %v4648 = vpack.c.b16 %v3787, %v3780
  %v4649 = vpack.c.b16 %v3788, %v3781
  %v4650 = vpack.c.b16 %v3789, %v3782
  %v4651 = vpack.c.b16 %v3797, %v3790
  %v4652 = vpack.c.b16 %v3798, %v3791
  %v4653 = vpack.c.b16 %v3799, %v3792
  %v4654 = vpack.c.b16 %v3800, %v3793
  %v4655 = vpack.c.b16 %v3801, %v3794
  %v4656 = vpack.c.b16 %v3802, %v3795
  %v4657 = vpack.c.b16 %v3803, %v3796
  %v4658 = vpack.c.b16 %v3811, %v3804
  %v4659 = vpack.c.b16 %v3812, %v3805
  %v4660 = vpack.c.b16 %v3813, %v3806
  %v4661 = vpack.c.b16 %v3814, %v3807
  %v4662 = vpack.c.b16 %v3815, %v3808
  %v4663 = vpack.c.b16 %v3816, %v3809
  %v4664 = vpack.c.b16 %v3817, %v3810
  %v4665 = vpack.c.b16 %v3825, %v3818
  %v4666 = vpack.c.b16 %v3826, %v3819
  %v4667 = vpack.c.b16 %v3827, %v3820
  %v4668 = vpack.c.b16 %v3828, %v3821
  %v4669 = vpack.c.b16 %v3829, %v3822
  %v4670 = vpack.c.b16 %v3830, %v3823
  %v4671 = vpack.c.b16 %v3831, %v3824
  %v4672 = vpack.c.b16 %v3839, %v3832
  %v4673 = vpack.c.b16 %v3840, %v3833
  %v4674 = vpack.c.b16 %v3841, %v3834
  %v4675 = vpack.c.b16 %v3842, %v3835
  %v4676 = vpack.c.b16 %v3843, %v3836
  %v4677 = vpack.c.b16 %v3844, %v3837
  %v4678 = vpack.c.b16 %v3845, %v3838
  %v4679 = vpack.c.b16 %v3853, %v3846
  %v4680 = vpack.c.b16 %v3854, %v3847
  %v4681 = vpack.c.b16 %v3855, %v3848
  %v4682 = vpack.c.b16 %v3856, %v3849
  %v4683 = vpack.c.b16 %v3857, %v3850
  %v4684 = vpack.c.b16 %v3858, %v3851
  %v4685 = vpack.c.b16 %v3859, %v3852
  %v4686 = vpack.c.b16 %v3867, %v3860
  %v4687 = vpack.c.b16 %v3868, %v3861
  %v4688 = vpack.c.b16 %v3869, %v3862
  %v4689 = vpack.c.b16 %v3870, %v3863
  %v4690 = vpack.c.b16 %v3871, %v3864
  %v4691 = vpack.c.b16 %v3872, %v3865
  %v4692 = vpack.c.b16 %v3873, %v3866
  %v4693 = vpack.c.b16 %v3881, %v3874
  %v4694 = vpack.c.b16 %v3882, %v3875
  %v4695 = vpack.c.b16 %v3883, %v3876
  %v4696 = vpack.c.b16 %v3884, %v3877
  %v4697 = vpack.c.b16 %v3885, %v3878
  %v4698 = vpack.c.b16 %v3886, %v3879
  %v4699 = vpack.c.b16 %v3887, %v3880
  %v4700 = vpack.c.b16 %v3895, %v3888
  %v4701 = vpack.c.b16 %v3896, %v3889
  %v4702 = vpack.c.b16 %v3897, %v3890
  %v4703 = vpack.c.b16 %v3898, %v3891
  %v4704 = vpack.c.b16 %v3899, %v3892
  %v4705 = vpack.c.b16 %v3900, %v3893
  %v4706 = vpack.c.b16 %v3901, %v3894
  %v4707 = vpack.c.b16 %v3909, %v3902
  %v4708 = vpack.c.b16 %v3910, %v3903
  %v4709 = vpack.c.b16 %v3911, %v3904
  %v4710 = vpack.c.b16 %v3912, %v3905
  %v4711 = vpack.c.b16 %v3913, %v3906
  %v4712 = vpack.c.b16 %v3914, %v3907
  %v4713 = vpack.c.b16 %v3915, %v3908
  %v4714 = vpack.c.b16 %v3923, %v3916
  %v4715 = vpack.c.b16 %v3924, %v3917
  %v4716 = vpack.c.b16 %v3925, %v3918
  %v4717 = vpack.c.b16 %v3926, %v3919
  %v4718 = vpack.c.b16 %v3927, %v3920
  %v4719 = vpack.c.b16 %v3928, %v3921
  %v4720 = vpack.c.b16 %v3929, %v3922
  %v4721 = vpack.c.b16 %v3937, %v3930
  %v4722 = vpack.c.b16 %v3938, %v3931
  %v4723 = vpack.c.b16 %v3939, %v3932
  %v4724 = vpack.c.b16 %v3940, %v3933
  %v4725 = vpack.c.b16 %v3941, %v3934
  %v4726 = vpack.c.b16 %v3942, %v3935
  %v4727 = vpack.c.b16 %v3943, %v3936
  %v4728 = vpack.c.b16 %v3951, %v3944
  %v4729 = vpack.c.b16 %v3952, %v3945
  %v4730 = vpack.c.b16 %v3953, %v3946
  %v4731 = vpack.c.b16 %v3954, %v3947
  %v4732 = vpack.c.b16 %v3955, %v3948
  %v4733 = vpack.c.b16 %v3956, %v3949
  %v4734 = vpack.c.b16 %v3957, %v3950
  %v4735 = vpack.c.b16 %v3965, %v3958
  %v4736 = vpack.c.b16 %v3966, %v3959
  %v4737 = vpack.c.b16 %v3967, %v3960
  %v4738 = vpack.c.b16 %v3968, %v3961
  %v4739 = vpack.c.b16 %v3969, %v3962
  %v4740 = vpack.c.b16 %v3970, %v3963
  %v4741 = vpack.c.b16 %v3971, %v3964
  %v4742 = vpack.c.b16 %v3979, %v3972
  %v4743 = vpack.c.b16 %v3980, %v3973
  %v4744 = vpack.c.b16 %v3981, %v3974
  %v4745 = vpack.c.b16 %v3982, %v3975
  %v4746 = vpack.c.b16 %v3983, %v3976
  %v4747 = vpack.c.b16 %v3984, %v3977
  %v4748 = vpack.c.b16 %v3985, %v3978
  %v4749 = vpack.c.b16 %v3993, %v3986
  %v4750 = vpack.c.b16 %v3994, %v3987
  %v4751 = vpack.c.b16 %v3995, %v3988
  %v4752 = vpack.c.b16 %v3996, %v3989
  %v4753 = vpack.c.b16 %v3997, %v3990
  %v4754 = vpack.c.b16 %v3998, %v3991
  %v4755 = vpack.c.b16 %v3999, %v3992
  %v4756 = vpack.c.b16 %v4007, %v4000
  %v4757 = vpack.c.b16 %v4008, %v4001
  %v4758 = vpack.c.b16 %v4009, %v4002
  %v4759 = vpack.c.b16 %v4010, %v4003
  %v4760 = vpack.c.b16 %v4011, %v4004
  %v4761 = vpack.c.b16 %v4012, %v4005
  %v4762 = vpack.c.b16 %v4013, %v4006
  %v4763 = vpack.c.b16 %v4021, %v4014
  %v4764 = vpack.c.b16 %v4022, %v4015
  %v4765 = vpack.c.b16 %v4023, %v4016
  %v4766 = vpack.c.b16 %v4024, %v4017
  %v4767 = vpack.c.b16 %v4025, %v4018
  %v4768 = vpack.c.b16 %v4026, %v4019
  %v4769 = vpack.c.b16 %v4027, %v4020
  %v4770 = vpack.c.b16 %v4035, %v4028
  %v4771 = vpack.c.b16 %v4036, %v4029
  %v4772 = vpack.c.b16 %v4037, %v4030
  %v4773 = vpack.c.b16 %v4038, %v4031
  %v4774 = vpack.c.b16 %v4039, %v4032
  %v4775 = vpack.c.b16 %v4040, %v4033
  %v4776 = vpack.c.b16 %v4041, %v4034
  %v4777 = vpack.c.b16 %v4049, %v4042
  %v4778 = vpack.c.b16 %v4050, %v4043
  %v4779 = vpack.c.b16 %v4051, %v4044
  %v4780 = vpack.c.b16 %v4052, %v4045
  %v4781 = vpack.c.b16 %v4053, %v4046
  %v4782 = vpack.c.b16 %v4054, %v4047
  %v4783 = vpack.c.b16 %v4055, %v4048
  %v4784 = vpack.c.b16 %v4063, %v4056
  %v4785 = vpack.c.b16 %v4064, %v4057
  %v4786 = vpack.c.b16 %v4065, %v4058
  %v4787 = vpack.c.b16 %v4066, %v4059
  %v4788 = vpack.c.b16 %v4067, %v4060
  %v4789 = vpack.c.b16 %v4068, %v4061
  %v4790 = vpack.c.b16 %v4069, %v4062
  %v4791 = vpack.c.b16 %v4077, %v4070
  %v4792 = vpack.c.b16 %v4078, %v4071
  %v4793 = vpack.c.b16 %v4079, %v4072
  %v4794 = vpack.c.b16 %v4080, %v4073
  %v4795 = vpack.c.b16 %v4081, %v4074
  %v4796 = vpack.c.b16 %v4082, %v4075
  %v4797 = vpack.c.b16 %v4083, %v4076
  %v4798 = vpack.c.b16 %v4091, %v4084
  %v4799 = vpack.c.b16 %v4092, %v4085
  %v4800 = vpack.c.b16 %v4093, %v4086
  %v4801 = vpack.c.b16 %v4094, %v4087
  %v4802 = vpack.c.b16 %v4095, %v4088
  %v4803 = vpack.c.b16 %v4096, %v4089
  %v4804 = vpack.c.b16 %v4097, %v4090
  %v4805 = vpack.c.b16 %v4105, %v4098
  %v4806 = vpack.c.b16 %v4106, %v4099
  %v4807 = vpack.c.b16 %v4107, %v4100
  %v4808 = vpack.c.b16 %v4108, %v4101
  %v4809 = vpack.c.b16 %v4109, %v4102
  %v4810 = vpack.c.b16 %v4110, %v4103
  %v4811 = vpack.c.b16 %v4111, %v4104
  %v4812 = vpack.c.b16 %v4119, %v4112
  %v4813 = vpack.c.b16 %v4120, %v4113
  %v4814 = vpack.c.b16 %v4121, %v4114
  %v4815 = vpack.c.b16 %v4122, %v4115
  %v4816 = vpack.c.b16 %v4123, %v4116
  %v4817 = vpack.c.b16 %v4124, %v4117
  %v4818 = vpack.c.b16 %v4125, %v4118
  %v4819 = vpack.c.b16 %v4133, %v4126
  %v4820 = vpack.c.b16 %v4134, %v4127
  %v4821 = vpack.c.b16 %v4135, %v4128
  %v4822 = vpack.c.b16 %v4136, %v4129
  %v4823 = vpack.c.b16 %v4137, %v4130
  %v4824 = vpack.c.b16 %v4138, %v4131
  %v4825 = vpack.c.b16 %v4139, %v4132
  %v4826 = vpack.c.b16 %v4147, %v4140
  %v4827 = vpack.c.b16 %v4148, %v4141
  %v4828 = vpack.c.b16 %v4149, %v4142
  %v4829 = vpack.c.b16 %v4150, %v4143
  %v4830 = vpack.c.b16 %v4151, %v4144
  %v4831 = vpack.c.b16 %v4152, %v4145
  %v4832 = vpack.c.b16 %v4153, %v4146
  %v4833 = vpack.c.b16 %v4161, %v4154
  %v4834 = vpack.c.b16 %v4162, %v4155
  %v4835 = vpack.c.b16 %v4163, %v4156
  %v4836 = vpack.c.b16 %v4164, %v4157
  %v4837 = vpack.c.b16 %v4165, %v4158
  %v4838 = vpack.c.b16 %v4166, %v4159
  %v4839 = vpack.c.b16 %v4167, %v4160
  %v4840 = vpack.c.b16 %v4175, %v4168
  %v4841 = vpack.c.b16 %v4176, %v4169
  %v4842 = vpack.c.b16 %v4177, %v4170
  %v4843 = vpack.c.b16 %v4178, %v4171
  %v4844 = vpack.c.b16 %v4179, %v4172
  %v4845 = vpack.c.b16 %v4180, %v4173
  %v4846 = vpack.c.b16 %v4181, %v4174
  %v4847 = vpack.c.b16 %v4189, %v4182
  %v4848 = vpack.c.b16 %v4190, %v4183
  %v4849 = vpack.c.b16 %v4191, %v4184
  %v4850 = vpack.c.b16 %v4192, %v4185
  %v4851 = vpack.c.b16 %v4193, %v4186
  %v4852 = vpack.c.b16 %v4194, %v4187
  %v4853 = vpack.c.b16 %v4195, %v4188
  %v4854 = vpack.c.b16 %v4203, %v4196
  %v4855 = vpack.c.b16 %v4204, %v4197
  %v4856 = vpack.c.b16 %v4205, %v4198
  %v4857 = vpack.c.b16 %v4206, %v4199
  %v4858 = vpack.c.b16 %v4207, %v4200
  %v4859 = vpack.c.b16 %v4208, %v4201
  %v4860 = vpack.c.b16 %v4209, %v4202
  %v4861 = vpack.c.b16 %v4217, %v4210
  %v4862 = vpack.c.b16 %v4218, %v4211
  %v4863 = vpack.c.b16 %v4219, %v4212
  %v4864 = vpack.c.b16 %v4220, %v4213
  %v4865 = vpack.c.b16 %v4221, %v4214
  %v4866 = vpack.c.b16 %v4222, %v4215
  %v4867 = vpack.c.b16 %v4223, %v4216
  %v4868 = vpack.c.b16 %v4231, %v4224
  %v4869 = vpack.c.b16 %v4232, %v4225
  %v4870 = vpack.c.b16 %v4233, %v4226
  %v4871 = vpack.c.b16 %v4234, %v4227
  %v4872 = vpack.c.b16 %v4235, %v4228
  %v4873 = vpack.c.b16 %v4236, %v4229
  %v4874 = vpack.c.b16 %v4237, %v4230
  %v4875 = vpack.c.b16 %v4245, %v4238
  %v4876 = vpack.c.b16 %v4246, %v4239
  %v4877 = vpack.c.b16 %v4247, %v4240
  %v4878 = vpack.c.b16 %v4248, %v4241
  %v4879 = vpack.c.b16 %v4249, %v4242
  %v4880 = vpack.c.b16 %v4250, %v4243
  %v4881 = vpack.c.b16 %v4251, %v4244
  %v4882 = vpack.c.b16 %v4259, %v4252
  %v4883 = vpack.c.b16 %v4260, %v4253
  %v4884 = vpack.c.b16 %v4261, %v4254
  %v4885 = vpack.c.b16 %v4262, %v4255
  %v4886 = vpack.c.b16 %v4263, %v4256
  %v4887 = vpack.c.b16 %v4264, %v4257
  %v4888 = vpack.c.b16 %v4265, %v4258
  %v4889 = vpack.c.b16 %v4273, %v4266
  %v4890 = vpack.c.b16 %v4274, %v4267
  %v4891 = vpack.c.b16 %v4275, %v4268
  %v4892 = vpack.c.b16 %v4276, %v4269
  %v4893 = vpack.c.b16 %v4277, %v4270
  %v4894 = vpack.c.b16 %v4278, %v4271
  %v4895 = vpack.c.b16 %v4279, %v4272
  %v4896 = vpack.c.b16 %v4287, %v4280
  %v4897 = vpack.c.b16 %v4288, %v4281
  %v4898 = vpack.c.b16 %v4289, %v4282
  %v4899 = vpack.c.b16 %v4290, %v4283
  %v4900 = vpack.c.b16 %v4291, %v4284
  %v4901 = vpack.c.b16 %v4292, %v4285
  %v4902 = vpack.c.b16 %v4293, %v4286
  %v4903 = vpack.c.b16 %v4301, %v4294
  %v4904 = vpack.c.b16 %v4302, %v4295
  %v4905 = vpack.c.b16 %v4303, %v4296
  %v4906 = vpack.c.b16 %v4304, %v4297
  %v4907 = vpack.c.b16 %v4305, %v4298
  %v4908 = vpack.c.b16 %v4306, %v4299
  %v4909 = vpack.c.b16 %v4307, %v4300
  %v4910 = vpack.c.b16 %v4315, %v4308
  %v4911 = vpack.c.b16 %v4316, %v4309
  %v4912 = vpack.c.b16 %v4317, %v4310
  %v4913 = vpack.c.b16 %v4318, %v4311
  %v4914 = vpack.c.b16 %v4319, %v4312
  %v4915 = vpack.c.b16 %v4320, %v4313
  %v4916 = vpack.c.b16 %v4321, %v4314
  %v4917 = vpack.c.b16 %v4329, %v4322
  %v4918 = vpack.c.b16 %v4330, %v4323
  %v4919 = vpack.c.b16 %v4331, %v4324
  %v4920 = vpack.c.b16 %v4332, %v4325
  %v4921 = vpack.c.b16 %v4333, %v4326
  %v4922 = vpack.c.b16 %v4334, %v4327
  %v4923 = vpack.c.b16 %v4335, %v4328
  %v4924 = vpack.c.b16 %v4343, %v4336
  %v4925 = vpack.c.b16 %v4344, %v4337
  %v4926 = vpack.c.b16 %v4345, %v4338
  %v4927 = vpack.c.b16 %v4346, %v4339
  %v4928 = vpack.c.b16 %v4347, %v4340
  %v4929 = vpack.c.b16 %v4348, %v4341
  %v4930 = vpack.c.b16 %v4349, %v4342
  %v4931 = vpack.c.b16 %v4357, %v4350
  %v4932 = vpack.c.b16 %v4358, %v4351
  %v4933 = vpack.c.b16 %v4359, %v4352
  %v4934 = vpack.c.b16 %v4360, %v4353
  %v4935 = vpack.c.b16 %v4361, %v4354
  %v4936 = vpack.c.b16 %v4362, %v4355
  %v4937 = vpack.c.b16 %v4363, %v4356
  %v4938 = vpack.c.b16 %v4371, %v4364
  %v4939 = vpack.c.b16 %v4372, %v4365
  %v4940 = vpack.c.b16 %v4373, %v4366
  %v4941 = vpack.c.b16 %v4374, %v4367
  %v4942 = vpack.c.b16 %v4375, %v4368
  %v4943 = vpack.c.b16 %v4376, %v4369
  %v4944 = vpack.c.b16 %v4377, %v4370
  %v4945 = vpack.c.b16 %v4385, %v4378
  %v4946 = vpack.c.b16 %v4386, %v4379
  %v4947 = vpack.c.b16 %v4387, %v4380
  %v4948 = vpack.c.b16 %v4388, %v4381
  %v4949 = vpack.c.b16 %v4389, %v4382
  %v4950 = vpack.c.b16 %v4390, %v4383
  %v4951 = vpack.c.b16 %v4391, %v4384
  %v4952 = vpack.c.b16 %v4399, %v4392
  %v4953 = vpack.c.b16 %v4400, %v4393
  %v4954 = vpack.c.b16 %v4401, %v4394
  %v4955 = vpack.c.b16 %v4402, %v4395
  %v4956 = vpack.c.b16 %v4403, %v4396
  %v4957 = vpack.c.b16 %v4404, %v4397
  %v4958 = vpack.c.b16 %v4405, %v4398
  %v4959 = vpack.c.b16 %v4413, %v4406
  %v4960 = vpack.c.b16 %v4414, %v4407
  %v4961 = vpack.c.b16 %v4415, %v4408
  %v4962 = vpack.c.b16 %v4416, %v4409
  %v4963 = vpack.c.b16 %v4417, %v4410
  %v4964 = vpack.c.b16 %v4418, %v4411
  %v4965 = vpack.c.b16 %v4419, %v4412
  %v4966 = vpack.c.b16 %v4427, %v4420
  %v4967 = vpack.c.b16 %v4428, %v4421
  %v4968 = vpack.c.b16 %v4429, %v4422
  %v4969 = vpack.c.b16 %v4430, %v4423
  %v4970 = vpack.c.b16 %v4431, %v4424
  %v4971 = vpack.c.b16 %v4432, %v4425
  %v4972 = vpack.c.b16 %v4433, %v4426
  %v4973 = vpack.c.b16 %v4441, %v4434
  %v4974 = vpack.c.b16 %v4442, %v4435
  %v4975 = vpack.c.b16 %v4443, %v4436
  %v4976 = vpack.c.b16 %v4444, %v4437
  %v4977 = vpack.c.b16 %v4445, %v4438
  %v4978 = vpack.c.b16 %v4446, %v4439
  %v4979 = vpack.c.b16 %v4447, %v4440
  %v4980 = vpack.c.b16 %v4455, %v4448
  %v4981 = vpack.c.b16 %v4456, %v4449
  %v4982 = vpack.c.b16 %v4457, %v4450
  %v4983 = vpack.c.b16 %v4458, %v4451
  %v4984 = vpack.c.b16 %v4459, %v4452
  %v4985 = vpack.c.b16 %v4460, %v4453
  %v4986 = vpack.c.b16 %v4461, %v4454
  %v4987 = vpack.c.b16 %v4469, %v4462
  %v4988 = vpack.c.b16 %v4470, %v4463
  %v4989 = vpack.c.b16 %v4471, %v4464
  %v4990 = vpack.c.b16 %v4472, %v4465
  %v4991 = vpack.c.b16 %v4473, %v4466
  %v4992 = vpack.c.b16 %v4474, %v4467
  %v4993 = vpack.c.b16 %v4475, %v4468
  %v4994 = vpack.c.b16 %v4483, %v4476
  %v4995 = vpack.c.b16 %v4484, %v4477
  %v4996 = vpack.c.b16 %v4485, %v4478
  %v4997 = vpack.c.b16 %v4486, %v4479
  %v4998 = vpack.c.b16 %v4487, %v4480
  %v4999 = vpack.c.b16 %v4488, %v4481
  %v5000 = vpack.c.b16 %v4489, %v4482
  %v5001 = vpack.c.b16 %v4497, %v4490
  %v5002 = vpack.c.b16 %v4498, %v4491
  %v5003 = vpack.c.b16 %v4499, %v4492
  %v5004 = vpack.c.b16 %v4500, %v4493
  %v5005 = vpack.c.b16 %v4501, %v4494
  %v5006 = vpack.c.b16 %v4502, %v4495
  %v5007 = vpack.c.b16 %v4503, %v4496
  %v5008 = vpack.c.b16 %v4511, %v4504
  %v5009 = vpack.c.b16 %v4512, %v4505
  %v5010 = vpack.c.b16 %v4513, %v4506
  %v5011 = vpack.c.b16 %v4514, %v4507
  %v5012 = vpack.c.b16 %v4515, %v4508
  %v5013 = vpack.c.b16 %v4516, %v4509
  %v5014 = vpack.c.b16 %v4517, %v4510
  %v5015 = vpack.c.b16 %v4525, %v4518
  %v5016 = vpack.c.b16 %v4526, %v4519
  %v5017 = vpack.c.b16 %v4527, %v4520
  %v5018 = vpack.c.b16 %v4528, %v4521
  %v5019 = vpack.c.b16 %v4529, %v4522
  %v5020 = vpack.c.b16 %v4530, %v4523
  %v5021 = vpack.c.b16 %v4531, %v4524
  %v5022 = vpack.c.b16 %v4539, %v4532
  %v5023 = vpack.c.b16 %v4540, %v4533
  %v5024 = vpack.c.b16 %v4541, %v4534
  %v5025 = vpack.c.b16 %v4542, %v4535
  %v5026 = vpack.c.b16 %v4543, %v4536
  %v5027 = vpack.c.b16 %v4544, %v4537
  %v5028 = vpack.c.b16 %v4545, %v4538
  %v5029 = vpack.c.b16 %v4553, %v4546
  %v5030 = vpack.c.b16 %v4554, %v4547
  %v5031 = vpack.c.b16 %v4555, %v4548
  %v5032 = vpack.c.b16 %v4556, %v4549
  %v5033 = vpack.c.b16 %v4557, %v4550
  %v5034 = vpack.c.b16 %v4558, %v4551
  %v5035 = vpack.c.b16 %v4559, %v4552
  %v5036 = vpack.c.b16 %v4567, %v4560
  %v5037 = vpack.c.b16 %v4568, %v4561
  %v5038 = vpack.c.b16 %v4569, %v4562
  %v5039 = vpack.c.b16 %v4570, %v4563
  %v5040 = vpack.c.b16 %v4571, %v4564
  %v5041 = vpack.c.b16 %v4572, %v4565
  %v5042 = vpack.c.b16 %v4573, %v4566
  %v5043 = vpack.c.b16 %v4581, %v4574
  %v5044 = vpack.c.b16 %v4582, %v4575
  %v5045 = vpack.c.b16 %v4583, %v4576
  %v5046 = vpack.c.b16 %v4584, %v4577
  %v5047 = vpack.c.b16 %v4585, %v4578
  %v5048 = vpack.c.b16 %v4586, %v4579
  %v5049 = vpack.c.b16 %v4587, %v4580
  %v5050 = vpack.c.b16 %v4595, %v4588
  %v5051 = vpack.c.b16 %v4596, %v4589
  %v5052 = vpack.c.b16 %v4597, %v4590
  %v5053 = vpack.c.b16 %v4598, %v4591
  %v5054 = vpack.c.b16 %v4599, %v4592
  %v5055 = vpack.c.b16 %v4600, %v4593
  %v5056 = vpack.c.b16 %v4601, %v4594
  %v5057 = vpack.c.b16 %v4609, %v4602
  %v5058 = vpack.c.b16 %v4610, %v4603
  %v5059 = vpack.c.b16 %v4611, %v4604
  %v5060 = vpack.c.b16 %v4612, %v4605
  %v5061 = vpack.c.b16 %v4613, %v4606
  %v5062 = vpack.c.b16 %v4614, %v4607
  %v5063 = vpack.c.b16 %v4615, %v4608
  %5512 = vmatprep.subr.bf16.mxu0 %v4666
  %5513 = vmatpush1.bf16.msra.mxu0 %v4665
  %5514 = vmatprep.subr.bf16.mxu0 %v4659
  %5515 = vmatpush1.bf16.msra.mxu0 %v4658
  %5516 = vmatprep.subr.bf16.mxu0 %v4652
  %5517 = vmatpush1.bf16.msra.mxu0 %v4651
  %5518 = vmatprep.subr.bf16.mxu0 %v4645
  %5519 = vmatpush1.bf16.msra.mxu0 %v4644
  %5520 = vmatprep.subr.bf16.mxu0 %v4638
  %5521 = vmatpush1.bf16.msra.mxu0 %v4637
  %5522 = vmatprep.subr.bf16.mxu0 %v4631
  %5523 = vmatpush1.bf16.msra.mxu0 %v4630
  %5524 = vmatprep.subr.bf16.mxu0 %v4624
  %5525 = vmatpush1.bf16.msra.mxu0 %v4623
  %5526 = vmatprep.subr.bf16.mxu0 %v4617
  %5527 = vmatpush1.bf16.msra.mxu0 %v4616
  %5528 = vmatprep.subr.bf16.mxu0 %v4722
  %5529 = vmatpush2.bf16.msra.mxu0 %v4721
  %5530 = vmatprep.subr.bf16.mxu0 %v4715
  %5531 = vmatpush2.bf16.msra.mxu0 %v4714
  %5532 = vmatprep.subr.bf16.mxu0 %v4708
  %5533 = vmatpush2.bf16.msra.mxu0 %v4707
  %5534 = vmatprep.subr.bf16.mxu0 %v4701
  %5535 = vmatpush2.bf16.msra.mxu0 %v4700
  %5536 = vmatprep.subr.bf16.mxu0 %v4694
  %5537 = vmatpush2.bf16.msra.mxu0 %v4693
  %5538 = vmatprep.subr.bf16.mxu0 %v4687
  %5539 = vmatpush2.bf16.msra.mxu0 %v4686
  %5540 = vmatprep.subr.bf16.mxu0 %v4680
  %5541 = vmatpush2.bf16.msra.mxu0 %v4679
  %5542 = vmatprep.subr.bf16.mxu0 %v4673
  %5543 = vmatpush2.bf16.msra.mxu0 %v4672
  %5544 = vmatprep.mubr.bf16.mxu0 %v2652
  %5545 = vmatmul.mubr.bf16.gmra.mxu0 %v2651
  %v5546 = vpop.f32.mrf.mxu0
  %v5547 = vadd.f32 %v3176, %v5546
  %v5548 = vpop.f32.mrf.mxu0
  %v5549 = vadd.f32 %v3180, %v5548
  %v5550 = vpop.f32.mrf.mxu0
  %v5551 = vadd.f32 %v3176, %v5550
  %v5552 = vpop.f32.mrf.mxu0
  %v5553 = vadd.f32 %v3180, %v5552
  %5554 = vdwg.mxu0
  %5555 = vmatprep.subr.bf16.mxu0 %v4778
  %5556 = vmatpush1.bf16.msra.mxu0 %v4777
  %5557 = vmatprep.subr.bf16.mxu0 %v4771
  %5558 = vmatpush1.bf16.msra.mxu0 %v4770
  %5559 = vmatprep.subr.bf16.mxu0 %v4764
  %5560 = vmatpush1.bf16.msra.mxu0 %v4763
  %5561 = vmatprep.subr.bf16.mxu0 %v4757
  %5562 = vmatpush1.bf16.msra.mxu0 %v4756
  %5563 = vmatprep.subr.bf16.mxu0 %v4750
  %5564 = vmatpush1.bf16.msra.mxu0 %v4749
  %5565 = vmatprep.subr.bf16.mxu0 %v4743
  %5566 = vmatpush1.bf16.msra.mxu0 %v4742
  %5567 = vmatprep.subr.bf16.mxu0 %v4736
  %5568 = vmatpush1.bf16.msra.mxu0 %v4735
  %5569 = vmatprep.subr.bf16.mxu0 %v4729
  %5570 = vmatpush1.bf16.msra.mxu0 %v4728
  %5571 = vmatprep.subr.bf16.mxu0 %v4834
  %5572 = vmatpush2.bf16.msra.mxu0 %v4833
  %5573 = vmatprep.subr.bf16.mxu0 %v4827
  %5574 = vmatpush2.bf16.msra.mxu0 %v4826
  %5575 = vmatprep.subr.bf16.mxu0 %v4820
  %5576 = vmatpush2.bf16.msra.mxu0 %v4819
  %5577 = vmatprep.subr.bf16.mxu0 %v4813
  %5578 = vmatpush2.bf16.msra.mxu0 %v4812
  %5579 = vmatprep.subr.bf16.mxu0 %v4806
  %5580 = vmatpush2.bf16.msra.mxu0 %v4805
  %5581 = vmatprep.subr.bf16.mxu0 %v4799
  %5582 = vmatpush2.bf16.msra.mxu0 %v4798
  %5583 = vmatprep.subr.bf16.mxu0 %v4792
  %5584 = vmatpush2.bf16.msra.mxu0 %v4791
  %5585 = vmatprep.subr.bf16.mxu0 %v4785
  %5586 = vmatpush2.bf16.msra.mxu0 %v4784
  %5587 = vmatprep.mubr.bf16.mxu0 %v2654
  %5588 = vmatmul.mubr.bf16.gmra.mxu0 %v2653
  %v5589 = vpop.f32.mrf.mxu0
  %v5590 = vadd.f32 %v5547, %v5589
  %v5591 = vpop.f32.mrf.mxu0
  %v5592 = vadd.f32 %v5549, %v5591
  %v5593 = vpop.f32.mrf.mxu0
  %v5594 = vadd.f32 %v5551, %v5593
  %v5595 = vpop.f32.mrf.mxu0
  %v5596 = vadd.f32 %v5553, %v5595
  %5597 = vdwg.mxu0
  %5598 = vmatprep.subr.bf16.mxu0 %v4890
  %5599 = vmatpush1.bf16.msra.mxu0 %v4889
  %5600 = vmatprep.subr.bf16.mxu0 %v4883
  %5601 = vmatpush1.bf16.msra.mxu0 %v4882
  %5602 = vmatprep.subr.bf16.mxu0 %v4876
  %5603 = vmatpush1.bf16.msra.mxu0 %v4875
  %5604 = vmatprep.subr.bf16.mxu0 %v4869
  %5605 = vmatpush1.bf16.msra.mxu0 %v4868
  %5606 = vmatprep.subr.bf16.mxu0 %v4862
  %5607 = vmatpush1.bf16.msra.mxu0 %v4861
  %5608 = vmatprep.subr.bf16.mxu0 %v4855
  %5609 = vmatpush1.bf16.msra.mxu0 %v4854
  %5610 = vmatprep.subr.bf16.mxu0 %v4848
  %5611 = vmatpush1.bf16.msra.mxu0 %v4847
  %5612 = vmatprep.subr.bf16.mxu0 %v4841
  %5613 = vmatpush1.bf16.msra.mxu0 %v4840
  %5614 = vmatprep.subr.bf16.mxu0 %v4946
  %5615 = vmatpush2.bf16.msra.mxu0 %v4945
  %5616 = vmatprep.subr.bf16.mxu0 %v4939
  %5617 = vmatpush2.bf16.msra.mxu0 %v4938
  %5618 = vmatprep.subr.bf16.mxu0 %v4932
  %5619 = vmatpush2.bf16.msra.mxu0 %v4931
  %5620 = vmatprep.subr.bf16.mxu0 %v4925
  %5621 = vmatpush2.bf16.msra.mxu0 %v4924
  %5622 = vmatprep.subr.bf16.mxu0 %v4918
  %5623 = vmatpush2.bf16.msra.mxu0 %v4917
  %5624 = vmatprep.subr.bf16.mxu0 %v4911
  %5625 = vmatpush2.bf16.msra.mxu0 %v4910
  %5626 = vmatprep.subr.bf16.mxu0 %v4904
  %5627 = vmatpush2.bf16.msra.mxu0 %v4903
  %5628 = vmatprep.subr.bf16.mxu0 %v4897
  %5629 = vmatpush2.bf16.msra.mxu0 %v4896
  %5630 = vmatprep.mubr.bf16.mxu0 %v2656
  %5631 = vmatmul.mubr.bf16.gmra.mxu0 %v2655
  %v5632 = vpop.f32.mrf.mxu0
  %v5633 = vadd.f32 %v5590, %v5632
  %v5634 = vpop.f32.mrf.mxu0
  %v5635 = vadd.f32 %v5592, %v5634
  %v5636 = vpop.f32.mrf.mxu0
  %v5637 = vadd.f32 %v5594, %v5636
  %v5638 = vpop.f32.mrf.mxu0
  %v5639 = vadd.f32 %v5596, %v5638
  %5640 = vdwg.mxu0
  %5641 = vmatprep.subr.bf16.mxu0 %v5002
  %5642 = vmatpush1.bf16.msra.mxu0 %v5001
  %5643 = vmatprep.subr.bf16.mxu0 %v4995
  %5644 = vmatpush1.bf16.msra.mxu0 %v4994
  %5645 = vmatprep.subr.bf16.mxu0 %v4988
  %5646 = vmatpush1.bf16.msra.mxu0 %v4987
  %5647 = vmatprep.subr.bf16.mxu0 %v4981
  %5648 = vmatpush1.bf16.msra.mxu0 %v4980
  %5649 = vmatprep.subr.bf16.mxu0 %v4974
  %5650 = vmatpush1.bf16.msra.mxu0 %v4973
  %5651 = vmatprep.subr.bf16.mxu0 %v4967
  %5652 = vmatpush1.bf16.msra.mxu0 %v4966
  %5653 = vmatprep.subr.bf16.mxu0 %v4960
  %5654 = vmatpush1.bf16.msra.mxu0 %v4959
  %5655 = vmatprep.subr.bf16.mxu0 %v4953
  %5656 = vmatpush1.bf16.msra.mxu0 %v4952
  %5657 = vmatprep.subr.bf16.mxu0 %v5058
  %5658 = vmatpush2.bf16.msra.mxu0 %v5057
  %5659 = vmatprep.subr.bf16.mxu0 %v5051
  %5660 = vmatpush2.bf16.msra.mxu0 %v5050
  %5661 = vmatprep.subr.bf16.mxu0 %v5044
  %5662 = vmatpush2.bf16.msra.mxu0 %v5043
  %5663 = vmatprep.subr.bf16.mxu0 %v5037
  %5664 = vmatpush2.bf16.msra.mxu0 %v5036
  %5665 = vmatprep.subr.bf16.mxu0 %v5030
  %5666 = vmatpush2.bf16.msra.mxu0 %v5029
  %5667 = vmatprep.subr.bf16.mxu0 %v5023
  %5668 = vmatpush2.bf16.msra.mxu0 %v5022
  %5669 = vmatprep.subr.bf16.mxu0 %v5016
  %5670 = vmatpush2.bf16.msra.mxu0 %v5015
  %5671 = vmatprep.subr.bf16.mxu0 %v5009
  %5672 = vmatpush2.bf16.msra.mxu0 %v5008
  %5673 = vmatprep.mubr.bf16.mxu0 %v2658
  %5674 = vmatmul.mubr.bf16.gmra.mxu0 %v2657
  %v5675 = vpop.f32.mrf.mxu0
  %v5676 = vadd.f32 %v5633, %v5675
  %v5677 = vpop.f32.mrf.mxu0
  %v5678 = vadd.f32 %v5635, %v5677
  %v5679 = vpop.f32.mrf.mxu0
  %v5680 = vadd.f32 %v5637, %v5679
  %v5681 = vpop.f32.mrf.mxu0
  %v5682 = vadd.f32 %v5639, %v5681
  %5683 = vdwg.mxu0
  %5684 = vmatprep.subr.bf16.mxu0 %v4668
  %5685 = vmatpush1.bf16.msra.mxu0 %v4667
  %5686 = vmatprep.subr.bf16.mxu0 %v4661
  %5687 = vmatpush1.bf16.msra.mxu0 %v4660
  %5688 = vmatprep.subr.bf16.mxu0 %v4654
  %5689 = vmatpush1.bf16.msra.mxu0 %v4653
  %5690 = vmatprep.subr.bf16.mxu0 %v4647
  %5691 = vmatpush1.bf16.msra.mxu0 %v4646
  %5692 = vmatprep.subr.bf16.mxu0 %v4640
  %5693 = vmatpush1.bf16.msra.mxu0 %v4639
  %5694 = vmatprep.subr.bf16.mxu0 %v4633
  %5695 = vmatpush1.bf16.msra.mxu0 %v4632
  %5696 = vmatprep.subr.bf16.mxu0 %v4626
  %5697 = vmatpush1.bf16.msra.mxu0 %v4625
  %5698 = vmatprep.subr.bf16.mxu0 %v4619
  %5699 = vmatpush1.bf16.msra.mxu0 %v4618
  %5700 = vmatprep.subr.bf16.mxu0 %v4724
  %5701 = vmatpush2.bf16.msra.mxu0 %v4723
  %5702 = vmatprep.subr.bf16.mxu0 %v4717
  %5703 = vmatpush2.bf16.msra.mxu0 %v4716
  %5704 = vmatprep.subr.bf16.mxu0 %v4710
  %5705 = vmatpush2.bf16.msra.mxu0 %v4709
  %5706 = vmatprep.subr.bf16.mxu0 %v4703
  %5707 = vmatpush2.bf16.msra.mxu0 %v4702
  %5708 = vmatprep.subr.bf16.mxu0 %v4696
  %5709 = vmatpush2.bf16.msra.mxu0 %v4695
  %5710 = vmatprep.subr.bf16.mxu0 %v4689
  %5711 = vmatpush2.bf16.msra.mxu0 %v4688
  %5712 = vmatprep.subr.bf16.mxu0 %v4682
  %5713 = vmatpush2.bf16.msra.mxu0 %v4681
  %5714 = vmatprep.subr.bf16.mxu0 %v4675
  %5715 = vmatpush2.bf16.msra.mxu0 %v4674
  %5716 = vmatprep.mubr.bf16.mxu0 %v2652
  %5717 = vmatmul.mubr.bf16.gmra.mxu0 %v2651
  %v5718 = vpop.f32.mrf.mxu0
  %v5719 = vadd.f32 %v3184, %v5718
  %v5720 = vpop.f32.mrf.mxu0
  %v5721 = vadd.f32 %v3188, %v5720
  %v5722 = vpop.f32.mrf.mxu0
  %v5723 = vadd.f32 %v3184, %v5722
  %v5724 = vpop.f32.mrf.mxu0
  %v5725 = vadd.f32 %v3188, %v5724
  %5726 = vdwg.mxu0
  %5727 = vmatprep.subr.bf16.mxu0 %v4780
  %5728 = vmatpush1.bf16.msra.mxu0 %v4779
  %5729 = vmatprep.subr.bf16.mxu0 %v4773
  %5730 = vmatpush1.bf16.msra.mxu0 %v4772
  %5731 = vmatprep.subr.bf16.mxu0 %v4766
  %5732 = vmatpush1.bf16.msra.mxu0 %v4765
  %5733 = vmatprep.subr.bf16.mxu0 %v4759
  %5734 = vmatpush1.bf16.msra.mxu0 %v4758
  %5735 = vmatprep.subr.bf16.mxu0 %v4752
  %5736 = vmatpush1.bf16.msra.mxu0 %v4751
  %5737 = vmatprep.subr.bf16.mxu0 %v4745
  %5738 = vmatpush1.bf16.msra.mxu0 %v4744
  %5739 = vmatprep.subr.bf16.mxu0 %v4738
  %5740 = vmatpush1.bf16.msra.mxu0 %v4737
  %5741 = vmatprep.subr.bf16.mxu0 %v4731
  %5742 = vmatpush1.bf16.msra.mxu0 %v4730
  %5743 = vmatprep.subr.bf16.mxu0 %v4836
  %5744 = vmatpush2.bf16.msra.mxu0 %v4835
  %5745 = vmatprep.subr.bf16.mxu0 %v4829
  %5746 = vmatpush2.bf16.msra.mxu0 %v4828
  %5747 = vmatprep.subr.bf16.mxu0 %v4822
  %5748 = vmatpush2.bf16.msra.mxu0 %v4821
  %5749 = vmatprep.subr.bf16.mxu0 %v4815
  %5750 = vmatpush2.bf16.msra.mxu0 %v4814
  %5751 = vmatprep.subr.bf16.mxu0 %v4808
  %5752 = vmatpush2.bf16.msra.mxu0 %v4807
  %5753 = vmatprep.subr.bf16.mxu0 %v4801
  %5754 = vmatpush2.bf16.msra.mxu0 %v4800
  %5755 = vmatprep.subr.bf16.mxu0 %v4794
  %5756 = vmatpush2.bf16.msra.mxu0 %v4793
  %5757 = vmatprep.subr.bf16.mxu0 %v4787
  %5758 = vmatpush2.bf16.msra.mxu0 %v4786
  %5759 = vmatprep.mubr.bf16.mxu0 %v2654
  %5760 = vmatmul.mubr.bf16.gmra.mxu0 %v2653
  %v5761 = vpop.f32.mrf.mxu0
  %v5762 = vadd.f32 %v5719, %v5761
  %v5763 = vpop.f32.mrf.mxu0
  %v5764 = vadd.f32 %v5721, %v5763
  %v5765 = vpop.f32.mrf.mxu0
  %v5766 = vadd.f32 %v5723, %v5765
  %v5767 = vpop.f32.mrf.mxu0
  %v5768 = vadd.f32 %v5725, %v5767
  %5769 = vdwg.mxu0
  %5770 = vmatprep.subr.bf16.mxu0 %v4892
  %5771 = vmatpush1.bf16.msra.mxu0 %v4891
  %5772 = vmatprep.subr.bf16.mxu0 %v4885
  %5773 = vmatpush1.bf16.msra.mxu0 %v4884
  %5774 = vmatprep.subr.bf16.mxu0 %v4878
  %5775 = vmatpush1.bf16.msra.mxu0 %v4877
  %5776 = vmatprep.subr.bf16.mxu0 %v4871
  %5777 = vmatpush1.bf16.msra.mxu0 %v4870
  %5778 = vmatprep.subr.bf16.mxu0 %v4864
  %5779 = vmatpush1.bf16.msra.mxu0 %v4863
  %5780 = vmatprep.subr.bf16.mxu0 %v4857
  %5781 = vmatpush1.bf16.msra.mxu0 %v4856
  %5782 = vmatprep.subr.bf16.mxu0 %v4850
  %5783 = vmatpush1.bf16.msra.mxu0 %v4849
  %5784 = vmatprep.subr.bf16.mxu0 %v4843
  %5785 = vmatpush1.bf16.msra.mxu0 %v4842
  %5786 = vmatprep.subr.bf16.mxu0 %v4948
  %5787 = vmatpush2.bf16.msra.mxu0 %v4947
  %5788 = vmatprep.subr.bf16.mxu0 %v4941
  %5789 = vmatpush2.bf16.msra.mxu0 %v4940
  %5790 = vmatprep.subr.bf16.mxu0 %v4934
  %5791 = vmatpush2.bf16.msra.mxu0 %v4933
  %5792 = vmatprep.subr.bf16.mxu0 %v4927
  %5793 = vmatpush2.bf16.msra.mxu0 %v4926
  %5794 = vmatprep.subr.bf16.mxu0 %v4920
  %5795 = vmatpush2.bf16.msra.mxu0 %v4919
  %5796 = vmatprep.subr.bf16.mxu0 %v4913
  %5797 = vmatpush2.bf16.msra.mxu0 %v4912
  %5798 = vmatprep.subr.bf16.mxu0 %v4906
  %5799 = vmatpush2.bf16.msra.mxu0 %v4905
  %5800 = vmatprep.subr.bf16.mxu0 %v4899
  %5801 = vmatpush2.bf16.msra.mxu0 %v4898
  %5802 = vmatprep.mubr.bf16.mxu0 %v2656
  %5803 = vmatmul.mubr.bf16.gmra.mxu0 %v2655
  %v5804 = vpop.f32.mrf.mxu0
  %v5805 = vadd.f32 %v5762, %v5804
  %v5806 = vpop.f32.mrf.mxu0
  %v5807 = vadd.f32 %v5764, %v5806
  %v5808 = vpop.f32.mrf.mxu0
  %v5809 = vadd.f32 %v5766, %v5808
  %v5810 = vpop.f32.mrf.mxu0
  %v5811 = vadd.f32 %v5768, %v5810
  %5812 = vdwg.mxu0
  %5813 = vmatprep.subr.bf16.mxu0 %v5004
  %5814 = vmatpush1.bf16.msra.mxu0 %v5003
  %5815 = vmatprep.subr.bf16.mxu0 %v4997
  %5816 = vmatpush1.bf16.msra.mxu0 %v4996
  %5817 = vmatprep.subr.bf16.mxu0 %v4990
  %5818 = vmatpush1.bf16.msra.mxu0 %v4989
  %5819 = vmatprep.subr.bf16.mxu0 %v4983
  %5820 = vmatpush1.bf16.msra.mxu0 %v4982
  %5821 = vmatprep.subr.bf16.mxu0 %v4976
  %5822 = vmatpush1.bf16.msra.mxu0 %v4975
  %5823 = vmatprep.subr.bf16.mxu0 %v4969
  %5824 = vmatpush1.bf16.msra.mxu0 %v4968
  %5825 = vmatprep.subr.bf16.mxu0 %v4962
  %5826 = vmatpush1.bf16.msra.mxu0 %v4961
  %5827 = vmatprep.subr.bf16.mxu0 %v4955
  %5828 = vmatpush1.bf16.msra.mxu0 %v4954
  %5829 = vmatprep.subr.bf16.mxu0 %v5060
  %5830 = vmatpush2.bf16.msra.mxu0 %v5059
  %5831 = vmatprep.subr.bf16.mxu0 %v5053
  %5832 = vmatpush2.bf16.msra.mxu0 %v5052
  %5833 = vmatprep.subr.bf16.mxu0 %v5046
  %5834 = vmatpush2.bf16.msra.mxu0 %v5045
  %5835 = vmatprep.subr.bf16.mxu0 %v5039
  %5836 = vmatpush2.bf16.msra.mxu0 %v5038
  %5837 = vmatprep.subr.bf16.mxu0 %v5032
  %5838 = vmatpush2.bf16.msra.mxu0 %v5031
  %5839 = vmatprep.subr.bf16.mxu0 %v5025
  %5840 = vmatpush2.bf16.msra.mxu0 %v5024
  %5841 = vmatprep.subr.bf16.mxu0 %v5018
  %5842 = vmatpush2.bf16.msra.mxu0 %v5017
  %5843 = vmatprep.subr.bf16.mxu0 %v5011
  %5844 = vmatpush2.bf16.msra.mxu0 %v5010
  %5845 = vmatprep.mubr.bf16.mxu0 %v2658
  %5846 = vmatmul.mubr.bf16.gmra.mxu0 %v2657
  %v5847 = vpop.f32.mrf.mxu0
  %v5848 = vadd.f32 %v5805, %v5847
  %v5849 = vpop.f32.mrf.mxu0
  %v5850 = vadd.f32 %v5807, %v5849
  %v5851 = vpop.f32.mrf.mxu0
  %v5852 = vadd.f32 %v5809, %v5851
  %v5853 = vpop.f32.mrf.mxu0
  %v5854 = vadd.f32 %v5811, %v5853
  %5855 = vdwg.mxu0
  %5856 = vmatprep.subr.bf16.mxu0 %v4670
  %5857 = vmatpush1.bf16.msra.mxu0 %v4669
  %5858 = vmatprep.subr.bf16.mxu0 %v4663
  %5859 = vmatpush1.bf16.msra.mxu0 %v4662
  %5860 = vmatprep.subr.bf16.mxu0 %v4656
  %5861 = vmatpush1.bf16.msra.mxu0 %v4655
  %5862 = vmatprep.subr.bf16.mxu0 %v4649
  %5863 = vmatpush1.bf16.msra.mxu0 %v4648
  %5864 = vmatprep.subr.bf16.mxu0 %v4642
  %5865 = vmatpush1.bf16.msra.mxu0 %v4641
  %5866 = vmatprep.subr.bf16.mxu0 %v4635
  %5867 = vmatpush1.bf16.msra.mxu0 %v4634
  %5868 = vmatprep.subr.bf16.mxu0 %v4628
  %5869 = vmatpush1.bf16.msra.mxu0 %v4627
  %5870 = vmatprep.subr.bf16.mxu0 %v4621
  %5871 = vmatpush1.bf16.msra.mxu0 %v4620
  %5872 = vmatprep.subr.bf16.mxu0 %v4726
  %5873 = vmatpush2.bf16.msra.mxu0 %v4725
  %5874 = vmatprep.subr.bf16.mxu0 %v4719
  %5875 = vmatpush2.bf16.msra.mxu0 %v4718
  %5876 = vmatprep.subr.bf16.mxu0 %v4712
  %5877 = vmatpush2.bf16.msra.mxu0 %v4711
  %5878 = vmatprep.subr.bf16.mxu0 %v4705
  %5879 = vmatpush2.bf16.msra.mxu0 %v4704
  %5880 = vmatprep.subr.bf16.mxu0 %v4698
  %5881 = vmatpush2.bf16.msra.mxu0 %v4697
  %5882 = vmatprep.subr.bf16.mxu0 %v4691
  %5883 = vmatpush2.bf16.msra.mxu0 %v4690
  %5884 = vmatprep.subr.bf16.mxu0 %v4684
  %5885 = vmatpush2.bf16.msra.mxu0 %v4683
  %5886 = vmatprep.subr.bf16.mxu0 %v4677
  %5887 = vmatpush2.bf16.msra.mxu0 %v4676
  %5888 = vmatprep.mubr.bf16.mxu0 %v2652
  %5889 = vmatmul.mubr.bf16.gmra.mxu0 %v2651
  %v5890 = vpop.f32.mrf.mxu0
  %v5891 = vadd.f32 %v3192, %v5890
  %v5892 = vpop.f32.mrf.mxu0
  %v5893 = vadd.f32 %v3196, %v5892
  %v5894 = vpop.f32.mrf.mxu0
  %v5895 = vadd.f32 %v3192, %v5894
  %v5896 = vpop.f32.mrf.mxu0
  %v5897 = vadd.f32 %v3196, %v5896
  %5898 = vdwg.mxu0
  %5899 = vmatprep.subr.bf16.mxu0 %v4782
  %5900 = vmatpush1.bf16.msra.mxu0 %v4781
  %5901 = vmatprep.subr.bf16.mxu0 %v4775
  %5902 = vmatpush1.bf16.msra.mxu0 %v4774
  %5903 = vmatprep.subr.bf16.mxu0 %v4768
  %5904 = vmatpush1.bf16.msra.mxu0 %v4767
  %5905 = vmatprep.subr.bf16.mxu0 %v4761
  %5906 = vmatpush1.bf16.msra.mxu0 %v4760
  %5907 = vmatprep.subr.bf16.mxu0 %v4754
  %5908 = vmatpush1.bf16.msra.mxu0 %v4753
  %5909 = vmatprep.subr.bf16.mxu0 %v4747
  %5910 = vmatpush1.bf16.msra.mxu0 %v4746
  %5911 = vmatprep.subr.bf16.mxu0 %v4740
  %5912 = vmatpush1.bf16.msra.mxu0 %v4739
  %5913 = vmatprep.subr.bf16.mxu0 %v4733
  %5914 = vmatpush1.bf16.msra.mxu0 %v4732
  %5915 = vmatprep.subr.bf16.mxu0 %v4838
  %5916 = vmatpush2.bf16.msra.mxu0 %v4837
  %5917 = vmatprep.subr.bf16.mxu0 %v4831
  %5918 = vmatpush2.bf16.msra.mxu0 %v4830
  %5919 = vmatprep.subr.bf16.mxu0 %v4824
  %5920 = vmatpush2.bf16.msra.mxu0 %v4823
  %5921 = vmatprep.subr.bf16.mxu0 %v4817
  %5922 = vmatpush2.bf16.msra.mxu0 %v4816
  %5923 = vmatprep.subr.bf16.mxu0 %v4810
  %5924 = vmatpush2.bf16.msra.mxu0 %v4809
  %5925 = vmatprep.subr.bf16.mxu0 %v4803
  %5926 = vmatpush2.bf16.msra.mxu0 %v4802
  %5927 = vmatprep.subr.bf16.mxu0 %v4796
  %5928 = vmatpush2.bf16.msra.mxu0 %v4795
  %5929 = vmatprep.subr.bf16.mxu0 %v4789
  %5930 = vmatpush2.bf16.msra.mxu0 %v4788
  %5931 = vmatprep.mubr.bf16.mxu0 %v2654
  %5932 = vmatmul.mubr.bf16.gmra.mxu0 %v2653
  %v5933 = vpop.f32.mrf.mxu0
  %v5934 = vadd.f32 %v5891, %v5933
  %v5935 = vpop.f32.mrf.mxu0
  %v5936 = vadd.f32 %v5893, %v5935
  %v5937 = vpop.f32.mrf.mxu0
  %v5938 = vadd.f32 %v5895, %v5937
  %v5939 = vpop.f32.mrf.mxu0
  %v5940 = vadd.f32 %v5897, %v5939
  %5941 = vdwg.mxu0
  %5942 = vmatprep.subr.bf16.mxu0 %v4894
  %5943 = vmatpush1.bf16.msra.mxu0 %v4893
  %5944 = vmatprep.subr.bf16.mxu0 %v4887
  %5945 = vmatpush1.bf16.msra.mxu0 %v4886
  %5946 = vmatprep.subr.bf16.mxu0 %v4880
  %5947 = vmatpush1.bf16.msra.mxu0 %v4879
  %5948 = vmatprep.subr.bf16.mxu0 %v4873
  %5949 = vmatpush1.bf16.msra.mxu0 %v4872
  %5950 = vmatprep.subr.bf16.mxu0 %v4866
  %5951 = vmatpush1.bf16.msra.mxu0 %v4865
  %5952 = vmatprep.subr.bf16.mxu0 %v4859
  %5953 = vmatpush1.bf16.msra.mxu0 %v4858
  %5954 = vmatprep.subr.bf16.mxu0 %v4852
  %5955 = vmatpush1.bf16.msra.mxu0 %v4851
  %5956 = vmatprep.subr.bf16.mxu0 %v4845
  %5957 = vmatpush1.bf16.msra.mxu0 %v4844
  %5958 = vmatprep.subr.bf16.mxu0 %v4950
  %5959 = vmatpush2.bf16.msra.mxu0 %v4949
  %5960 = vmatprep.subr.bf16.mxu0 %v4943
  %5961 = vmatpush2.bf16.msra.mxu0 %v4942
  %5962 = vmatprep.subr.bf16.mxu0 %v4936
  %5963 = vmatpush2.bf16.msra.mxu0 %v4935
  %5964 = vmatprep.subr.bf16.mxu0 %v4929
  %5965 = vmatpush2.bf16.msra.mxu0 %v4928
  %5966 = vmatprep.subr.bf16.mxu0 %v4922
  %5967 = vmatpush2.bf16.msra.mxu0 %v4921
  %5968 = vmatprep.subr.bf16.mxu0 %v4915
  %5969 = vmatpush2.bf16.msra.mxu0 %v4914
  %5970 = vmatprep.subr.bf16.mxu0 %v4908
  %5971 = vmatpush2.bf16.msra.mxu0 %v4907
  %5972 = vmatprep.subr.bf16.mxu0 %v4901
  %5973 = vmatpush2.bf16.msra.mxu0 %v4900
  %5974 = vmatprep.mubr.bf16.mxu0 %v2656
  %5975 = vmatmul.mubr.bf16.gmra.mxu0 %v2655
  %v5976 = vpop.f32.mrf.mxu0
  %v5977 = vadd.f32 %v5934, %v5976
  %v5978 = vpop.f32.mrf.mxu0
  %v5979 = vadd.f32 %v5936, %v5978
  %v5980 = vpop.f32.mrf.mxu0
  %v5981 = vadd.f32 %v5938, %v5980
  %v5982 = vpop.f32.mrf.mxu0
  %v5983 = vadd.f32 %v5940, %v5982
  %5984 = vdwg.mxu0
  %5985 = vmatprep.subr.bf16.mxu0 %v5006
  %5986 = vmatpush1.bf16.msra.mxu0 %v5005
  %5987 = vmatprep.subr.bf16.mxu0 %v4999
  %5988 = vmatpush1.bf16.msra.mxu0 %v4998
  %5989 = vmatprep.subr.bf16.mxu0 %v4992
  %5990 = vmatpush1.bf16.msra.mxu0 %v4991
  %5991 = vmatprep.subr.bf16.mxu0 %v4985
  %5992 = vmatpush1.bf16.msra.mxu0 %v4984
  %5993 = vmatprep.subr.bf16.mxu0 %v4978
  %5994 = vmatpush1.bf16.msra.mxu0 %v4977
  %5995 = vmatprep.subr.bf16.mxu0 %v4971
  %5996 = vmatpush1.bf16.msra.mxu0 %v4970
  %5997 = vmatprep.subr.bf16.mxu0 %v4964
  %5998 = vmatpush1.bf16.msra.mxu0 %v4963
  %5999 = vmatprep.subr.bf16.mxu0 %v4957
  %6000 = vmatpush1.bf16.msra.mxu0 %v4956
  %6001 = vmatprep.subr.bf16.mxu0 %v5062
  %6002 = vmatpush2.bf16.msra.mxu0 %v5061
  %6003 = vmatprep.subr.bf16.mxu0 %v5055
  %6004 = vmatpush2.bf16.msra.mxu0 %v5054
  %6005 = vmatprep.subr.bf16.mxu0 %v5048
  %6006 = vmatpush2.bf16.msra.mxu0 %v5047
  %6007 = vmatprep.subr.bf16.mxu0 %v5041
  %6008 = vmatpush2.bf16.msra.mxu0 %v5040
  %6009 = vmatprep.subr.bf16.mxu0 %v5034
  %6010 = vmatpush2.bf16.msra.mxu0 %v5033
  %6011 = vmatprep.subr.bf16.mxu0 %v5027
  %6012 = vmatpush2.bf16.msra.mxu0 %v5026
  %6013 = vmatprep.subr.bf16.mxu0 %v5020
  %6014 = vmatpush2.bf16.msra.mxu0 %v5019
  %6015 = vmatprep.subr.bf16.mxu0 %v5013
  %6016 = vmatpush2.bf16.msra.mxu0 %v5012
  %6017 = vmatprep.mubr.bf16.mxu0 %v2658
  %6018 = vmatmul.mubr.bf16.gmra.mxu0 %v2657
  %v6019 = vpop.f32.mrf.mxu0
  %v6020 = vadd.f32 %v5977, %v6019
  %v6021 = vpop.f32.mrf.mxu0
  %v6022 = vadd.f32 %v5979, %v6021
  %v6023 = vpop.f32.mrf.mxu0
  %v6024 = vadd.f32 %v5981, %v6023
  %v6025 = vpop.f32.mrf.mxu0
  %v6026 = vadd.f32 %v5983, %v6025
  %6027 = vdwg.mxu0
  %6028 = vmatprep.subr.bf16.mxu0 0
  %6029 = vmatpush1.bf16.msra.mxu0 %v4671
  %6030 = vmatprep.subr.bf16.mxu0 0
  %6031 = vmatpush1.bf16.msra.mxu0 %v4664
  %6032 = vmatprep.subr.bf16.mxu0 0
  %6033 = vmatpush1.bf16.msra.mxu0 %v4657
  %6034 = vmatprep.subr.bf16.mxu0 0
  %6035 = vmatpush1.bf16.msra.mxu0 %v4650
  %6036 = vmatprep.subr.bf16.mxu0 0
  %6037 = vmatpush1.bf16.msra.mxu0 %v4643
  %6038 = vmatprep.subr.bf16.mxu0 0
  %6039 = vmatpush1.bf16.msra.mxu0 %v4636
  %6040 = vmatprep.subr.bf16.mxu0 0
  %6041 = vmatpush1.bf16.msra.mxu0 %v4629
  %6042 = vmatprep.subr.bf16.mxu0 0
  %6043 = vmatpush1.bf16.msra.mxu0 %v4622
  %6044 = vmatprep.subr.bf16.mxu0 0
  %6045 = vmatpush2.bf16.msra.mxu0 %v4727
  %6046 = vmatprep.subr.bf16.mxu0 0
  %6047 = vmatpush2.bf16.msra.mxu0 %v4720
  %6048 = vmatprep.subr.bf16.mxu0 0
  %6049 = vmatpush2.bf16.msra.mxu0 %v4713
  %6050 = vmatprep.subr.bf16.mxu0 0
  %6051 = vmatpush2.bf16.msra.mxu0 %v4706
  %6052 = vmatprep.subr.bf16.mxu0 0
  %6053 = vmatpush2.bf16.msra.mxu0 %v4699
  %6054 = vmatprep.subr.bf16.mxu0 0
  %6055 = vmatpush2.bf16.msra.mxu0 %v4692
  %6056 = vmatprep.subr.bf16.mxu0 0
  %6057 = vmatpush2.bf16.msra.mxu0 %v4685
  %6058 = vmatprep.subr.bf16.mxu0 0
  %6059 = vmatpush2.bf16.msra.mxu0 %v4678
  %6060 = vmatprep.mubr.bf16.mxu0 %v2652
  %6061 = vmatmul.mubr.bf16.gmra.mxu0 %v2651
  %v6062 = vpop.f32.mrf.mxu0
  %v6063 = vadd.f32 %v3200, %v6062
  %v6064 = vpop.f32.mrf.mxu0
  %v6065 = vpop.f32.mrf.mxu0
  %v6066 = vadd.f32 %v3200, %v6065
  %v6067 = vpop.f32.mrf.mxu0
  %6068 = vdwg.mxu0
  %6069 = vmatprep.subr.bf16.mxu0 0
  %6070 = vmatpush1.bf16.msra.mxu0 %v4783
  %6071 = vmatprep.subr.bf16.mxu0 0
  %6072 = vmatpush1.bf16.msra.mxu0 %v4776
  %6073 = vmatprep.subr.bf16.mxu0 0
  %6074 = vmatpush1.bf16.msra.mxu0 %v4769
  %6075 = vmatprep.subr.bf16.mxu0 0
  %6076 = vmatpush1.bf16.msra.mxu0 %v4762
  %6077 = vmatprep.subr.bf16.mxu0 0
  %6078 = vmatpush1.bf16.msra.mxu0 %v4755
  %6079 = vmatprep.subr.bf16.mxu0 0
  %6080 = vmatpush1.bf16.msra.mxu0 %v4748
  %6081 = vmatprep.subr.bf16.mxu0 0
  %6082 = vmatpush1.bf16.msra.mxu0 %v4741
  %6083 = vmatprep.subr.bf16.mxu0 0
  %6084 = vmatpush1.bf16.msra.mxu0 %v4734
  %6085 = vmatprep.subr.bf16.mxu0 0
  %6086 = vmatpush2.bf16.msra.mxu0 %v4839
  %6087 = vmatprep.subr.bf16.mxu0 0
  %6088 = vmatpush2.bf16.msra.mxu0 %v4832
  %6089 = vmatprep.subr.bf16.mxu0 0
  %6090 = vmatpush2.bf16.msra.mxu0 %v4825
  %6091 = vmatprep.subr.bf16.mxu0 0
  %6092 = vmatpush2.bf16.msra.mxu0 %v4818
  %6093 = vmatprep.subr.bf16.mxu0 0
  %6094 = vmatpush2.bf16.msra.mxu0 %v4811
  %6095 = vmatprep.subr.bf16.mxu0 0
  %6096 = vmatpush2.bf16.msra.mxu0 %v4804
  %6097 = vmatprep.subr.bf16.mxu0 0
  %6098 = vmatpush2.bf16.msra.mxu0 %v4797
  %6099 = vmatprep.subr.bf16.mxu0 0
  %6100 = vmatpush2.bf16.msra.mxu0 %v4790
  %6101 = vmatprep.mubr.bf16.mxu0 %v2654
  %6102 = vmatmul.mubr.bf16.gmra.mxu0 %v2653
  %v6103 = vpop.f32.mrf.mxu0
  %v6104 = vadd.f32 %v6063, %v6103
  %v6105 = vpop.f32.mrf.mxu0
  %v6106 = vpop.f32.mrf.mxu0
  %v6107 = vadd.f32 %v6066, %v6106
  %v6108 = vpop.f32.mrf.mxu0
  %6109 = vdwg.mxu0
  %6110 = vmatprep.subr.bf16.mxu0 0
  %6111 = vmatpush1.bf16.msra.mxu0 %v4895
  %6112 = vmatprep.subr.bf16.mxu0 0
  %6113 = vmatpush1.bf16.msra.mxu0 %v4888
  %6114 = vmatprep.subr.bf16.mxu0 0
  %6115 = vmatpush1.bf16.msra.mxu0 %v4881
  %6116 = vmatprep.subr.bf16.mxu0 0
  %6117 = vmatpush1.bf16.msra.mxu0 %v4874
  %6118 = vmatprep.subr.bf16.mxu0 0
  %6119 = vmatpush1.bf16.msra.mxu0 %v4867
  %6120 = vmatprep.subr.bf16.mxu0 0
  %6121 = vmatpush1.bf16.msra.mxu0 %v4860
  %6122 = vmatprep.subr.bf16.mxu0 0
  %6123 = vmatpush1.bf16.msra.mxu0 %v4853
  %6124 = vmatprep.subr.bf16.mxu0 0
  %6125 = vmatpush1.bf16.msra.mxu0 %v4846
  %6126 = vmatprep.subr.bf16.mxu0 0
  %6127 = vmatpush2.bf16.msra.mxu0 %v4951
  %6128 = vmatprep.subr.bf16.mxu0 0
  %6129 = vmatpush2.bf16.msra.mxu0 %v4944
  %6130 = vmatprep.subr.bf16.mxu0 0
  %6131 = vmatpush2.bf16.msra.mxu0 %v4937
  %6132 = vmatprep.subr.bf16.mxu0 0
  %6133 = vmatpush2.bf16.msra.mxu0 %v4930
  %6134 = vmatprep.subr.bf16.mxu0 0
  %6135 = vmatpush2.bf16.msra.mxu0 %v4923
  %6136 = vmatprep.subr.bf16.mxu0 0
  %6137 = vmatpush2.bf16.msra.mxu0 %v4916
  %6138 = vmatprep.subr.bf16.mxu0 0
  %6139 = vmatpush2.bf16.msra.mxu0 %v4909
  %6140 = vmatprep.subr.bf16.mxu0 0
  %6141 = vmatpush2.bf16.msra.mxu0 %v4902
  %6142 = vmatprep.mubr.bf16.mxu0 %v2656
  %6143 = vmatmul.mubr.bf16.gmra.mxu0 %v2655
  %v6144 = vpop.f32.mrf.mxu0
  %v6145 = vadd.f32 %v6104, %v6144
  %v6146 = vpop.f32.mrf.mxu0
  %v6147 = vpop.f32.mrf.mxu0
  %v6148 = vadd.f32 %v6107, %v6147
  %v6149 = vpop.f32.mrf.mxu0
  %6150 = vdwg.mxu0
  %6151 = vmatprep.subr.bf16.mxu0 0
  %6152 = vmatpush1.bf16.msra.mxu0 %v5007
  %6153 = vmatprep.subr.bf16.mxu0 0
  %6154 = vmatpush1.bf16.msra.mxu0 %v5000
  %6155 = vmatprep.subr.bf16.mxu0 0
  %6156 = vmatpush1.bf16.msra.mxu0 %v4993
  %6157 = vmatprep.subr.bf16.mxu0 0
  %6158 = vmatpush1.bf16.msra.mxu0 %v4986
  %6159 = vmatprep.subr.bf16.mxu0 0
  %6160 = vmatpush1.bf16.msra.mxu0 %v4979
  %6161 = vmatprep.subr.bf16.mxu0 0
  %6162 = vmatpush1.bf16.msra.mxu0 %v4972
  %6163 = vmatprep.subr.bf16.mxu0 0
  %6164 = vmatpush1.bf16.msra.mxu0 %v4965
  %6165 = vmatprep.subr.bf16.mxu0 0
  %6166 = vmatpush1.bf16.msra.mxu0 %v4958
  %6167 = vmatprep.subr.bf16.mxu0 0
  %6168 = vmatpush2.bf16.msra.mxu0 %v5063
  %6169 = vmatprep.subr.bf16.mxu0 0
  %6170 = vmatpush2.bf16.msra.mxu0 %v5056
  %6171 = vmatprep.subr.bf16.mxu0 0
  %6172 = vmatpush2.bf16.msra.mxu0 %v5049
  %6173 = vmatprep.subr.bf16.mxu0 0
  %6174 = vmatpush2.bf16.msra.mxu0 %v5042
  %6175 = vmatprep.subr.bf16.mxu0 0
  %6176 = vmatpush2.bf16.msra.mxu0 %v5035
  %6177 = vmatprep.subr.bf16.mxu0 0
  %6178 = vmatpush2.bf16.msra.mxu0 %v5028
  %6179 = vmatprep.subr.bf16.mxu0 0
  %6180 = vmatpush2.bf16.msra.mxu0 %v5021
  %6181 = vmatprep.subr.bf16.mxu0 0
  %6182 = vmatpush2.bf16.msra.mxu0 %v5014
  %6183 = vmatprep.mubr.bf16.mxu0 %v2658
  %6184 = vmatmul.mubr.bf16.gmra.mxu0 %v2657
  %v6185 = vpop.f32.mrf.mxu0
  %v6186 = vadd.f32 %v6145, %v6185
  %v6187 = vpop.f32.mrf.mxu0
  %v6188 = vpop.f32.mrf.mxu0
  %v6189 = vadd.f32 %v6148, %v6188
  %v6190 = vpop.f32.mrf.mxu0
  %6191 = vdwg.mxu0
  %v6192 = vtanh.pop %v5676
  %v6193 = vtanh.pop %v5678
  %v6194 = vtanh.pop %v5848
  %v6195 = vtanh.pop %v5850
  %v6196 = vtanh.pop %v6020
  %v6197 = vtanh.pop %v6022
  %v6198 = vtanh.pop %v6186
  %v6199 = vtanh.pop %v5680
  %v6200 = vtanh.pop %v5682
  %v6201 = vtanh.pop %v5852
  %v6202 = vtanh.pop %v5854
  %v6203 = vtanh.pop %v6024
  %v6204 = vtanh.pop %v6026
  %v6205 = vtanh.pop %v6189
  %6206 = vst [vmem:[%s9] sm:$0xff] %v6192
  %6207 = vst [vmem:[%s9 + $0x8] sm:$0xff] %v6193
  %6208 = vst [vmem:[%s9 + $0x10] sm:$0xff] %v6194
  %6209 = vst [vmem:[%s9 + $0x18] sm:$0xff] %v6195
  %6210 = vst [vmem:[%s9 + $0x20] sm:$0xff] %v6196
  %6211 = vst [vmem:[%s9 + $0x28] sm:$0xff] %v6197
  %vm6212 = vcmask 130048
  %6213 = vst.msk [vmem:[%s9 + $0x30] sm:$0xff] %vm6212, %v6198
  %6214 = vst [vmem:[%s9 + $0x38] sm:$0xff] %v6199
  %6215 = vst [vmem:[%s9 + $0x40] sm:$0xff] %v6200
  %6216 = vst [vmem:[%s9 + $0x48] sm:$0xff] %v6201
  %6217 = vst [vmem:[%s9 + $0x50] sm:$0xff] %v6202
  %6218 = vst [vmem:[%s9 + $0x58] sm:$0xff] %v6203
  %6219 = vst [vmem:[%s9 + $0x60] sm:$0xff] %v6204
  %6220 = vst.msk [vmem:[%s9 + $0x68] sm:$0xff] %vm6212, %v6205
  // Predicated region
  $region38: #{generator_forward.1} parent=0 // pred_check
    _
  $region39: #{generator_forward.1} parent=0 // pred_check_branch
    %6222 = sbr.rel (0) target = $region41
  $region40: #{generator_forward.1} parent=0 // pred_region
    _
  $region41: #{generator_forward.1} parent=0 // pred_fallthru
    _
  // Predicated region
  $region42: #{generator_forward.1} parent=0 // pred_check
    _
  $region43: #{generator_forward.1} parent=0 // pred_check_branch
    %6224 = sbr.rel (0) target = $region45
  $region44: #{generator_forward.1} parent=0 // pred_region
    _
  $region45: #{generator_forward.1} parent=0 // pred_fallthru
    _

</llo_original>
